<compile_context>
chip_gen: v5e
topology: v5e:2x2
jax: 0.10.0
libtpu: 0.0.40
codegen_flags: <defaults>
</compile_context>

<pallas_src>
import functools
import math

import jax
import jax.numpy as jnp
import numpy as np
from jax import lax
from jax.experimental import pallas as pl
from jax.experimental.pallas import tpu as pltpu


# ----------------------------- helpers --------------------------------------


@functools.lru_cache(maxsize=1)
def _vmem_limit_bytes():
    """Generation-aware scoped-VMEM budget (~60% of per-core VMEM)."""
    try:
        cap = pltpu.get_tpu_info().vmem_capacity_bytes
    except Exception:
        cap = 64 * 1024 * 1024  # conservative fallback (v7x-sized)
    return max(32 * 1024 * 1024, min(int(cap * 0.6), 100 * 1024 * 1024))


def _cparams(dim_sem):
    return pltpu.CompilerParams(dimension_semantics=dim_sem,
                                vmem_limit_bytes=_vmem_limit_bytes())


def _layernorm(x, eps=1e-5):
    """LayerNorm over the last axis, no affine (elementwise_affine=False)."""
    mu = jnp.mean(x, axis=-1, keepdims=True)
    var = jnp.mean((x - mu) ** 2, axis=-1, keepdims=True)
    return (x - mu) * lax.rsqrt(var + eps)


def _pick_block(n, target, multiples=(256, 128, 8)):
    """Largest b <= target dividing n, preferring coarser alignment; else full n."""
    if n <= target:
        return n
    for m in multiples:
        best = None
        b = m
        while b <= target:
            if n % b == 0:
                best = b
            b += m
        if best is not None:
            return best
    return n


def _validate_block(n, block, multiple, name):
    assert n % block == 0, f"{name}={block} must divide {n}"
    assert block == n or block % multiple == 0, (
        f"{name}={block} must be a multiple of {multiple}")
    return block


def _rotate_half_perm(num_heads, head_dim):
    """Per-head output-column permutation: interleaved -> rotate-half layout."""
    per_head = np.concatenate([np.arange(0, head_dim, 2), np.arange(1, head_dim, 2)])
    return np.concatenate([h * head_dim + per_head for h in range(num_heads)])


def _rope_tables(seq_len, head_dim, base=10000.0):
    """cos / sign-folded-sin tables (S, head_dim) in rotate-half layout."""
    half = head_dim // 2
    inv_freq = 1.0 / (base ** (np.arange(half, dtype=np.float64) * 2.0 / head_dim))
    ang = np.outer(np.arange(seq_len, dtype=np.float64), inv_freq)      # (S, hd/2)
    cos = np.concatenate([np.cos(ang), np.cos(ang)], axis=-1)           # (S, hd)
    sin = np.concatenate([-np.sin(ang), np.sin(ang)], axis=-1)          # sign folded
    return jnp.asarray(cos, jnp.float32), jnp.asarray(sin, jnp.float32)


# ------------- kernel 1: pre-LN + fused QKV projection + head-LN + RoPE ------


def qkv_rope_kernel(x_ref, wqkv_ref, cos_ref, sin_ref, q_ref, k_ref, v_ref,
                    *, nhead, num_kv_heads, head_dim, scale, compute_dtype):
    x = x_ref[0]                                        # (bs, D) f32
    xn = _layernorm(x).astype(compute_dtype)            # attention pre-LN
    cos = cos_ref[...]                                  # (bs, hd)
    sin = sin_ref[...]                                  # (bs, hd), sign folded

    # Single wide matmul over the concatenated q|k|v weights: one MXU op, LHS reused.
    qkv = jnp.dot(xn, wqkv_ref[...], preferred_element_type=jnp.float32)

    def rope(t):   # (bs, hd) f32, rotate-half layout; roll runs on the XLU slot
        return t * cos + pltpu.roll(t, shift=head_dim // 2, axis=1) * sin

    # TODO(synk): for large nhead switch these static unrolls to
    # lax.fori_loop(..., unroll=True) with pl.ds slices to bound vreg live ranges.
    k_off = nhead * head_dim
    v_off = (nhead + num_kv_heads) * head_dim
    for h in range(nhead):
        qh = _layernorm(qkv[:, h * head_dim:(h + 1) * head_dim])
        q_ref[0, h] = (rope(qh) * scale).astype(compute_dtype)
    for g in range(num_kv_heads):
        kh = _layernorm(qkv[:, k_off + g * head_dim:k_off + (g + 1) * head_dim])
        k_ref[0, g] = rope(kh).astype(compute_dtype)
        v_ref[0, g] = qkv[:, v_off + g * head_dim:
                          v_off + (g + 1) * head_dim].astype(compute_dtype)


# -------- kernel 2: GQA flash attention + output projection + residual -------


def flash_attn_kernel(q_ref, k_ref, v_ref, wo_ref, xres_ref, o_ref,
                      m_s, l_s, acc_s, out_s,
                      *, q_per_kv, compute_dtype, exact_recip):
    g = pl.program_id(2)      # KV group index
    kv = pl.program_id(3)     # KV block index
    n_g = pl.num_programs(2)
    n_kv = pl.num_programs(3)

    @pl.when((g == 0) & (kv == 0))
    def _():
        out_s[...] = xres_ref[0]                        # residual seeds the output acc

    @pl.when(kv == 0)
    def _():
        m_s[...] = jnp.full(m_s.shape, -jnp.inf, jnp.float32)
        l_s[...] = jnp.zeros(l_s.shape, jnp.float32)
        acc_s[...] = jnp.zeros(acc_s.shape, jnp.float32)

    k = k_ref[0, 0]                                     # (bkv, hd)
    v = v_ref[0, 0]                                     # (bkv, hd)

    # Every fetched K/V block is reused by all q_per_kv query heads of this group.
    for j in range(q_per_kv):
        q = q_ref[0, j]                                 # (bq, hd) LN+RoPE+scaled
        # Contract on the last dims -> no explicit K transpose.
        s = lax.dot_general(q, k, (((1,), (1,)), ((), ())),
                            preferred_element_type=jnp.float32)        # (bq, bkv)
        m_prev = m_s[j]
        m_new = jnp.maximum(m_prev, jnp.max(s, axis=-1, keepdims=True))
        alpha = jnp.exp(m_prev - m_new)
        p = jnp.exp(s - m_new)
        l_s[j] = alpha * l_s[j] + jnp.sum(p, axis=-1, keepdims=True)
        acc_s[j] = alpha * acc_s[j] + jnp.dot(p.astype(compute_dtype), v,
                                              preferred_element_type=jnp.float32)
        m_s[j] = m_new

    @pl.when(kv == n_kv - 1)
    def _():
        # Finalize this group's heads and project them in one matmul with
        # contraction depth q_per_kv*head_dim against the resident wo slab.
        houts = []
        for j in range(q_per_kv):
            l = l_s[j]
            inv_l = (1.0 / l) if exact_recip else pl.reciprocal(l, approx=True)
            houts.append((acc_s[j] * inv_l).astype(compute_dtype))     # (bq, hd)
        ho = houts[0] if q_per_kv == 1 else jnp.concatenate(houts, axis=-1)
        out_s[...] += jnp.dot(ho, wo_ref[g], preferred_element_type=jnp.float32)

        @pl.when(g == n_g - 1)
        def _():
            o_ref[0] = out_s[...]


# -------------------- kernel 3: FFN (resident / streamed weights) ------------


def ffn_resident_kernel(x_ref, w1_ref, w2_ref, o_ref, *, compute_dtype):
    x = x_ref[0]                                        # (bs, D) f32
    xn = _layernorm(x).astype(compute_dtype)            # ff pre-LN
    h1 = jnp.dot(xn, w1_ref[...], preferred_element_type=jnp.float32)
    h1 = jax.nn.gelu(h1, approximate=False)             # exact erf == nn.GELU() default
    o_ref[0] = x + jnp.dot(h1.astype(compute_dtype), w2_ref[...],
                           preferred_element_type=jnp.float32)


def ffn_stream_kernel(x_ref, w1_ref, w2_ref, o_ref, xn_s, acc_s, *, compute_dtype):
    f = pl.program_id(2)

    @pl.when(f == 0)
    def _():
        x = x_ref[0]                                    # (bs, D) f32
        xn_s[...] = _layernorm(x).astype(compute_dtype)  # ff pre-LN computed once
        acc_s[...] = x                                  # residual seed

    h1 = jnp.dot(xn_s[...], w1_ref[...], preferred_element_type=jnp.float32)
    h1 = jax.nn.gelu(h1, approximate=False)
    acc_s[...] += jnp.dot(h1.astype(compute_dtype), w2_ref[...],
                          preferred_element_type=jnp.float32)

    @pl.when(f == pl.num_programs(2) - 1)
    def _():
        o_ref[0] = acc_s[...]


# ----------------------------- wrapper ---------------------------------------


def encoder_layer(x, params, *, nhead, num_kv_heads, head_dim,
                  block_seq=None, block_kv=None, block_seq_ff=None, block_ff=None,
                  ffn_weights_resident=None, compute_dtype=jnp.bfloat16):
    B, S, D = x.shape
    dim_ff = params["w1"].shape[1]
    assert nhead % num_kv_heads == 0 and head_dim % 2 == 0
    q_per_kv = nhead // num_kv_heads
    scale = 1.0 / math.sqrt(head_dim)
    exact_recip = jnp.dtype(compute_dtype) == jnp.dtype(jnp.float32)
    wbytes = jnp.dtype(compute_dtype).itemsize

    # Block sizes: prefer 256-multiples (MXU fill on v6e/v7x); FFN sequence block is
    # decoupled and larger so weight slabs are amortized over more rows.
    bs = (_validate_block(S, block_seq, 8, "block_seq") if block_seq
          else _pick_block(S, 256))
    bkv = (_validate_block(S, block_kv, 8, "block_kv") if block_kv
           else _pick_block(S, 512))
    bsf = (_validate_block(S, block_seq_ff, 8, "block_seq_ff") if block_seq_ff
           else _pick_block(S, 512))
    bf = (_validate_block(dim_ff, block_ff, 128, "block_ff") if block_ff
          else _pick_block(dim_ff, 512, (256, 128)))
    nS, nKV, nSf, nF = S // bs, S // bkv, S // bsf, dim_ff // bf

    # Keep full FFN weights VMEM-resident when they comfortably fit the budget.
    if ffn_weights_resident is None:
        ffn_weights_resident = (2 * D * dim_ff * wbytes) <= (_vmem_limit_bytes() // 3)

    # Weight prep (once per call, outside the kernels): rotate-half column
    # permutation for q/k projections (valid only because q/k LN has no affine
    # params), one concatenated q|k|v weight, per-group wo reshape, dtype cast.
    perm_q = _rotate_half_perm(nhead, head_dim)
    perm_k = _rotate_half_perm(num_kv_heads, head_dim)
    wqkv = jnp.concatenate(
        [jnp.asarray(params["wq"])[:, perm_q],
         jnp.asarray(params["wk"])[:, perm_k],
         jnp.asarray(params["wv"])], axis=1).astype(compute_dtype)
    qkv_width = (nhead + 2 * num_kv_heads) * head_dim
    wo3 = jnp.asarray(params["wo"]).astype(compute_dtype).reshape(
        num_kv_heads, q_per_kv * head_dim, D)
    w1 = jnp.asarray(params["w1"]).astype(compute_dtype)                # (D, F)
    w2 = jnp.asarray(params["w2"]).astype(compute_dtype)                # (F, D)
    cos_t, sin_t = _rope_tables(S, head_dim)

    # ---- kernel 1: q/k/v (per-head layout, LN + RoPE + scale applied) ----
    q, k, v = pl.pallas_call(
        functools.partial(qkv_rope_kernel, nhead=nhead, num_kv_heads=num_kv_heads,
                          head_dim=head_dim, scale=scale, compute_dtype=compute_dtype),
        grid=(B, nS),
        in_specs=[
            pl.BlockSpec((1, bs, D), lambda b, s: (b, s, 0)),
            pl.BlockSpec((D, qkv_width), lambda b, s: (0, 0),
                         pipeline_mode=pl.Buffered(1)),      # constant-index weight
            pl.BlockSpec((bs, head_dim), lambda b, s: (s, 0)),
            pl.BlockSpec((bs, head_dim), lambda b, s: (s, 0)),
        ],
        out_specs=[
            pl.BlockSpec((1, nhead, bs, head_dim), lambda b, s: (b, 0, s, 0)),
            pl.BlockSpec((1, num_kv_heads, bs, head_dim), lambda b, s: (b, 0, s, 0)),
            pl.BlockSpec((1, num_kv_heads, bs, head_dim), lambda b, s: (b, 0, s, 0)),
        ],
        out_shape=[
            jax.ShapeDtypeStruct((B, nhead, S, head_dim), compute_dtype),
            jax.ShapeDtypeStruct((B, num_kv_heads, S, head_dim), compute_dtype),
            jax.ShapeDtypeStruct((B, num_kv_heads, S, head_dim), compute_dtype),
        ],
        compiler_params=_cparams(("parallel", "parallel")),
    )(x, wqkv, cos_t, sin_t)

    # ---- kernel 2: GQA flash attention + output proj + residual ----
    attn_out = pl.pallas_call(
        functools.partial(flash_attn_kernel, q_per_kv=q_per_kv,
                          compute_dtype=compute_dtype, exact_recip=exact_recip),
        grid=(B, nS, num_kv_heads, nKV),
        in_specs=[
            pl.BlockSpec((1, q_per_kv, bs, head_dim),
                         lambda b, qi, g, kv: (b, g, qi, 0)),
            pl.BlockSpec((1, 1, bkv, head_dim),
                         lambda b, qi, g, kv: (b, g, kv, 0)),
            pl.BlockSpec((1, 1, bkv, head_dim),
                         lambda b, qi, g, kv: (b, g, kv, 0)),
            pl.BlockSpec((num_kv_heads, q_per_kv * head_dim, D),
                         lambda b, qi, g, kv: (0, 0, 0),
                         pipeline_mode=pl.Buffered(1)),      # wo resident, 1 buffer
            pl.BlockSpec((1, bs, D), lambda b, qi, g, kv: (b, qi, 0)),
        ],
        out_specs=pl.BlockSpec((1, bs, D), lambda b, qi, g, kv: (b, qi, 0)),
        out_shape=jax.ShapeDtypeStruct((B, S, D), jnp.float32),
        scratch_shapes=[
            pltpu.VMEM((q_per_kv, bs, 1), jnp.float32),      # running max m
            pltpu.VMEM((q_per_kv, bs, 1), jnp.float32),      # running sum l
            pltpu.VMEM((q_per_kv, bs, head_dim), jnp.float32),  # per-head acc
            pltpu.VMEM((bs, D), jnp.float32),                # residual + out-proj acc
        ],
        compiler_params=_cparams(("parallel", "parallel", "arbitrary", "arbitrary")),
    )(q, k, v, wo3, x)

    # ---- kernel 3: FFN + residual ----
    if ffn_weights_resident:
        out = pl.pallas_call(
            functools.partial(ffn_resident_kernel, compute_dtype=compute_dtype),
            grid=(B, nSf),
            in_specs=[
                pl.BlockSpec((1, bsf, D), lambda b, s: (b, s, 0)),
                pl.BlockSpec((D, dim_ff), lambda b, s: (0, 0),
                             pipeline_mode=pl.Buffered(1)),
                pl.BlockSpec((dim_ff, D), lambda b, s: (0, 0),
                             pipeline_mode=pl.Buffered(1)),
            ],
            out_specs=pl.BlockSpec((1, bsf, D), lambda b, s: (b, s, 0)),
            out_shape=jax.ShapeDtypeStruct((B, S, D), jnp.float32),
            compiler_params=_cparams(("parallel", "parallel")),
        )(attn_out, w1, w2)
    else:
        out = pl.pallas_call(
            functools.partial(ffn_stream_kernel, compute_dtype=compute_dtype),
            grid=(B, nSf, nF),
            in_specs=[
                pl.BlockSpec((1, bsf, D), lambda b, s, f: (b, s, 0)),
                pl.BlockSpec((D, bf), lambda b, s, f: (0, f)),
                pl.BlockSpec((bf, D), lambda b, s, f: (f, 0)),
            ],
            out_specs=pl.BlockSpec((1, bsf, D), lambda b, s, f: (b, s, 0)),
            out_shape=jax.ShapeDtypeStruct((B, S, D), jnp.float32),
            scratch_shapes=[
                pltpu.VMEM((bsf, D), compute_dtype),   # LN(x), computed once per block
                pltpu.VMEM((bsf, D), jnp.float32),     # residual + FFN accumulator
            ],
            compiler_params=_cparams(("parallel", "parallel", "arbitrary")),
        )(attn_out, w1, w2)

    return out


# ----------------------------- pure-JAX reference ---------------------------


def encoder_layer_ref(x, params, *, nhead, num_kv_heads, head_dim):
    B, S, D = x.shape
    wq, wk, wv, wo, w1, w2 = (params[k] for k in ("wq", "wk", "wv", "wo", "w1", "w2"))
    half = head_dim // 2
    theta = 1.0 / (10000.0 ** (jnp.arange(half, dtype=jnp.float32) * 2.0 / head_dim))
    ang = jnp.arange(S, dtype=jnp.float32)[:, None] * theta[None, :]
    c = jnp.cos(ang)[None, :, None, :]
    s = jnp.sin(ang)[None, :, None, :]

    def rope(t):  # t: (B, S, H, hd), interleaved pairs
        t2 = t.reshape(*t.shape[:-1], half, 2)
        o0 = t2[..., 0] * c - t2[..., 1] * s
        o1 = t2[..., 1] * c + t2[..., 0] * s
        return jnp.stack([o0, o1], axis=-1).reshape(t.shape)

    residual = x
    xn = _layernorm(x)
    q = (xn @ wq).reshape(B, S, nhead, head_dim)
    k = (xn @ wk).reshape(B, S, num_kv_heads, head_dim)
    v = (xn @ wv).reshape(B, S, num_kv_heads, head_dim)
    q = rope(_layernorm(q))
    k = rope(_layernorm(k))
    q = q.transpose(0, 2, 1, 3)
    k = k.transpose(0, 2, 1, 3)
    v = v.transpose(0, 2, 1, 3)
    q_per_kv = nhead // num_kv_heads
    k = jnp.repeat(k, q_per_kv, axis=1)
    v = jnp.repeat(v, q_per_kv, axis=1)
    scores = jnp.einsum("bhqd,bhkd->bhqk", q, k) / math.sqrt(head_dim)
    attn = jax.nn.softmax(scores, axis=-1)
    o = jnp.einsum("bhqk,bhkd->bhqd", attn, v)
    o = o.transpose(0, 2, 1, 3).reshape(B, S, nhead * head_dim)
    x = residual + o @ wo
    residual = x
    xn = _layernorm(x)
    ff = jax.nn.gelu(xn @ w1, approximate=False) @ w2
    return residual + ff


# ----------------------------- main ------------------------------------------


if __name__ == "__main__":
    # Small, TPU-aligned config consistent with the module.
    B, S = 2, 128
    d_model, nhead, num_kv_heads, head_dim, dim_ff = 128, 4, 2, 128, 256

    key = jax.random.PRNGKey(0)
    ks = jax.random.split(key, 8)

    def linear_w(k, fan_in, fan_out):
        bound = 1.0 / math.sqrt(fan_in)
        # stored as (in, out) so the kernels compute x @ W
        return jax.random.uniform(k, (fan_in, fan_out), jnp.float32, -bound, bound)

    params = {
        "wq": linear_w(ks[0], d_model, nhead * head_dim),
        "wk": linear_w(ks[1], d_model, num_kv_heads * head_dim),
        "wv": linear_w(ks[2], d_model, num_kv_heads * head_dim),
        "wo": linear_w(ks[3], nhead * head_dim, d_model),
        "w1": linear_w(ks[4], d_model, dim_ff),
        "w2": linear_w(ks[5], dim_ff, d_model),
    }
    x = jax.random.normal(ks[6], (B, S, d_model), jnp.float32)

    ref = jax.block_until_ready(
        encoder_layer_ref(x, params, nhead=nhead, num_kv_heads=num_kv_heads,
                          head_dim=head_dim))

    common = dict(nhead=nhead, num_kv_heads=num_kv_heads, head_dim=head_dim)

    # float32 compute path: small blocks exercise multi-KV-block / multi-group
    # accumulation; resident FFN weights (auto).
    out_f32 = jax.block_until_ready(
        encoder_layer(x, params, compute_dtype=jnp.float32,
                      block_seq=64, block_kv=64, **common))
    np.testing.assert_allclose(np.asarray(out_f32), np.asarray(ref),
                               rtol=1e-2, atol=1e-2)

    # bfloat16 MXU path (f32 accumulation / statistics); force the streamed-FFN
    # path so the dim_ff accumulation branch is also exercised.
    out_bf16 = jax.block_until_ready(
        encoder_layer(x, params, compute_dtype=jnp.bfloat16,
                      block_seq=64, block_kv=64, block_seq_ff=64, block_ff=128,
                      ffn_weights_resident=False, **common))
    np.testing.assert_allclose(np.asarray(out_bf16), np.asarray(ref),
                               rtol=5e-2, atol=5e-2)

    print("KERNEL_OK")
</pallas_src>

<mosaic_0001>
module attributes {stable_mosaic.version = 11 : i64} {
  func.func @qkv_rope_kernel(%arg0: i32, %arg1: i32, %arg2: memref<1x64x128xf32, #tpu.memory_space<vmem>>, %arg3: memref<128x1024xf32, #tpu.memory_space<vmem>>, %arg4: memref<64x128xf32, #tpu.memory_space<vmem>>, %arg5: memref<64x128xf32, #tpu.memory_space<vmem>>, %arg6: memref<1x4x64x128xf32, #tpu.memory_space<vmem>>, %arg7: memref<1x2x64x128xf32, #tpu.memory_space<vmem>>, %arg8: memref<1x2x64x128xf32, #tpu.memory_space<vmem>>) attributes {dimension_semantics = [#tpu.dimension_semantics<parallel>, #tpu.dimension_semantics<parallel>], iteration_bounds = array<i64: 2, 2>, scalar_prefetch = 0 : i64, scratch_operands = 0 : i64, tpu.core_type = #tpu.core_type<tc>, window_params = [{transform_indices = @transform_0, window_bounds = array<i64: 1, 64, 128>}, {pipeline_mode = #tpu.pipeline_mode<synchronous>, transform_indices = @transform_1, window_bounds = array<i64: 128, 1024>}, {transform_indices = @transform_2, window_bounds = array<i64: 64, 128>}, {transform_indices = @transform_3, window_bounds = array<i64: 64, 128>}, {transform_indices = @transform_4, window_bounds = array<i64: 1, 4, 64, 128>}, {transform_indices = @transform_5, window_bounds = array<i64: 1, 2, 64, 128>}, {transform_indices = @transform_6, window_bounds = array<i64: 1, 2, 64, 128>}]} {
    %c0 = arith.constant 0 : index
    %c0_0 = arith.constant 0 : index
    %c0_1 = arith.constant 0 : index
    %0 = vector.load %arg2[%c0, %c0_0, %c0_1] : memref<1x64x128xf32, #tpu.memory_space<vmem>>, vector<1x64x128xf32>
    %1 = vector.shape_cast %0 : vector<1x64x128xf32> to vector<64x128xf32>
    %cst = arith.constant dense<0.000000e+00> : vector<64xf32>
    %2 = vector.multi_reduction <add>, %1, %cst [1] : vector<64x128xf32> to vector<64xf32>
    %3 = vector.shape_cast %2 : vector<64xf32> to vector<64x1xf32>
    %cst_2 = arith.constant 1.280000e+02 : f32
    %4 = vector.broadcast %cst_2 : f32 to vector<64x1xf32>
    %5 = arith.divf %3, %4 : vector<64x1xf32>
    %6 = vector.broadcast %5 : vector<64x1xf32> to vector<64x128xf32>
    %7 = arith.subf %1, %6 : vector<64x128xf32>
    %8 = arith.mulf %7, %7 : vector<64x128xf32>
    %cst_3 = arith.constant dense<0.000000e+00> : vector<64xf32>
    %9 = vector.multi_reduction <add>, %8, %cst_3 [1] : vector<64x128xf32> to vector<64xf32>
    %10 = vector.shape_cast %9 : vector<64xf32> to vector<64x1xf32>
    %cst_4 = arith.constant 1.280000e+02 : f32
    %11 = vector.broadcast %cst_4 : f32 to vector<64x1xf32>
    %12 = arith.divf %10, %11 : vector<64x1xf32>
    %13 = vector.broadcast %5 : vector<64x1xf32> to vector<64x128xf32>
    %14 = arith.subf %1, %13 : vector<64x128xf32>
    %cst_5 = arith.constant 9.99999974E-6 : f32
    %15 = vector.broadcast %cst_5 : f32 to vector<64x1xf32>
    %16 = arith.addf %12, %15 : vector<64x1xf32>
    %17 = math.rsqrt %16 : vector<64x1xf32>
    %18 = vector.broadcast %17 : vector<64x1xf32> to vector<64x128xf32>
    %19 = arith.mulf %14, %18 : vector<64x128xf32>
    %c0_6 = arith.constant 0 : index
    %c0_7 = arith.constant 0 : index
    %20 = vector.load %arg4[%c0_6, %c0_7] : memref<64x128xf32, #tpu.memory_space<vmem>>, vector<64x128xf32>
    %c0_8 = arith.constant 0 : index
    %c0_9 = arith.constant 0 : index
    %21 = vector.load %arg5[%c0_8, %c0_9] : memref<64x128xf32, #tpu.memory_space<vmem>>, vector<64x128xf32>
    %c0_10 = arith.constant 0 : index
    %c0_11 = arith.constant 0 : index
    %22 = vector.load %arg3[%c0_10, %c0_11] : memref<128x1024xf32, #tpu.memory_space<vmem>>, vector<128x1024xf32>
    %cst_12 = arith.constant dense<0.000000e+00> : vector<64x1024xf32>
    %23 = tpu.matmul %19, %22, %cst_12 {dimension_numbers = #tpu.dot_dimension_numbers<[1], [0], [0], [1], [0, 0, 1, 1], [], []>} : vector<64x128xf32>, vector<128x1024xf32>, vector<64x1024xf32> -> vector<64x1024xf32>
    %24 = vector.extract_strided_slice %23 {offsets = [0, 0], sizes = [64, 128], strides = [1, 1]} : vector<64x1024xf32> to vector<64x128xf32>
    %cst_13 = arith.constant dense<0.000000e+00> : vector<64xf32>
    %25 = vector.multi_reduction <add>, %24, %cst_13 [1] : vector<64x128xf32> to vector<64xf32>
    %26 = vector.shape_cast %25 : vector<64xf32> to vector<64x1xf32>
    %cst_14 = arith.constant 1.280000e+02 : f32
    %27 = vector.broadcast %cst_14 : f32 to vector<64x1xf32>
    %28 = arith.divf %26, %27 : vector<64x1xf32>
    %29 = vector.broadcast %28 : vector<64x1xf32> to vector<64x128xf32>
    %30 = arith.subf %24, %29 : vector<64x128xf32>
    %31 = arith.mulf %30, %30 : vector<64x128xf32>
    %cst_15 = arith.constant dense<0.000000e+00> : vector<64xf32>
    %32 = vector.multi_reduction <add>, %31, %cst_15 [1] : vector<64x128xf32> to vector<64xf32>
    %33 = vector.shape_cast %32 : vector<64xf32> to vector<64x1xf32>
    %cst_16 = arith.constant 1.280000e+02 : f32
    %34 = vector.broadcast %cst_16 : f32 to vector<64x1xf32>
    %35 = arith.divf %33, %34 : vector<64x1xf32>
    %36 = vector.broadcast %28 : vector<64x1xf32> to vector<64x128xf32>
    %37 = arith.subf %24, %36 : vector<64x128xf32>
    %cst_17 = arith.constant 9.99999974E-6 : f32
    %38 = vector.broadcast %cst_17 : f32 to vector<64x1xf32>
    %39 = arith.addf %35, %38 : vector<64x1xf32>
    %40 = math.rsqrt %39 : vector<64x1xf32>
    %41 = vector.broadcast %40 : vector<64x1xf32> to vector<64x128xf32>
    %42 = arith.mulf %37, %41 : vector<64x128xf32>
    %43 = arith.mulf %42, %20 : vector<64x128xf32>
    %c64_i32 = arith.constant 64 : i32
    %44 = tpu.dynamic_rotate %42 by %c64_i32 dim 1 : vector<64x128xf32>, i32 -> vector<64x128xf32>
    %45 = arith.mulf %44, %21 : vector<64x128xf32>
    %46 = arith.addf %43, %45 : vector<64x128xf32>
    %cst_18 = arith.constant 0.0883883461 : f32
    %47 = vector.broadcast %cst_18 : f32 to vector<64x128xf32>
    %48 = arith.mulf %46, %47 : vector<64x128xf32>
    %c0_19 = arith.constant 0 : index
    %c0_20 = arith.constant 0 : index
    %c0_21 = arith.constant 0 : index
    %c0_22 = arith.constant 0 : index
    %49 = vector.load %arg6[%c0_19, %c0_20, %c0_21, %c0_22] : memref<1x4x64x128xf32, #tpu.memory_space<vmem>>, vector<1x1x64x128xf32>
    %50 = vector.shape_cast %49 : vector<1x1x64x128xf32> to vector<64x128xf32>
    %51 = vector.shape_cast %48 : vector<64x128xf32> to vector<1x1x64x128xf32>
    tpu.vector_store %arg6[%c0_19, %c0_20, %c0_21, %c0_22], %51 {strides = array<i32>} : memref<1x4x64x128xf32, #tpu.memory_space<vmem>>, vector<1x1x64x128xf32>,
    %52 = vector.extract_strided_slice %23 {offsets = [0, 128], sizes = [64, 128], strides = [1, 1]} : vector<64x1024xf32> to vector<64x128xf32>
    %cst_23 = arith.constant dense<0.000000e+00> : vector<64xf32>
    %53 = vector.multi_reduction <add>, %52, %cst_23 [1] : vector<64x128xf32> to vector<64xf32>
    %54 = vector.shape_cast %53 : vector<64xf32> to vector<64x1xf32>
    %cst_24 = arith.constant 1.280000e+02 : f32
    %55 = vector.broadcast %cst_24 : f32 to vector<64x1xf32>
    %56 = arith.divf %54, %55 : vector<64x1xf32>
    %57 = vector.broadcast %56 : vector<64x1xf32> to vector<64x128xf32>
    %58 = arith.subf %52, %57 : vector<64x128xf32>
    %59 = arith.mulf %58, %58 : vector<64x128xf32>
    %cst_25 = arith.constant dense<0.000000e+00> : vector<64xf32>
    %60 = vector.multi_reduction <add>, %59, %cst_25 [1] : vector<64x128xf32> to vector<64xf32>
    %61 = vector.shape_cast %60 : vector<64xf32> to vector<64x1xf32>
    %cst_26 = arith.constant 1.280000e+02 : f32
    %62 = vector.broadcast %cst_26 : f32 to vector<64x1xf32>
    %63 = arith.divf %61, %62 : vector<64x1xf32>
    %64 = vector.broadcast %56 : vector<64x1xf32> to vector<64x128xf32>
    %65 = arith.subf %52, %64 : vector<64x128xf32>
    %cst_27 = arith.constant 9.99999974E-6 : f32
    %66 = vector.broadcast %cst_27 : f32 to vector<64x1xf32>
    %67 = arith.addf %63, %66 : vector<64x1xf32>
    %68 = math.rsqrt %67 : vector<64x1xf32>
    %69 = vector.broadcast %68 : vector<64x1xf32> to vector<64x128xf32>
    %70 = arith.mulf %65, %69 : vector<64x128xf32>
    %71 = arith.mulf %70, %20 : vector<64x128xf32>
    %c64_i32_28 = arith.constant 64 : i32
    %72 = tpu.dynamic_rotate %70 by %c64_i32_28 dim 1 : vector<64x128xf32>, i32 -> vector<64x128xf32>
    %73 = arith.mulf %72, %21 : vector<64x128xf32>
    %74 = arith.addf %71, %73 : vector<64x128xf32>
    %cst_29 = arith.constant 0.0883883461 : f32
    %75 = vector.broadcast %cst_29 : f32 to vector<64x128xf32>
    %76 = arith.mulf %74, %75 : vector<64x128xf32>
    %c0_30 = arith.constant 0 : index
    %c1 = arith.constant 1 : index
    %c0_31 = arith.constant 0 : index
    %c0_32 = arith.constant 0 : index
    %77 = vector.load %arg6[%c0_30, %c1, %c0_31, %c0_32] : memref<1x4x64x128xf32, #tpu.memory_space<vmem>>, vector<1x1x64x128xf32>
    %78 = vector.shape_cast %77 : vector<1x1x64x128xf32> to vector<64x128xf32>
    %79 = vector.shape_cast %76 : vector<64x128xf32> to vector<1x1x64x128xf32>
    tpu.vector_store %arg6[%c0_30, %c1, %c0_31, %c0_32], %79 {strides = array<i32>} : memref<1x4x64x128xf32, #tpu.memory_space<vmem>>, vector<1x1x64x128xf32>,
    %80 = vector.extract_strided_slice %23 {offsets = [0, 256], sizes = [64, 128], strides = [1, 1]} : vector<64x1024xf32> to vector<64x128xf32>
    %cst_33 = arith.constant dense<0.000000e+00> : vector<64xf32>
    %81 = vector.multi_reduction <add>, %80, %cst_33 [1] : vector<64x128xf32> to vector<64xf32>
    %82 = vector.shape_cast %81 : vector<64xf32> to vector<64x1xf32>
    %cst_34 = arith.constant 1.280000e+02 : f32
    %83 = vector.broadcast %cst_34 : f32 to vector<64x1xf32>
    %84 = arith.divf %82, %83 : vector<64x1xf32>
    %85 = vector.broadcast %84 : vector<64x1xf32> to vector<64x128xf32>
    %86 = arith.subf %80, %85 : vector<64x128xf32>
    %87 = arith.mulf %86, %86 : vector<64x128xf32>
    %cst_35 = arith.constant dense<0.000000e+00> : vector<64xf32>
    %88 = vector.multi_reduction <add>, %87, %cst_35 [1] : vector<64x128xf32> to vector<64xf32>
    %89 = vector.shape_cast %88 : vector<64xf32> to vector<64x1xf32>
    %cst_36 = arith.constant 1.280000e+02 : f32
    %90 = vector.broadcast %cst_36 : f32 to vector<64x1xf32>
    %91 = arith.divf %89, %90 : vector<64x1xf32>
    %92 = vector.broadcast %84 : vector<64x1xf32> to vector<64x128xf32>
    %93 = arith.subf %80, %92 : vector<64x128xf32>
    %cst_37 = arith.constant 9.99999974E-6 : f32
    %94 = vector.broadcast %cst_37 : f32 to vector<64x1xf32>
    %95 = arith.addf %91, %94 : vector<64x1xf32>
    %96 = math.rsqrt %95 : vector<64x1xf32>
    %97 = vector.broadcast %96 : vector<64x1xf32> to vector<64x128xf32>
    %98 = arith.mulf %93, %97 : vector<64x128xf32>
    %99 = arith.mulf %98, %20 : vector<64x128xf32>
    %c64_i32_38 = arith.constant 64 : i32
    %100 = tpu.dynamic_rotate %98 by %c64_i32_38 dim 1 : vector<64x128xf32>, i32 -> vector<64x128xf32>
    %101 = arith.mulf %100, %21 : vector<64x128xf32>
    %102 = arith.addf %99, %101 : vector<64x128xf32>
    %cst_39 = arith.constant 0.0883883461 : f32
    %103 = vector.broadcast %cst_39 : f32 to vector<64x128xf32>
    %104 = arith.mulf %102, %103 : vector<64x128xf32>
    %c0_40 = arith.constant 0 : index
    %c2 = arith.constant 2 : index
    %c0_41 = arith.constant 0 : index
    %c0_42 = arith.constant 0 : index
    %105 = vector.load %arg6[%c0_40, %c2, %c0_41, %c0_42] : memref<1x4x64x128xf32, #tpu.memory_space<vmem>>, vector<1x1x64x128xf32>
    %106 = vector.shape_cast %105 : vector<1x1x64x128xf32> to vector<64x128xf32>
    %107 = vector.shape_cast %104 : vector<64x128xf32> to vector<1x1x64x128xf32>
    tpu.vector_store %arg6[%c0_40, %c2, %c0_41, %c0_42], %107 {strides = array<i32>} : memref<1x4x64x128xf32, #tpu.memory_space<vmem>>, vector<1x1x64x128xf32>,
    %108 = vector.extract_strided_slice %23 {offsets = [0, 384], sizes = [64, 128], strides = [1, 1]} : vector<64x1024xf32> to vector<64x128xf32>
    %cst_43 = arith.constant dense<0.000000e+00> : vector<64xf32>
    %109 = vector.multi_reduction <add>, %108, %cst_43 [1] : vector<64x128xf32> to vector<64xf32>
    %110 = vector.shape_cast %109 : vector<64xf32> to vector<64x1xf32>
    %cst_44 = arith.constant 1.280000e+02 : f32
    %111 = vector.broadcast %cst_44 : f32 to vector<64x1xf32>
    %112 = arith.divf %110, %111 : vector<64x1xf32>
    %113 = vector.broadcast %112 : vector<64x1xf32> to vector<64x128xf32>
    %114 = arith.subf %108, %113 : vector<64x128xf32>
    %115 = arith.mulf %114, %114 : vector<64x128xf32>
    %cst_45 = arith.constant dense<0.000000e+00> : vector<64xf32>
    %116 = vector.multi_reduction <add>, %115, %cst_45 [1] : vector<64x128xf32> to vector<64xf32>
    %117 = vector.shape_cast %116 : vector<64xf32> to vector<64x1xf32>
    %cst_46 = arith.constant 1.280000e+02 : f32
    %118 = vector.broadcast %cst_46 : f32 to vector<64x1xf32>
    %119 = arith.divf %117, %118 : vector<64x1xf32>
    %120 = vector.broadcast %112 : vector<64x1xf32> to vector<64x128xf32>
    %121 = arith.subf %108, %120 : vector<64x128xf32>
    %cst_47 = arith.constant 9.99999974E-6 : f32
    %122 = vector.broadcast %cst_47 : f32 to vector<64x1xf32>
    %123 = arith.addf %119, %122 : vector<64x1xf32>
    %124 = math.rsqrt %123 : vector<64x1xf32>
    %125 = vector.broadcast %124 : vector<64x1xf32> to vector<64x128xf32>
    %126 = arith.mulf %121, %125 : vector<64x128xf32>
    %127 = arith.mulf %126, %20 : vector<64x128xf32>
    %c64_i32_48 = arith.constant 64 : i32
    %128 = tpu.dynamic_rotate %126 by %c64_i32_48 dim 1 : vector<64x128xf32>, i32 -> vector<64x128xf32>
    %129 = arith.mulf %128, %21 : vector<64x128xf32>
    %130 = arith.addf %127, %129 : vector<64x128xf32>
    %cst_49 = arith.constant 0.0883883461 : f32
    %131 = vector.broadcast %cst_49 : f32 to vector<64x128xf32>
    %132 = arith.mulf %130, %131 : vector<64x128xf32>
    %c0_50 = arith.constant 0 : index
    %c3 = arith.constant 3 : index
    %c0_51 = arith.constant 0 : index
    %c0_52 = arith.constant 0 : index
    %133 = vector.load %arg6[%c0_50, %c3, %c0_51, %c0_52] : memref<1x4x64x128xf32, #tpu.memory_space<vmem>>, vector<1x1x64x128xf32>
    %134 = vector.shape_cast %133 : vector<1x1x64x128xf32> to vector<64x128xf32>
    %135 = vector.shape_cast %132 : vector<64x128xf32> to vector<1x1x64x128xf32>
    tpu.vector_store %arg6[%c0_50, %c3, %c0_51, %c0_52], %135 {strides = array<i32>} : memref<1x4x64x128xf32, #tpu.memory_space<vmem>>, vector<1x1x64x128xf32>,
    %136 = vector.extract_strided_slice %23 {offsets = [0, 512], sizes = [64, 128], strides = [1, 1]} : vector<64x1024xf32> to vector<64x128xf32>
    %cst_53 = arith.constant dense<0.000000e+00> : vector<64xf32>
    %137 = vector.multi_reduction <add>, %136, %cst_53 [1] : vector<64x128xf32> to vector<64xf32>
    %138 = vector.shape_cast %137 : vector<64xf32> to vector<64x1xf32>
    %cst_54 = arith.constant 1.280000e+02 : f32
    %139 = vector.broadcast %cst_54 : f32 to vector<64x1xf32>
    %140 = arith.divf %138, %139 : vector<64x1xf32>
    %141 = vector.broadcast %140 : vector<64x1xf32> to vector<64x128xf32>
    %142 = arith.subf %136, %141 : vector<64x128xf32>
    %143 = arith.mulf %142, %142 : vector<64x128xf32>
    %cst_55 = arith.constant dense<0.000000e+00> : vector<64xf32>
    %144 = vector.multi_reduction <add>, %143, %cst_55 [1] : vector<64x128xf32> to vector<64xf32>
    %145 = vector.shape_cast %144 : vector<64xf32> to vector<64x1xf32>
    %cst_56 = arith.constant 1.280000e+02 : f32
    %146 = vector.broadcast %cst_56 : f32 to vector<64x1xf32>
    %147 = arith.divf %145, %146 : vector<64x1xf32>
    %148 = vector.broadcast %140 : vector<64x1xf32> to vector<64x128xf32>
    %149 = arith.subf %136, %148 : vector<64x128xf32>
    %cst_57 = arith.constant 9.99999974E-6 : f32
    %150 = vector.broadcast %cst_57 : f32 to vector<64x1xf32>
    %151 = arith.addf %147, %150 : vector<64x1xf32>
    %152 = math.rsqrt %151 : vector<64x1xf32>
    %153 = vector.broadcast %152 : vector<64x1xf32> to vector<64x128xf32>
    %154 = arith.mulf %149, %153 : vector<64x128xf32>
    %155 = arith.mulf %154, %20 : vector<64x128xf32>
    %c64_i32_58 = arith.constant 64 : i32
    %156 = tpu.dynamic_rotate %154 by %c64_i32_58 dim 1 : vector<64x128xf32>, i32 -> vector<64x128xf32>
    %157 = arith.mulf %156, %21 : vector<64x128xf32>
    %158 = arith.addf %155, %157 : vector<64x128xf32>
    %c0_59 = arith.constant 0 : index
    %c0_60 = arith.constant 0 : index
    %c0_61 = arith.constant 0 : index
    %c0_62 = arith.constant 0 : index
    %159 = vector.load %arg7[%c0_59, %c0_60, %c0_61, %c0_62] : memref<1x2x64x128xf32, #tpu.memory_space<vmem>>, vector<1x1x64x128xf32>
    %160 = vector.shape_cast %159 : vector<1x1x64x128xf32> to vector<64x128xf32>
    %161 = vector.shape_cast %158 : vector<64x128xf32> to vector<1x1x64x128xf32>
    tpu.vector_store %arg7[%c0_59, %c0_60, %c0_61, %c0_62], %161 {strides = array<i32>} : memref<1x2x64x128xf32, #tpu.memory_space<vmem>>, vector<1x1x64x128xf32>,
    %162 = vector.extract_strided_slice %23 {offsets = [0, 768], sizes = [64, 128], strides = [1, 1]} : vector<64x1024xf32> to vector<64x128xf32>
    %c0_63 = arith.constant 0 : index
    %c0_64 = arith.constant 0 : index
    %c0_65 = arith.constant 0 : index
    %c0_66 = arith.constant 0 : index
    %163 = vector.load %arg8[%c0_63, %c0_64, %c0_65, %c0_66] : memref<1x2x64x128xf32, #tpu.memory_space<vmem>>, vector<1x1x64x128xf32>
    %164 = vector.shape_cast %163 : vector<1x1x64x128xf32> to vector<64x128xf32>
    %165 = vector.shape_cast %162 : vector<64x128xf32> to vector<1x1x64x128xf32>
    tpu.vector_store %arg8[%c0_63, %c0_64, %c0_65, %c0_66], %165 {strides = array<i32>} : memref<1x2x64x128xf32, #tpu.memory_space<vmem>>, vector<1x1x64x128xf32>,
    %166 = vector.extract_strided_slice %23 {offsets = [0, 640], sizes = [64, 128], strides = [1, 1]} : vector<64x1024xf32> to vector<64x128xf32>
    %cst_67 = arith.constant dense<0.000000e+00> : vector<64xf32>
    %167 = vector.multi_reduction <add>, %166, %cst_67 [1] : vector<64x128xf32> to vector<64xf32>
    %168 = vector.shape_cast %167 : vector<64xf32> to vector<64x1xf32>
    %cst_68 = arith.constant 1.280000e+02 : f32
    %169 = vector.broadcast %cst_68 : f32 to vector<64x1xf32>
    %170 = arith.divf %168, %169 : vector<64x1xf32>
    %171 = vector.broadcast %170 : vector<64x1xf32> to vector<64x128xf32>
    %172 = arith.subf %166, %171 : vector<64x128xf32>
    %173 = arith.mulf %172, %172 : vector<64x128xf32>
    %cst_69 = arith.constant dense<0.000000e+00> : vector<64xf32>
    %174 = vector.multi_reduction <add>, %173, %cst_69 [1] : vector<64x128xf32> to vector<64xf32>
    %175 = vector.shape_cast %174 : vector<64xf32> to vector<64x1xf32>
    %cst_70 = arith.constant 1.280000e+02 : f32
    %176 = vector.broadcast %cst_70 : f32 to vector<64x1xf32>
    %177 = arith.divf %175, %176 : vector<64x1xf32>
    %178 = vector.broadcast %170 : vector<64x1xf32> to vector<64x128xf32>
    %179 = arith.subf %166, %178 : vector<64x128xf32>
    %cst_71 = arith.constant 9.99999974E-6 : f32
    %180 = vector.broadcast %cst_71 : f32 to vector<64x1xf32>
    %181 = arith.addf %177, %180 : vector<64x1xf32>
    %182 = math.rsqrt %181 : vector<64x1xf32>
    %183 = vector.broadcast %182 : vector<64x1xf32> to vector<64x128xf32>
    %184 = arith.mulf %179, %183 : vector<64x128xf32>
    %185 = arith.mulf %184, %20 : vector<64x128xf32>
    %c64_i32_72 = arith.constant 64 : i32
    %186 = tpu.dynamic_rotate %184 by %c64_i32_72 dim 1 : vector<64x128xf32>, i32 -> vector<64x128xf32>
    %187 = arith.mulf %186, %21 : vector<64x128xf32>
    %188 = arith.addf %185, %187 : vector<64x128xf32>
    %c0_73 = arith.constant 0 : index
    %c1_74 = arith.constant 1 : index
    %c0_75 = arith.constant 0 : index
    %c0_76 = arith.constant 0 : index
    %189 = vector.load %arg7[%c0_73, %c1_74, %c0_75, %c0_76] : memref<1x2x64x128xf32, #tpu.memory_space<vmem>>, vector<1x1x64x128xf32>
    %190 = vector.shape_cast %189 : vector<1x1x64x128xf32> to vector<64x128xf32>
    %191 = vector.shape_cast %188 : vector<64x128xf32> to vector<1x1x64x128xf32>
    tpu.vector_store %arg7[%c0_73, %c1_74, %c0_75, %c0_76], %191 {strides = array<i32>} : memref<1x2x64x128xf32, #tpu.memory_space<vmem>>, vector<1x1x64x128xf32>,
    %192 = vector.extract_strided_slice %23 {offsets = [0, 896], sizes = [64, 128], strides = [1, 1]} : vector<64x1024xf32> to vector<64x128xf32>
    %c0_77 = arith.constant 0 : index
    %c1_78 = arith.constant 1 : index
    %c0_79 = arith.constant 0 : index
    %c0_80 = arith.constant 0 : index
    %193 = vector.load %arg8[%c0_77, %c1_78, %c0_79, %c0_80] : memref<1x2x64x128xf32, #tpu.memory_space<vmem>>, vector<1x1x64x128xf32>
    %194 = vector.shape_cast %193 : vector<1x1x64x128xf32> to vector<64x128xf32>
    %195 = vector.shape_cast %192 : vector<64x128xf32> to vector<1x1x64x128xf32>
    tpu.vector_store %arg8[%c0_77, %c1_78, %c0_79, %c0_80], %195 {strides = array<i32>} : memref<1x2x64x128xf32, #tpu.memory_space<vmem>>, vector<1x1x64x128xf32>,
    return
  }
  func.func @transform_0(%arg0: i32, %arg1: i32) -> (i32, i32, i32) {
    %c0_i32 = arith.constant 0 : i32
    %c0_i32_0 = arith.constant 0 : i32
    return %arg0, %arg1, %c0_i32 : i32, i32, i32
  }
  func.func @transform_1(%arg0: i32, %arg1: i32) -> (i32, i32) {
    %c0_i32 = arith.constant 0 : i32
    %c0_i32_0 = arith.constant 0 : i32
    %c0_i32_1 = arith.constant 0 : i32
    return %c0_i32, %c0_i32_0 : i32, i32
  }
  func.func @transform_2(%arg0: i32, %arg1: i32) -> (i32, i32) {
    %c0_i32 = arith.constant 0 : i32
    %c0_i32_0 = arith.constant 0 : i32
    return %arg1, %c0_i32 : i32, i32
  }
  func.func @transform_3(%arg0: i32, %arg1: i32) -> (i32, i32) {
    %c0_i32 = arith.constant 0 : i32
    %c0_i32_0 = arith.constant 0 : i32
    return %arg1, %c0_i32 : i32, i32
  }
  func.func @transform_4(%arg0: i32, %arg1: i32) -> (i32, i32, i32, i32) {
    %c0_i32 = arith.constant 0 : i32
    %c0_i32_0 = arith.constant 0 : i32
    %c0_i32_1 = arith.constant 0 : i32
    return %arg0, %c0_i32, %arg1, %c0_i32_0 : i32, i32, i32, i32
  }
  func.func @transform_5(%arg0: i32, %arg1: i32) -> (i32, i32, i32, i32) {
    %c0_i32 = arith.constant 0 : i32
    %c0_i32_0 = arith.constant 0 : i32
    %c0_i32_1 = arith.constant 0 : i32
    return %arg0, %c0_i32, %arg1, %c0_i32_0 : i32, i32, i32, i32
  }
  func.func @transform_6(%arg0: i32, %arg1: i32) -> (i32, i32, i32, i32) {
    %c0_i32 = arith.constant 0 : i32
    %c0_i32_0 = arith.constant 0 : i32
    %c0_i32_1 = arith.constant 0 : i32
    return %arg0, %c0_i32, %arg1, %c0_i32_0 : i32, i32, i32, i32
  }
}

</mosaic_0001>

<llo_original>
// kernel: tpu_custom_call.1
$region0: #{tpu_custom_call.1}
  #allocation0 [shape = 'u32[]', space=smem, size = 0x4, offset = 0x4, fixed_abs, tag = 'smem constant byte address 0x4 - core index']
  #allocation1 [shape = 'u32[72,128]{1,0:T(1,128)}', space=vmem, size = 0x9000, scoped, tag = 'internal scratch']
  #allocation13 [shape = 's32[]', space=sflag, size = 0x4, offset = 0, fixed_abs, tag = 'sflag constant byte address 0x0 - dummy sync flag']
  #allocation15 [shape = 's32[]', space=sflag, size = 0x4, offset = 0, fixed_abs, tag = 'sflag constant byte address 0x0 - dummy sync flag']
  #allocation17 [shape = 's32[]', space=sflag, size = 0x4, offset = 0, fixed_abs, tag = 'sflag constant byte address 0x0 - dummy sync flag']
  %s0 = inlined_call_operand.hbm [shape: f32[2,128,128], index: 0, kind: input, shape index: {}]
  %s1 = inlined_call_operand.hbm [shape: f32[128,1024], index: 1, kind: input, shape index: {}]
  %s2 = inlined_call_operand.hbm [shape: f32[128,128], index: 2, kind: input, shape index: {}]
  %s3 = inlined_call_operand.hbm [shape: f32[128,128], index: 3, kind: input, shape index: {}]
  %s4 = inlined_call_operand.hbm [shape: f32[2,4,128,128], index: 4, kind: output, shape index: {0}]
  %s5 = inlined_call_operand.hbm [shape: f32[2,2,128,128], index: 5, kind: output, shape index: {1}]
  %s6 = inlined_call_operand.hbm [shape: f32[2,2,128,128], index: 6, kind: output, shape index: {2}]
  %7 = xla_tuple %s4, %s5, %s6
  %s8 = sld [smem:[#allocation0]]
  $region81: #{tpu_custom_call.1} parent=0
    _
  %s10 = ssub.s32 1, %s8
  %s11 = scalar_select 0, %s10, %s8
  $region1: #{tpu_custom_call.1} parent=0
    #allocation2 [shape = 'u8[65536]{0}', space=vmem, size = 0x10000, scoped, tag = 'input window, operand 0']
    #allocation3 [shape = 's32[2]{0}', space=sflag, size = 0x8, scoped, tag = 'scoped memory for tpu_custom_call.1']
    #allocation4 [shape = 's32[2]{0}', space=sflag, size = 0x8, scoped, tag = 'scoped memory for tpu_custom_call.1']
    #allocation5 [shape = 'u8[524288]{0}', space=vmem, size = 0x80000, scoped, tag = 'input window, operand 1, single buffered']
    #allocation6 [shape = 's32[1]{0}', space=sflag, size = 0x4, scoped, tag = 'scoped memory for tpu_custom_call.1']
    #allocation7 [shape = 'u8[65536]{0}', space=vmem, size = 0x10000, scoped, tag = 'input window, operand 2']
    #allocation8 [shape = 'u8[65536]{0}', space=vmem, size = 0x10000, scoped, tag = 'input window, operand 3']
    #allocation9 [shape = 'u8[262144]{0}', space=vmem, size = 0x40000, scoped, tag = 'output window, operand 0']
    #allocation10 [shape = 'u8[131072]{0}', space=vmem, size = 0x20000, scoped, tag = 'output window, operand 1']
    #allocation11 [shape = 's32[2]{0}', space=sflag, size = 0x8, scoped, tag = 'scoped memory for tpu_custom_call.1']
    #allocation12 [shape = 'u8[131072]{0}', space=vmem, size = 0x20000, scoped, tag = 'output window, operand 2']
    %12 = vsyncpa [#allocation3], 0
    %s13 = scalar_lea.sflag [#allocation3], 1
    %14 = vsyncpa %s13, 0
    %15 = vsyncpa [#allocation6], 0
    %16 = vsyncpa [#allocation4], 0
    %s17 = scalar_lea.sflag [#allocation4], 1
    %18 = vsyncpa %s17, 0
    %19 = vsyncpa [#allocation11], 0
    %s20 = scalar_lea.sflag [#allocation11], 1
    %21 = vsyncpa %s20, 0
    loop: start=0, step=1, limit=6
    $region2: #{tpu_custom_call.1} parent=1 // loop_pre_header
      _
    $region3: #{tpu_custom_call.1} parent=1 // loop_header
      %s23 = sphi 0, %s27
      %p24 = scmp.ge.s32.totalorder %s23, 6
      %s30 = sphi 0, %s42
      %s31 = sphi 0, %s38
      %s32 = sphi 0, %s30
      %s33 = sphi 0, %s31
      %s34 = sphi 0, %s32
      %s35 = sphi 0, %s33
      %s47 = sphi 0, %s49
      %s50 = sphi 0, %s47
      %s51 = sphi 0, %s50
      %s67 = sphi 0, %s51
      %s71 = sphi 0, %s71
      %s73 = sphi 0, %s71
      %s74 = sphi 0, %s73
      %s88 = sphi 0, %s74
      %s94 = sphi 0, %s96
      %s97 = sphi 0, %s94
      %s98 = sphi 0, %s97
      %s114 = sphi 0, %s98
      %s120 = sphi 0, %s122
      %s123 = sphi 0, %s120
      %s124 = sphi 0, %s123
      %s140 = sphi 0, %s124
      %s148 = sphi 0, %s150
      %s151 = sphi 0, %s148
      %s152 = sphi 0, %s151
      %s168 = sphi 0, %s152
      %s176 = sphi 0, %s178
      %s179 = sphi 0, %s176
      %s180 = sphi 0, %s179
      %s196 = sphi 0, %s180
      %s204 = sphi 0, %s206
      %s207 = sphi 0, %s204
      %s208 = sphi 0, %s207
      %s224 = sphi 0, %s208
    $region4: #{tpu_custom_call.1} parent=1 // loop_header_branch
      %26 = sbr.rel (%p24) target = $region8
    $region5: #{tpu_custom_call.1} parent=1 // loop_body
      %s28 = ssub.s32 %s23, 1
      %s29 = ssub.s32 %s23, 2
      %s36 = sadd.s32 1, %s31
      %p37 = scmp.ge.s32.totalorder %s36, 2
      %s38 = scalar_select %p37, 0, %s36
      %s39 = sadd.s32 1, %s30
      %s40 = scalar_select %p37, %s39, %s30
      %p41 = scmp.ge.s32.totalorder %s40, 2
      %s42 = scalar_select %p41, 0, %s40
      %s43 = ssub.s32 %s30, %s42
      %s44 = ssub.s32 %s31, %s38
      %s45 = sor.u32 %s43, %s44
      %p46 = scmp.eq.s32.totalorder %s45, 0
      %s48 = sadd.s32 %s47, 1
      %s49 = scalar_select %p46, %s47, %s48
      %p52 = pneg %p46
      %p53 = scmp.eq.s32.totalorder %s23, 3
      %p54 = por %p52, %p53
      %p55 = scmp.ne.s32.totalorder %s47, %s50
      %p56 = scmp.eq.s32.totalorder %s23, 0
      %p57 = por %p55, %p56
      %p58 = scmp.ne.s32.totalorder %s47, %s50
      %p59 = scmp.eq.s32.totalorder %s28, 3
      %p60 = por %p58, %p59
      %p61 = scmp.ne.s32.totalorder %s50, %s51
      %p62 = scmp.eq.s32.totalorder %s28, 0
      %p63 = por %p61, %p62
      %p64 = scmp.ne.s32.totalorder %s50, %s51
      %p65 = scmp.eq.s32.totalorder %s29, 3
      %p66 = por %p64, %p65
      %p68 = scmp.ne.s32.totalorder %s51, %s67
      %p69 = scmp.eq.s32.totalorder %s29, 0
      %p70 = por %p68, %p69
      %s72 = sadd.s32 %s71, 1
      %p75 = scmp.eq.s32.totalorder %s23, 3
      %p76 = scmp.ne.s32.totalorder %s71, %s73
      %p77 = scmp.eq.s32.totalorder %s23, 0
      %p78 = por %p76, %p77
      %p79 = scmp.ne.s32.totalorder %s71, %s73
      %p80 = scmp.eq.s32.totalorder %s28, 3
      %p81 = por %p79, %p80
      %p82 = scmp.ne.s32.totalorder %s73, %s74
      %p83 = scmp.eq.s32.totalorder %s28, 0
      %p84 = por %p82, %p83
      %p85 = scmp.ne.s32.totalorder %s73, %s74
      %p86 = scmp.eq.s32.totalorder %s29, 3
      %p87 = por %p85, %p86
      %p89 = scmp.ne.s32.totalorder %s74, %s88
      %p90 = scmp.eq.s32.totalorder %s29, 0
      %p91 = por %p89, %p90
      %s92 = ssub.s32 %s31, %s38
      %p93 = scmp.eq.s32.totalorder %s92, 0
      %s95 = sadd.s32 %s94, 1
      %s96 = scalar_select %p93, %s94, %s95
      %p99 = pneg %p93
      %p100 = scmp.eq.s32.totalorder %s23, 3
      %p101 = por %p99, %p100
      %p102 = scmp.ne.s32.totalorder %s94, %s97
      %p103 = scmp.eq.s32.totalorder %s23, 0
      %p104 = por %p102, %p103
      %p105 = scmp.ne.s32.totalorder %s94, %s97
      %p106 = scmp.eq.s32.totalorder %s28, 3
      %p107 = por %p105, %p106
      %p108 = scmp.ne.s32.totalorder %s97, %s98
      %p109 = scmp.eq.s32.totalorder %s28, 0
      %p110 = por %p108, %p109
      %p111 = scmp.ne.s32.totalorder %s97, %s98
      %p112 = scmp.eq.s32.totalorder %s29, 3
      %p113 = por %p111, %p112
      %p115 = scmp.ne.s32.totalorder %s98, %s114
      %p116 = scmp.eq.s32.totalorder %s29, 0
      %p117 = por %p115, %p116
      %s118 = ssub.s32 %s31, %s38
      %p119 = scmp.eq.s32.totalorder %s118, 0
      %s121 = sadd.s32 %s120, 1
      %s122 = scalar_select %p119, %s120, %s121
      %p125 = pneg %p119
      %p126 = scmp.eq.s32.totalorder %s23, 3
      %p127 = por %p125, %p126
      %p128 = scmp.ne.s32.totalorder %s120, %s123
      %p129 = scmp.eq.s32.totalorder %s23, 0
      %p130 = por %p128, %p129
      %p131 = scmp.ne.s32.totalorder %s120, %s123
      %p132 = scmp.eq.s32.totalorder %s28, 3
      %p133 = por %p131, %p132
      %p134 = scmp.ne.s32.totalorder %s123, %s124
      %p135 = scmp.eq.s32.totalorder %s28, 0
      %p136 = por %p134, %p135
      %p137 = scmp.ne.s32.totalorder %s123, %s124
      %p138 = scmp.eq.s32.totalorder %s29, 3
      %p139 = por %p137, %p138
      %p141 = scmp.ne.s32.totalorder %s124, %s140
      %p142 = scmp.eq.s32.totalorder %s29, 0
      %p143 = por %p141, %p142
      %s144 = ssub.s32 %s30, %s42
      %s145 = ssub.s32 %s31, %s38
      %s146 = sor.u32 %s144, %s145
      %p147 = scmp.eq.s32.totalorder %s146, 0
      %s149 = sadd.s32 %s148, 1
      %s150 = scalar_select %p147, %s148, %s149
      %p153 = pneg %p147
      %p154 = scmp.eq.s32.totalorder %s23, 3
      %p155 = por %p153, %p154
      %p156 = scmp.ne.s32.totalorder %s148, %s151
      %p157 = scmp.eq.s32.totalorder %s23, 0
      %p158 = por %p156, %p157
      %p159 = scmp.ne.s32.totalorder %s148, %s151
      %p160 = scmp.eq.s32.totalorder %s28, 3
      %p161 = por %p159, %p160
      %p162 = scmp.ne.s32.totalorder %s151, %s152
      %p163 = scmp.eq.s32.totalorder %s28, 0
      %p164 = por %p162, %p163
      %p165 = scmp.ne.s32.totalorder %s151, %s152
      %p166 = scmp.eq.s32.totalorder %s29, 3
      %p167 = por %p165, %p166
      %p169 = scmp.ne.s32.totalorder %s152, %s168
      %p170 = scmp.eq.s32.totalorder %s29, 0
      %p171 = por %p169, %p170
      %s172 = ssub.s32 %s30, %s42
      %s173 = ssub.s32 %s31, %s38
      %s174 = sor.u32 %s172, %s173
      %p175 = scmp.eq.s32.totalorder %s174, 0
      %s177 = sadd.s32 %s176, 1
      %s178 = scalar_select %p175, %s176, %s177
      %p181 = pneg %p175
      %p182 = scmp.eq.s32.totalorder %s23, 3
      %p183 = por %p181, %p182
      %p184 = scmp.ne.s32.totalorder %s176, %s179
      %p185 = scmp.eq.s32.totalorder %s23, 0
      %p186 = por %p184, %p185
      %p187 = scmp.ne.s32.totalorder %s176, %s179
      %p188 = scmp.eq.s32.totalorder %s28, 3
      %p189 = por %p187, %p188
      %p190 = scmp.ne.s32.totalorder %s179, %s180
      %p191 = scmp.eq.s32.totalorder %s28, 0
      %p192 = por %p190, %p191
      %p193 = scmp.ne.s32.totalorder %s179, %s180
      %p194 = scmp.eq.s32.totalorder %s29, 3
      %p195 = por %p193, %p194
      %p197 = scmp.ne.s32.totalorder %s180, %s196
      %p198 = scmp.eq.s32.totalorder %s29, 0
      %p199 = por %p197, %p198
      %s200 = ssub.s32 %s30, %s42
      %s201 = ssub.s32 %s31, %s38
      %s202 = sor.u32 %s200, %s201
      %p203 = scmp.eq.s32.totalorder %s202, 0
      %s205 = sadd.s32 %s204, 1
      %s206 = scalar_select %p203, %s204, %s205
      %p209 = pneg %p203
      %p210 = scmp.eq.s32.totalorder %s23, 3
      %p211 = por %p209, %p210
      %p212 = scmp.ne.s32.totalorder %s204, %s207
      %p213 = scmp.eq.s32.totalorder %s23, 0
      %p214 = por %p212, %p213
      %p215 = scmp.ne.s32.totalorder %s204, %s207
      %p216 = scmp.eq.s32.totalorder %s28, 3
      %p217 = por %p215, %p216
      %p218 = scmp.ne.s32.totalorder %s207, %s208
      %p219 = scmp.eq.s32.totalorder %s28, 0
      %p220 = por %p218, %p219
      %p221 = scmp.ne.s32.totalorder %s207, %s208
      %p222 = scmp.eq.s32.totalorder %s29, 3
      %p223 = por %p221, %p222
      %p225 = scmp.ne.s32.totalorder %s208, %s224
      %p226 = scmp.eq.s32.totalorder %s29, 0
      %p227 = por %p225, %p226
      %p228 = scmp.le.s32.totalorder 1, %s23
      %p229 = scmp.lt.s32.totalorder %s23, 5
      %p230 = pnand %p228, %p229
      %p231 = pneg %p230
      // Predicated region
      $region9: #{tpu_custom_call.1} parent=5 // pred_check
        _
      $region10: #{tpu_custom_call.1} parent=5 // pred_check_branch
        %233 = sbr.rel (%p230) target = $region12
      $region11: #{tpu_custom_call.1} parent=5 // pred_region
        %s234 = ssub.s32 %s23, 1
        // Predicated region
        $region13: #{tpu_custom_call.1} parent=11 // pred_check
          %p235 = pneg %p84
        $region14: #{tpu_custom_call.1} parent=11 // pred_check_branch
          %237 = sbr.rel (%p235) target = $region16
        $region15: #{tpu_custom_call.1} parent=11 // pred_region
          %239 = vsyncadd [#allocation6], 0
          %s240 = sshll.u32 %s1, 4
          %s241 = int_to_ptr.hbm [resolvable:$true] %s240
          %s242 = sshll.u32 [#allocation5], 4
          %s243 = int_to_ptr.vmem [resolvable:$true] %s242
          %248 = dma.hbm_to_vmem [thread:$0]  %s241, 16384, %s243, [#allocation6], 1024, 1024, 64
        $region16: #{tpu_custom_call.1} parent=11 // pred_fallthru
          _
      $region12: #{tpu_custom_call.1} parent=5 // pred_fallthru
        _
      %p249 = scmp.lt.s32.totalorder %s23, 4
      // Predicated region
      $region17: #{tpu_custom_call.1} parent=5 // pred_check
        %p250 = pneg %p249
      $region18: #{tpu_custom_call.1} parent=5 // pred_check_branch
        %252 = sbr.rel (%p250) target = $region20
      $region19: #{tpu_custom_call.1} parent=5 // pred_region
        // Predicated region
        $region21: #{tpu_custom_call.1} parent=19 // pred_check
          %p253 = pneg %p57
        $region22: #{tpu_custom_call.1} parent=19 // pred_check_branch
          %255 = sbr.rel (%p253) target = $region24
        $region23: #{tpu_custom_call.1} parent=19 // pred_region
          %s256 = sand.u32 %s23, 1
          %s257 = scalar_lea.sflag [#allocation3], %s256
          %s258 = sand.u32 %s47, 1
          %s259 = smul.addr %s258, 64
          %s260 = scalar_lea.vmem [#allocation2], %s259
          %s261 = smul.u32 8, %s31
          %263 = vsyncadd %s257, 0
          %s264 = smul.addr %s30, 16
          %s265 = sadd.s32 %s261, %s264
          %s266 = smul.addr %s265, 8
          %s267 = scalar_lea.hbm %s0, %s266
          %s268 = sshll.u32 %s267, 4
          %s269 = int_to_ptr.hbm [resolvable:$true] %s268
          %s270 = sshll.u32 %s260, 4
          %s271 = int_to_ptr.vmem [resolvable:$true] %s270
          %276 = dma.hbm_to_vmem [thread:$0]  %s269, 1024, %s271, %s257, 128, 128, 8
        $region24: #{tpu_custom_call.1} parent=19 // pred_fallthru
          _
        // Predicated region
        $region25: #{tpu_custom_call.1} parent=19 // pred_check
          %p277 = pneg %p104
        $region26: #{tpu_custom_call.1} parent=19 // pred_check_branch
          %279 = sbr.rel (%p277) target = $region28
        $region27: #{tpu_custom_call.1} parent=19 // pred_region
          %s280 = sand.u32 %s23, 1
          %s281 = scalar_lea.sflag [#allocation3], %s280
          %s282 = sand.u32 %s94, 1
          %s283 = smul.addr %s282, 64
          %s284 = scalar_lea.vmem [#allocation7], %s283
          %s285 = smul.u32 8, %s31
          %287 = vsyncadd %s281, 0
          %s288 = smul.addr %s285, 8
          %s289 = scalar_lea.hbm %s2, %s288
          %s290 = sshll.u32 %s289, 4
          %s291 = int_to_ptr.hbm [resolvable:$true] %s290
          %s292 = sshll.u32 %s284, 4
          %s293 = int_to_ptr.vmem [resolvable:$true] %s292
          %298 = dma.hbm_to_vmem [thread:$0]  %s291, 1024, %s293, %s281, 128, 128, 8
        $region28: #{tpu_custom_call.1} parent=19 // pred_fallthru
          _
        // Predicated region
        $region29: #{tpu_custom_call.1} parent=19 // pred_check
          %p299 = pneg %p130
        $region30: #{tpu_custom_call.1} parent=19 // pred_check_branch
          %301 = sbr.rel (%p299) target = $region32
        $region31: #{tpu_custom_call.1} parent=19 // pred_region
          %s302 = sand.u32 %s23, 1
          %s303 = scalar_lea.sflag [#allocation3], %s302
          %s304 = sand.u32 %s120, 1
          %s305 = smul.addr %s304, 64
          %s306 = scalar_lea.vmem [#allocation8], %s305
          %s307 = smul.u32 8, %s31
          %309 = vsyncadd %s303, 0
          %s310 = smul.addr %s307, 8
          %s311 = scalar_lea.hbm %s3, %s310
          %s312 = sshll.u32 %s311, 4
          %s313 = int_to_ptr.hbm [resolvable:$true] %s312
          %s314 = sshll.u32 %s306, 4
          %s315 = int_to_ptr.vmem [resolvable:$true] %s314
          %320 = dma.hbm_to_vmem [thread:$0]  %s313, 1024, %s315, %s303, 128, 128, 8
        $region32: #{tpu_custom_call.1} parent=19 // pred_fallthru
          _
      $region20: #{tpu_custom_call.1} parent=5 // pred_fallthru
        _
      %p321 = scmp.le.s32.totalorder 1, %s23
      %p322 = scmp.lt.s32.totalorder %s23, 5
      %p323 = pnand %p321, %p322
      %p324 = pneg %p323
      // Predicated region
      $region33: #{tpu_custom_call.1} parent=5 // pred_check
        _
      $region34: #{tpu_custom_call.1} parent=5 // pred_check_branch
        %326 = sbr.rel (%p323) target = $region36
      $region35: #{tpu_custom_call.1} parent=5 // pred_region
        %s327 = ssub.s32 %s23, 1
        %s328 = sand.u32 %s28, 1
        %s329 = scalar_lea.sflag [#allocation3], %s328
        %s330 = sand.u32 %s50, 1
        %s331 = smul.addr %s330, 64
        %s332 = scalar_lea.vmem [#allocation2], %s331
        // Predicated region
        $region37: #{tpu_custom_call.1} parent=35 // pred_check
          %p333 = pneg %p63
        $region38: #{tpu_custom_call.1} parent=35 // pred_check_branch
          %335 = sbr.rel (%p333) target = $region40
        $region39: #{tpu_custom_call.1} parent=35 // pred_region
          %337 = dma.done %s329, 1024
        $region40: #{tpu_custom_call.1} parent=35 // pred_fallthru
          _
        // Predicated region
        $region41: #{tpu_custom_call.1} parent=35 // pred_check
          %p338 = pneg %p84
        $region42: #{tpu_custom_call.1} parent=35 // pred_check_branch
          %340 = sbr.rel (%p338) target = $region44
        $region43: #{tpu_custom_call.1} parent=35 // pred_region
          %342 = dma.done [#allocation6], 16384
        $region44: #{tpu_custom_call.1} parent=35 // pred_fallthru
          _
        %s343 = sand.u32 %s28, 1
        %s344 = scalar_lea.sflag [#allocation3], %s343
        %s345 = sand.u32 %s97, 1
        %s346 = smul.addr %s345, 64
        %s347 = scalar_lea.vmem [#allocation7], %s346
        // Predicated region
        $region45: #{tpu_custom_call.1} parent=35 // pred_check
          %p348 = pneg %p110
        $region46: #{tpu_custom_call.1} parent=35 // pred_check_branch
          %350 = sbr.rel (%p348) target = $region48
        $region47: #{tpu_custom_call.1} parent=35 // pred_region
          %352 = dma.done %s344, 1024
        $region48: #{tpu_custom_call.1} parent=35 // pred_fallthru
          _
        %s353 = sand.u32 %s28, 1
        %s354 = scalar_lea.sflag [#allocation3], %s353
        %s355 = sand.u32 %s123, 1
        %s356 = smul.addr %s355, 64
        %s357 = scalar_lea.vmem [#allocation8], %s356
        // Predicated region
        $region49: #{tpu_custom_call.1} parent=35 // pred_check
          %p358 = pneg %p136
        $region50: #{tpu_custom_call.1} parent=35 // pred_check_branch
          %360 = sbr.rel (%p358) target = $region52
        $region51: #{tpu_custom_call.1} parent=35 // pred_region
          %362 = dma.done %s354, 1024
        $region52: #{tpu_custom_call.1} parent=35 // pred_fallthru
          _
        %s363 = sand.u32 %s28, 1
        %s364 = scalar_lea.sflag [#allocation3], %s363
        %s365 = sand.u32 %s50, 1
        %s366 = smul.addr %s365, 64
        %s367 = scalar_lea.vmem [#allocation2], %s366
        %p368 = pneg %p63
        %p369 = pneg %p60
        %p370 = pneg %p84
        %p371 = pneg %p81
        %s372 = sand.u32 %s28, 1
        %s373 = scalar_lea.sflag [#allocation3], %s372
        %s374 = sand.u32 %s97, 1
        %s375 = smul.addr %s374, 64
        %s376 = scalar_lea.vmem [#allocation7], %s375
        %p377 = pneg %p110
        %p378 = pneg %p107
        %s379 = sand.u32 %s28, 1
        %s380 = scalar_lea.sflag [#allocation3], %s379
        %s381 = sand.u32 %s123, 1
        %s382 = smul.addr %s381, 64
        %s383 = scalar_lea.vmem [#allocation8], %s382
        %p384 = pneg %p136
        %p385 = pneg %p133
        %p386 = pneg %p164
        %p387 = pneg %p161
        %s388 = sand.u32 %s151, 1
        %s389 = scalar_lea.sflag [#allocation4], %s388
        %s390 = sand.u32 %s151, 1
        %s391 = smul.addr %s390, 256
        %s392 = scalar_lea.vmem [#allocation9], %s391
        %p393 = pneg %p192
        %p394 = pneg %p189
        %s395 = sand.u32 %s28, 1
        %s396 = scalar_lea.sflag [#allocation11], %s395
        %s397 = sand.u32 %s179, 1
        %s398 = smul.addr %s397, 128
        %s399 = scalar_lea.vmem [#allocation10], %s398
        %p400 = pneg %p220
        %p401 = pneg %p217
        %s402 = sand.u32 %s28, 1
        %s403 = scalar_lea.sflag [#allocation11], %s402
        %s404 = sand.u32 %s207, 1
        %s405 = smul.addr %s404, 128
        %s406 = scalar_lea.vmem [#allocation12], %s405
        %s407 = smul.u32 8, %s33
        %s408 = smul.u32 8, %s33
        %s409 = smul.u32 8, %s33
        %s410 = smul.u32 8, %s33
        %s411 = smul.u32 8, %s33
        %s412 = smul.u32 8, %s33
        %v413 = vld [vmem:[%s332] sm:$0xff]
        %v414 = vld [vmem:[%s332 + $0x8] sm:$0xff]
        %v415 = vld [vmem:[%s332 + $0x10] sm:$0xff]
        %v416 = vld [vmem:[%s332 + $0x18] sm:$0xff]
        %v417 = vld [vmem:[%s332 + $0x20] sm:$0xff]
        %v418 = vld [vmem:[%s332 + $0x28] sm:$0xff]
        %v419 = vld [vmem:[%s332 + $0x30] sm:$0xff]
        %v420 = vld [vmem:[%s332 + $0x38] sm:$0xff]
        %421 = vadd.xlane.f32.xlu0 %v413
        %v422 = vpop.xlane.xlu0 %421
        %423 = vadd.xlane.f32.xlu0 %v414
        %v424 = vpop.xlane.xlu0 %423
        %425 = vadd.xlane.f32.xlu0 %v415
        %v426 = vpop.xlane.xlu0 %425
        %427 = vadd.xlane.f32.xlu0 %v416
        %v428 = vpop.xlane.xlu0 %427
        %429 = vadd.xlane.f32.xlu0 %v417
        %v430 = vpop.xlane.xlu0 %429
        %431 = vadd.xlane.f32.xlu0 %v418
        %v432 = vpop.xlane.xlu0 %431
        %433 = vadd.xlane.f32.xlu0 %v419
        %v434 = vpop.xlane.xlu0 %433
        %435 = vadd.xlane.f32.xlu0 %v420
        %v436 = vpop.xlane.xlu0 %435
        %v437 = vrcp.pop 128.0
        %v438 = vmul.f32 128.0, %v437
        %v439 = vsub.f32 1.0, %v438
        %v440 = vmul.f32 %v437, %v439
        %v441 = vadd.f32 %v437, %v440
        %vm442 = vweird.f32 %v437
        %v443 = vsel %vm442, %v437, %v441
        %v444 = vmul.f32 %v422, %v443
        %v445 = vmul.f32 %v424, %v443
        %v446 = vmul.f32 %v426, %v443
        %v447 = vmul.f32 %v428, %v443
        %v448 = vmul.f32 %v430, %v443
        %v449 = vmul.f32 %v432, %v443
        %v450 = vmul.f32 %v434, %v443
        %v451 = vmul.f32 %v436, %v443
        %v452 = vsub.f32 %v413, %v444
        %v453 = vsub.f32 %v414, %v445
        %v454 = vsub.f32 %v415, %v446
        %v455 = vsub.f32 %v416, %v447
        %v456 = vsub.f32 %v417, %v448
        %v457 = vsub.f32 %v418, %v449
        %v458 = vsub.f32 %v419, %v450
        %v459 = vsub.f32 %v420, %v451
        %v460 = vmul.f32 %v452, %v452
        %v461 = vmul.f32 %v453, %v453
        %v462 = vmul.f32 %v454, %v454
        %v463 = vmul.f32 %v455, %v455
        %v464 = vmul.f32 %v456, %v456
        %v465 = vmul.f32 %v457, %v457
        %v466 = vmul.f32 %v458, %v458
        %v467 = vmul.f32 %v459, %v459
        %468 = vadd.xlane.f32.xlu0 %v460
        %v469 = vpop.xlane.xlu0 %468
        %470 = vadd.xlane.f32.xlu0 %v461
        %v471 = vpop.xlane.xlu0 %470
        %472 = vadd.xlane.f32.xlu0 %v462
        %v473 = vpop.xlane.xlu0 %472
        %474 = vadd.xlane.f32.xlu0 %v463
        %v475 = vpop.xlane.xlu0 %474
        %476 = vadd.xlane.f32.xlu0 %v464
        %v477 = vpop.xlane.xlu0 %476
        %478 = vadd.xlane.f32.xlu0 %v465
        %v479 = vpop.xlane.xlu0 %478
        %480 = vadd.xlane.f32.xlu0 %v466
        %v481 = vpop.xlane.xlu0 %480
        %482 = vadd.xlane.f32.xlu0 %v467
        %v483 = vpop.xlane.xlu0 %482
        %v484 = vmul.f32 %v469, %v443
        %v485 = vmul.f32 %v471, %v443
        %v486 = vmul.f32 %v473, %v443
        %v487 = vmul.f32 %v475, %v443
        %v488 = vmul.f32 %v477, %v443
        %v489 = vmul.f32 %v479, %v443
        %v490 = vmul.f32 %v481, %v443
        %v491 = vmul.f32 %v483, %v443
        %v492 = vadd.f32 %v484, 1e-05
        %v493 = vadd.f32 %v485, 1e-05
        %v494 = vadd.f32 %v486, 1e-05
        %v495 = vadd.f32 %v487, 1e-05
        %v496 = vadd.f32 %v488, 1e-05
        %v497 = vadd.f32 %v489, 1e-05
        %v498 = vadd.f32 %v490, 1e-05
        %v499 = vadd.f32 %v491, 1e-05
        %v500 = vrsqrt.pop %v492
        %v501 = vmul.f32 %v500, %v492
        %v502 = vmul.f32 %v501, %v500
        %v503 = vmul.f32 0.5, %v502
        %v504 = vsub.f32 1.5, %v503
        %v505 = vmul.f32 %v500, %v504
        %vm506 = vweird.f32 %v492
        %vm507 = vweird.f32 %v500
        %vm508 = vmor %vm506, %vm507
        %v509 = vsel %vm508, %v500, %v505
        %v510 = vrsqrt.pop %v493
        %v511 = vmul.f32 %v510, %v493
        %v512 = vmul.f32 %v511, %v510
        %v513 = vmul.f32 0.5, %v512
        %v514 = vsub.f32 1.5, %v513
        %v515 = vmul.f32 %v510, %v514
        %vm516 = vweird.f32 %v493
        %vm517 = vweird.f32 %v510
        %vm518 = vmor %vm516, %vm517
        %v519 = vsel %vm518, %v510, %v515
        %v520 = vrsqrt.pop %v494
        %v521 = vmul.f32 %v520, %v494
        %v522 = vmul.f32 %v521, %v520
        %v523 = vmul.f32 0.5, %v522
        %v524 = vsub.f32 1.5, %v523
        %v525 = vmul.f32 %v520, %v524
        %vm526 = vweird.f32 %v494
        %vm527 = vweird.f32 %v520
        %vm528 = vmor %vm526, %vm527
        %v529 = vsel %vm528, %v520, %v525
        %v530 = vrsqrt.pop %v495
        %v531 = vmul.f32 %v530, %v495
        %v532 = vmul.f32 %v531, %v530
        %v533 = vmul.f32 0.5, %v532
        %v534 = vsub.f32 1.5, %v533
        %v535 = vmul.f32 %v530, %v534
        %vm536 = vweird.f32 %v495
        %vm537 = vweird.f32 %v530
        %vm538 = vmor %vm536, %vm537
        %v539 = vsel %vm538, %v530, %v535
        %v540 = vrsqrt.pop %v496
        %v541 = vmul.f32 %v540, %v496
        %v542 = vmul.f32 %v541, %v540
        %v543 = vmul.f32 0.5, %v542
        %v544 = vsub.f32 1.5, %v543
        %v545 = vmul.f32 %v540, %v544
        %vm546 = vweird.f32 %v496
        %vm547 = vweird.f32 %v540
        %vm548 = vmor %vm546, %vm547
        %v549 = vsel %vm548, %v540, %v545
        %v550 = vrsqrt.pop %v497
        %v551 = vmul.f32 %v550, %v497
        %v552 = vmul.f32 %v551, %v550
        %v553 = vmul.f32 0.5, %v552
        %v554 = vsub.f32 1.5, %v553
        %v555 = vmul.f32 %v550, %v554
        %vm556 = vweird.f32 %v497
        %vm557 = vweird.f32 %v550
        %vm558 = vmor %vm556, %vm557
        %v559 = vsel %vm558, %v550, %v555
        %v560 = vrsqrt.pop %v498
        %v561 = vmul.f32 %v560, %v498
        %v562 = vmul.f32 %v561, %v560
        %v563 = vmul.f32 0.5, %v562
        %v564 = vsub.f32 1.5, %v563
        %v565 = vmul.f32 %v560, %v564
        %vm566 = vweird.f32 %v498
        %vm567 = vweird.f32 %v560
        %vm568 = vmor %vm566, %vm567
        %v569 = vsel %vm568, %v560, %v565
        %v570 = vrsqrt.pop %v499
        %v571 = vmul.f32 %v570, %v499
        %v572 = vmul.f32 %v571, %v570
        %v573 = vmul.f32 0.5, %v572
        %v574 = vsub.f32 1.5, %v573
        %v575 = vmul.f32 %v570, %v574
        %vm576 = vweird.f32 %v499
        %vm577 = vweird.f32 %v570
        %vm578 = vmor %vm576, %vm577
        %v579 = vsel %vm578, %v570, %v575
        %v580 = vmul.f32 %v452, %v509
        %v581 = vmul.f32 %v453, %v519
        %v582 = vmul.f32 %v454, %v529
        %v583 = vmul.f32 %v455, %v539
        %v584 = vmul.f32 %v456, %v549
        %v585 = vmul.f32 %v457, %v559
        %v586 = vmul.f32 %v458, %v569
        %v587 = vmul.f32 %v459, %v579
        %v588 = vld [vmem:[%s347] sm:$0xff]
        %v589 = vld [vmem:[%s347 + $0x8] sm:$0xff]
        %v590 = vld [vmem:[%s347 + $0x10] sm:$0xff]
        %v591 = vld [vmem:[%s347 + $0x18] sm:$0xff]
        %v592 = vld [vmem:[%s347 + $0x20] sm:$0xff]
        %v593 = vld [vmem:[%s347 + $0x28] sm:$0xff]
        %v594 = vld [vmem:[%s347 + $0x30] sm:$0xff]
        %v595 = vld [vmem:[%s347 + $0x38] sm:$0xff]
        %v596 = vld [vmem:[%s357] sm:$0xff]
        %v597 = vld [vmem:[%s357 + $0x8] sm:$0xff]
        %v598 = vld [vmem:[%s357 + $0x10] sm:$0xff]
        %v599 = vld [vmem:[%s357 + $0x18] sm:$0xff]
        %v600 = vld [vmem:[%s357 + $0x20] sm:$0xff]
        %v601 = vld [vmem:[%s357 + $0x28] sm:$0xff]
        %v602 = vld [vmem:[%s357 + $0x30] sm:$0xff]
        %v603 = vld [vmem:[%s357 + $0x38] sm:$0xff]
        %v604 = vld [vmem:[#allocation5] sm:$0xff]
        %v605 = vld [vmem:[#allocation5 + $0x8] sm:$0xff]
        %v606 = vld [vmem:[#allocation5 + $0x10] sm:$0xff]
        %v607 = vld [vmem:[#allocation5 + $0x18] sm:$0xff]
        %v608 = vld [vmem:[#allocation5 + $0x20] sm:$0xff]
        %v609 = vld [vmem:[#allocation5 + $0x28] sm:$0xff]
        %v610 = vld [vmem:[#allocation5 + $0x30] sm:$0xff]
        %v611 = vld [vmem:[#allocation5 + $0x38] sm:$0xff]
        %v612 = vld [vmem:[#allocation5 + $0x40] sm:$0xff]
        %v613 = vld [vmem:[#allocation5 + $0x48] sm:$0xff]
        %v614 = vld [vmem:[#allocation5 + $0x50] sm:$0xff]
        %v615 = vld [vmem:[#allocation5 + $0x58] sm:$0xff]
        %v616 = vld [vmem:[#allocation5 + $0x60] sm:$0xff]
        %v617 = vld [vmem:[#allocation5 + $0x68] sm:$0xff]
        %v618 = vld [vmem:[#allocation5 + $0x70] sm:$0xff]
        %v619 = vld [vmem:[#allocation5 + $0x78] sm:$0xff]
        %v620 = vld [vmem:[#allocation5 + $0x80] sm:$0xff]
        %v621 = vld [vmem:[#allocation5 + $0x88] sm:$0xff]
        %v622 = vld [vmem:[#allocation5 + $0x90] sm:$0xff]
        %v623 = vld [vmem:[#allocation5 + $0x98] sm:$0xff]
        %v624 = vld [vmem:[#allocation5 + $0xa0] sm:$0xff]
        %v625 = vld [vmem:[#allocation5 + $0xa8] sm:$0xff]
        %v626 = vld [vmem:[#allocation5 + $0xb0] sm:$0xff]
        %v627 = vld [vmem:[#allocation5 + $0xb8] sm:$0xff]
        %v628 = vld [vmem:[#allocation5 + $0xc0] sm:$0xff]
        %v629 = vld [vmem:[#allocation5 + $0xc8] sm:$0xff]
        %v630 = vld [vmem:[#allocation5 + $0xd0] sm:$0xff]
        %v631 = vld [vmem:[#allocation5 + $0xd8] sm:$0xff]
        %v632 = vld [vmem:[#allocation5 + $0xe0] sm:$0xff]
        %v633 = vld [vmem:[#allocation5 + $0xe8] sm:$0xff]
        %v634 = vld [vmem:[#allocation5 + $0xf0] sm:$0xff]
        %v635 = vld [vmem:[#allocation5 + $0xf8] sm:$0xff]
        %v636 = vld [vmem:[#allocation5 + $0x100] sm:$0xff]
        %v637 = vld [vmem:[#allocation5 + $0x108] sm:$0xff]
        %v638 = vld [vmem:[#allocation5 + $0x110] sm:$0xff]
        %v639 = vld [vmem:[#allocation5 + $0x118] sm:$0xff]
        %v640 = vld [vmem:[#allocation5 + $0x120] sm:$0xff]
        %v641 = vld [vmem:[#allocation5 + $0x128] sm:$0xff]
        %v642 = vld [vmem:[#allocation5 + $0x130] sm:$0xff]
        %v643 = vld [vmem:[#allocation5 + $0x138] sm:$0xff]
        %v644 = vld [vmem:[#allocation5 + $0x140] sm:$0xff]
        %v645 = vld [vmem:[#allocation5 + $0x148] sm:$0xff]
        %v646 = vld [vmem:[#allocation5 + $0x150] sm:$0xff]
        %v647 = vld [vmem:[#allocation5 + $0x158] sm:$0xff]
        %v648 = vld [vmem:[#allocation5 + $0x160] sm:$0xff]
        %v649 = vld [vmem:[#allocation5 + $0x168] sm:$0xff]
        %v650 = vld [vmem:[#allocation5 + $0x170] sm:$0xff]
        %v651 = vld [vmem:[#allocation5 + $0x178] sm:$0xff]
        %v652 = vld [vmem:[#allocation5 + $0x180] sm:$0xff]
        %v653 = vld [vmem:[#allocation5 + $0x188] sm:$0xff]
        %v654 = vld [vmem:[#allocation5 + $0x190] sm:$0xff]
        %v655 = vld [vmem:[#allocation5 + $0x198] sm:$0xff]
        %v656 = vld [vmem:[#allocation5 + $0x1a0] sm:$0xff]
        %v657 = vld [vmem:[#allocation5 + $0x1a8] sm:$0xff]
        %v658 = vld [vmem:[#allocation5 + $0x1b0] sm:$0xff]
        %v659 = vld [vmem:[#allocation5 + $0x1b8] sm:$0xff]
        %v660 = vld [vmem:[#allocation5 + $0x1c0] sm:$0xff]
        %v661 = vld [vmem:[#allocation5 + $0x1c8] sm:$0xff]
        %v662 = vld [vmem:[#allocation5 + $0x1d0] sm:$0xff]
        %v663 = vld [vmem:[#allocation5 + $0x1d8] sm:$0xff]
        %v664 = vld [vmem:[#allocation5 + $0x1e0] sm:$0xff]
        %v665 = vld [vmem:[#allocation5 + $0x1e8] sm:$0xff]
        %v666 = vld [vmem:[#allocation5 + $0x1f0] sm:$0xff]
        %v667 = vld [vmem:[#allocation5 + $0x1f8] sm:$0xff]
        %v668 = vld [vmem:[#allocation5 + $0x200] sm:$0xff]
        %v669 = vld [vmem:[#allocation5 + $0x208] sm:$0xff]
        %v670 = vld [vmem:[#allocation5 + $0x210] sm:$0xff]
        %v671 = vld [vmem:[#allocation5 + $0x218] sm:$0xff]
        %v672 = vld [vmem:[#allocation5 + $0x220] sm:$0xff]
        %v673 = vld [vmem:[#allocation5 + $0x228] sm:$0xff]
        %v674 = vld [vmem:[#allocation5 + $0x230] sm:$0xff]
        %v675 = vld [vmem:[#allocation5 + $0x238] sm:$0xff]
        %v676 = vld [vmem:[#allocation5 + $0x240] sm:$0xff]
        %v677 = vld [vmem:[#allocation5 + $0x248] sm:$0xff]
        %v678 = vld [vmem:[#allocation5 + $0x250] sm:$0xff]
        %v679 = vld [vmem:[#allocation5 + $0x258] sm:$0xff]
        %v680 = vld [vmem:[#allocation5 + $0x260] sm:$0xff]
        %v681 = vld [vmem:[#allocation5 + $0x268] sm:$0xff]
        %v682 = vld [vmem:[#allocation5 + $0x270] sm:$0xff]
        %v683 = vld [vmem:[#allocation5 + $0x278] sm:$0xff]
        %v684 = vld [vmem:[#allocation5 + $0x280] sm:$0xff]
        %v685 = vld [vmem:[#allocation5 + $0x288] sm:$0xff]
        %v686 = vld [vmem:[#allocation5 + $0x290] sm:$0xff]
        %v687 = vld [vmem:[#allocation5 + $0x298] sm:$0xff]
        %v688 = vld [vmem:[#allocation5 + $0x2a0] sm:$0xff]
        %v689 = vld [vmem:[#allocation5 + $0x2a8] sm:$0xff]
        %v690 = vld [vmem:[#allocation5 + $0x2b0] sm:$0xff]
        %v691 = vld [vmem:[#allocation5 + $0x2b8] sm:$0xff]
        %v692 = vld [vmem:[#allocation5 + $0x2c0] sm:$0xff]
        %v693 = vld [vmem:[#allocation5 + $0x2c8] sm:$0xff]
        %v694 = vld [vmem:[#allocation5 + $0x2d0] sm:$0xff]
        %v695 = vld [vmem:[#allocation5 + $0x2d8] sm:$0xff]
        %v696 = vld [vmem:[#allocation5 + $0x2e0] sm:$0xff]
        %v697 = vld [vmem:[#allocation5 + $0x2e8] sm:$0xff]
        %v698 = vld [vmem:[#allocation5 + $0x2f0] sm:$0xff]
        %v699 = vld [vmem:[#allocation5 + $0x2f8] sm:$0xff]
        %v700 = vld [vmem:[#allocation5 + $0x300] sm:$0xff]
        %v701 = vld [vmem:[#allocation5 + $0x308] sm:$0xff]
        %v702 = vld [vmem:[#allocation5 + $0x310] sm:$0xff]
        %v703 = vld [vmem:[#allocation5 + $0x318] sm:$0xff]
        %v704 = vld [vmem:[#allocation5 + $0x320] sm:$0xff]
        %v705 = vld [vmem:[#allocation5 + $0x328] sm:$0xff]
        %v706 = vld [vmem:[#allocation5 + $0x330] sm:$0xff]
        %v707 = vld [vmem:[#allocation5 + $0x338] sm:$0xff]
        %v708 = vld [vmem:[#allocation5 + $0x340] sm:$0xff]
        %v709 = vld [vmem:[#allocation5 + $0x348] sm:$0xff]
        %v710 = vld [vmem:[#allocation5 + $0x350] sm:$0xff]
        %v711 = vld [vmem:[#allocation5 + $0x358] sm:$0xff]
        %v712 = vld [vmem:[#allocation5 + $0x360] sm:$0xff]
        %v713 = vld [vmem:[#allocation5 + $0x368] sm:$0xff]
        %v714 = vld [vmem:[#allocation5 + $0x370] sm:$0xff]
        %v715 = vld [vmem:[#allocation5 + $0x378] sm:$0xff]
        %v716 = vld [vmem:[#allocation5 + $0x380] sm:$0xff]
        %v717 = vld [vmem:[#allocation5 + $0x388] sm:$0xff]
        %v718 = vld [vmem:[#allocation5 + $0x390] sm:$0xff]
        %v719 = vld [vmem:[#allocation5 + $0x398] sm:$0xff]
        %v720 = vld [vmem:[#allocation5 + $0x3a0] sm:$0xff]
        %v721 = vld [vmem:[#allocation5 + $0x3a8] sm:$0xff]
        %v722 = vld [vmem:[#allocation5 + $0x3b0] sm:$0xff]
        %v723 = vld [vmem:[#allocation5 + $0x3b8] sm:$0xff]
        %v724 = vld [vmem:[#allocation5 + $0x3c0] sm:$0xff]
        %v725 = vld [vmem:[#allocation5 + $0x3c8] sm:$0xff]
        %v726 = vld [vmem:[#allocation5 + $0x3d0] sm:$0xff]
        %v727 = vld [vmem:[#allocation5 + $0x3d8] sm:$0xff]
        %v728 = vld [vmem:[#allocation5 + $0x3e0] sm:$0xff]
        %v729 = vld [vmem:[#allocation5 + $0x3e8] sm:$0xff]
        %v730 = vld [vmem:[#allocation5 + $0x3f0] sm:$0xff]
        %v731 = vld [vmem:[#allocation5 + $0x3f8] sm:$0xff]
        %732 = vmatpush.msra.mxu0 %v724
        %733 = vmatpush.msra.mxu0 %v716
        %734 = vmatpush.msra.mxu0 %v708
        %735 = vmatpush.msra.mxu0 %v700
        %736 = vmatpush.msra.mxu0 %v692
        %737 = vmatpush.msra.mxu0 %v684
        %738 = vmatpush.msra.mxu0 %v676
        %739 = vmatpush.msra.mxu0 %v668
        %740 = vmatpush.msra.mxu0 %v660
        %741 = vmatpush.msra.mxu0 %v652
        %742 = vmatpush.msra.mxu0 %v644
        %743 = vmatpush.msra.mxu0 %v636
        %744 = vmatpush.msra.mxu0 %v628
        %745 = vmatpush.msra.mxu0 %v620
        %746 = vmatpush.msra.mxu0 %v612
        %747 = vmatpush.msra.mxu0 %v604
        %748 = vmatmul.f32.gmra.mxu0 %v580
        %v749 = vpop.f32.mrf.mxu0
        %v750 = vadd.f32 0.0, %v749
        %751 = vmatmul.f32.gmra.mxu0 %v581
        %v752 = vpop.f32.mrf.mxu0
        %v753 = vadd.f32 0.0, %v752
        %754 = vmatmul.f32.gmra.mxu0 %v582
        %v755 = vpop.f32.mrf.mxu0
        %v756 = vadd.f32 0.0, %v755
        %757 = vmatmul.f32.gmra.mxu0 %v583
        %v758 = vpop.f32.mrf.mxu0
        %v759 = vadd.f32 0.0, %v758
        %760 = vmatmul.f32.gmra.mxu0 %v584
        %v761 = vpop.f32.mrf.mxu0
        %v762 = vadd.f32 0.0, %v761
        %763 = vmatmul.f32.gmra.mxu0 %v585
        %v764 = vpop.f32.mrf.mxu0
        %v765 = vadd.f32 0.0, %v764
        %766 = vmatmul.f32.gmra.mxu0 %v586
        %v767 = vpop.f32.mrf.mxu0
        %v768 = vadd.f32 0.0, %v767
        %769 = vmatmul.f32.gmra.mxu0 %v587
        %v770 = vpop.f32.mrf.mxu0
        %v771 = vadd.f32 0.0, %v770
        %772 = vdwg.mxu0
        %773 = vmatpush.msra.mxu0 %v725
        %774 = vmatpush.msra.mxu0 %v717
        %775 = vmatpush.msra.mxu0 %v709
        %776 = vmatpush.msra.mxu0 %v701
        %777 = vmatpush.msra.mxu0 %v693
        %778 = vmatpush.msra.mxu0 %v685
        %779 = vmatpush.msra.mxu0 %v677
        %780 = vmatpush.msra.mxu0 %v669
        %781 = vmatpush.msra.mxu0 %v661
        %782 = vmatpush.msra.mxu0 %v653
        %783 = vmatpush.msra.mxu0 %v645
        %784 = vmatpush.msra.mxu0 %v637
        %785 = vmatpush.msra.mxu0 %v629
        %786 = vmatpush.msra.mxu0 %v621
        %787 = vmatpush.msra.mxu0 %v613
        %788 = vmatpush.msra.mxu0 %v605
        %789 = vmatmul.f32.gmra.mxu0 %v580
        %v790 = vpop.f32.mrf.mxu0
        %v791 = vadd.f32 0.0, %v790
        %792 = vmatmul.f32.gmra.mxu0 %v581
        %v793 = vpop.f32.mrf.mxu0
        %v794 = vadd.f32 0.0, %v793
        %795 = vmatmul.f32.gmra.mxu0 %v582
        %v796 = vpop.f32.mrf.mxu0
        %v797 = vadd.f32 0.0, %v796
        %798 = vmatmul.f32.gmra.mxu0 %v583
        %v799 = vpop.f32.mrf.mxu0
        %v800 = vadd.f32 0.0, %v799
        %801 = vmatmul.f32.gmra.mxu0 %v584
        %v802 = vpop.f32.mrf.mxu0
        %v803 = vadd.f32 0.0, %v802
        %804 = vmatmul.f32.gmra.mxu0 %v585
        %v805 = vpop.f32.mrf.mxu0
        %v806 = vadd.f32 0.0, %v805
        %807 = vmatmul.f32.gmra.mxu0 %v586
        %v808 = vpop.f32.mrf.mxu0
        %v809 = vadd.f32 0.0, %v808
        %810 = vmatmul.f32.gmra.mxu0 %v587
        %v811 = vpop.f32.mrf.mxu0
        %v812 = vadd.f32 0.0, %v811
        %813 = vdwg.mxu0
        %814 = vmatpush.msra.mxu0 %v726
        %815 = vmatpush.msra.mxu0 %v718
        %816 = vmatpush.msra.mxu0 %v710
        %817 = vmatpush.msra.mxu0 %v702
        %818 = vmatpush.msra.mxu0 %v694
        %819 = vmatpush.msra.mxu0 %v686
        %820 = vmatpush.msra.mxu0 %v678
        %821 = vmatpush.msra.mxu0 %v670
        %822 = vmatpush.msra.mxu0 %v662
        %823 = vmatpush.msra.mxu0 %v654
        %824 = vmatpush.msra.mxu0 %v646
        %825 = vmatpush.msra.mxu0 %v638
        %826 = vmatpush.msra.mxu0 %v630
        %827 = vmatpush.msra.mxu0 %v622
        %828 = vmatpush.msra.mxu0 %v614
        %829 = vmatpush.msra.mxu0 %v606
        %830 = vmatmul.f32.gmra.mxu0 %v580
        %v831 = vpop.f32.mrf.mxu0
        %v832 = vadd.f32 0.0, %v831
        %833 = vmatmul.f32.gmra.mxu0 %v581
        %v834 = vpop.f32.mrf.mxu0
        %v835 = vadd.f32 0.0, %v834
        %836 = vmatmul.f32.gmra.mxu0 %v582
        %v837 = vpop.f32.mrf.mxu0
        %v838 = vadd.f32 0.0, %v837
        %839 = vmatmul.f32.gmra.mxu0 %v583
        %v840 = vpop.f32.mrf.mxu0
        %v841 = vadd.f32 0.0, %v840
        %842 = vmatmul.f32.gmra.mxu0 %v584
        %v843 = vpop.f32.mrf.mxu0
        %v844 = vadd.f32 0.0, %v843
        %845 = vmatmul.f32.gmra.mxu0 %v585
        %v846 = vpop.f32.mrf.mxu0
        %v847 = vadd.f32 0.0, %v846
        %848 = vmatmul.f32.gmra.mxu0 %v586
        %v849 = vpop.f32.mrf.mxu0
        %v850 = vadd.f32 0.0, %v849
        %851 = vmatmul.f32.gmra.mxu0 %v587
        %v852 = vpop.f32.mrf.mxu0
        %v853 = vadd.f32 0.0, %v852
        %854 = vdwg.mxu0
        %855 = vmatpush.msra.mxu0 %v727
        %856 = vmatpush.msra.mxu0 %v719
        %857 = vmatpush.msra.mxu0 %v711
        %858 = vmatpush.msra.mxu0 %v703
        %859 = vmatpush.msra.mxu0 %v695
        %860 = vmatpush.msra.mxu0 %v687
        %861 = vmatpush.msra.mxu0 %v679
        %862 = vmatpush.msra.mxu0 %v671
        %863 = vmatpush.msra.mxu0 %v663
        %864 = vmatpush.msra.mxu0 %v655
        %865 = vmatpush.msra.mxu0 %v647
        %866 = vmatpush.msra.mxu0 %v639
        %867 = vmatpush.msra.mxu0 %v631
        %868 = vmatpush.msra.mxu0 %v623
        %869 = vmatpush.msra.mxu0 %v615
        %870 = vmatpush.msra.mxu0 %v607
        %871 = vmatmul.f32.gmra.mxu0 %v580
        %v872 = vpop.f32.mrf.mxu0
        %v873 = vadd.f32 0.0, %v872
        %874 = vmatmul.f32.gmra.mxu0 %v581
        %v875 = vpop.f32.mrf.mxu0
        %v876 = vadd.f32 0.0, %v875
        %877 = vmatmul.f32.gmra.mxu0 %v582
        %v878 = vpop.f32.mrf.mxu0
        %v879 = vadd.f32 0.0, %v878
        %880 = vmatmul.f32.gmra.mxu0 %v583
        %v881 = vpop.f32.mrf.mxu0
        %v882 = vadd.f32 0.0, %v881
        %883 = vmatmul.f32.gmra.mxu0 %v584
        %v884 = vpop.f32.mrf.mxu0
        %v885 = vadd.f32 0.0, %v884
        %886 = vmatmul.f32.gmra.mxu0 %v585
        %v887 = vpop.f32.mrf.mxu0
        %v888 = vadd.f32 0.0, %v887
        %889 = vmatmul.f32.gmra.mxu0 %v586
        %v890 = vpop.f32.mrf.mxu0
        %v891 = vadd.f32 0.0, %v890
        %892 = vmatmul.f32.gmra.mxu0 %v587
        %v893 = vpop.f32.mrf.mxu0
        %v894 = vadd.f32 0.0, %v893
        %895 = vdwg.mxu0
        %896 = vmatpush.msra.mxu0 %v728
        %897 = vmatpush.msra.mxu0 %v720
        %898 = vmatpush.msra.mxu0 %v712
        %899 = vmatpush.msra.mxu0 %v704
        %900 = vmatpush.msra.mxu0 %v696
        %901 = vmatpush.msra.mxu0 %v688
        %902 = vmatpush.msra.mxu0 %v680
        %903 = vmatpush.msra.mxu0 %v672
        %904 = vmatpush.msra.mxu0 %v664
        %905 = vmatpush.msra.mxu0 %v656
        %906 = vmatpush.msra.mxu0 %v648
        %907 = vmatpush.msra.mxu0 %v640
        %908 = vmatpush.msra.mxu0 %v632
        %909 = vmatpush.msra.mxu0 %v624
        %910 = vmatpush.msra.mxu0 %v616
        %911 = vmatpush.msra.mxu0 %v608
        %912 = vmatmul.f32.gmra.mxu0 %v580
        %v913 = vpop.f32.mrf.mxu0
        %v914 = vadd.f32 0.0, %v913
        %915 = vmatmul.f32.gmra.mxu0 %v581
        %v916 = vpop.f32.mrf.mxu0
        %v917 = vadd.f32 0.0, %v916
        %918 = vmatmul.f32.gmra.mxu0 %v582
        %v919 = vpop.f32.mrf.mxu0
        %v920 = vadd.f32 0.0, %v919
        %921 = vmatmul.f32.gmra.mxu0 %v583
        %v922 = vpop.f32.mrf.mxu0
        %v923 = vadd.f32 0.0, %v922
        %924 = vmatmul.f32.gmra.mxu0 %v584
        %v925 = vpop.f32.mrf.mxu0
        %v926 = vadd.f32 0.0, %v925
        %927 = vmatmul.f32.gmra.mxu0 %v585
        %v928 = vpop.f32.mrf.mxu0
        %v929 = vadd.f32 0.0, %v928
        %930 = vmatmul.f32.gmra.mxu0 %v586
        %v931 = vpop.f32.mrf.mxu0
        %v932 = vadd.f32 0.0, %v931
        %933 = vmatmul.f32.gmra.mxu0 %v587
        %v934 = vpop.f32.mrf.mxu0
        %v935 = vadd.f32 0.0, %v934
        %936 = vdwg.mxu0
        %937 = vmatpush.msra.mxu0 %v729
        %938 = vmatpush.msra.mxu0 %v721
        %939 = vmatpush.msra.mxu0 %v713
        %940 = vmatpush.msra.mxu0 %v705
        %941 = vmatpush.msra.mxu0 %v697
        %942 = vmatpush.msra.mxu0 %v689
        %943 = vmatpush.msra.mxu0 %v681
        %944 = vmatpush.msra.mxu0 %v673
        %945 = vmatpush.msra.mxu0 %v665
        %946 = vmatpush.msra.mxu0 %v657
        %947 = vmatpush.msra.mxu0 %v649
        %948 = vmatpush.msra.mxu0 %v641
        %949 = vmatpush.msra.mxu0 %v633
        %950 = vmatpush.msra.mxu0 %v625
        %951 = vmatpush.msra.mxu0 %v617
        %952 = vmatpush.msra.mxu0 %v609
        %953 = vmatmul.f32.gmra.mxu0 %v580
        %v954 = vpop.f32.mrf.mxu0
        %v955 = vadd.f32 0.0, %v954
        %956 = vmatmul.f32.gmra.mxu0 %v581
        %v957 = vpop.f32.mrf.mxu0
        %v958 = vadd.f32 0.0, %v957
        %959 = vmatmul.f32.gmra.mxu0 %v582
        %v960 = vpop.f32.mrf.mxu0
        %v961 = vadd.f32 0.0, %v960
        %962 = vmatmul.f32.gmra.mxu0 %v583
        %v963 = vpop.f32.mrf.mxu0
        %v964 = vadd.f32 0.0, %v963
        %965 = vmatmul.f32.gmra.mxu0 %v584
        %v966 = vpop.f32.mrf.mxu0
        %v967 = vadd.f32 0.0, %v966
        %968 = vmatmul.f32.gmra.mxu0 %v585
        %v969 = vpop.f32.mrf.mxu0
        %v970 = vadd.f32 0.0, %v969
        %971 = vmatmul.f32.gmra.mxu0 %v586
        %v972 = vpop.f32.mrf.mxu0
        %v973 = vadd.f32 0.0, %v972
        %974 = vmatmul.f32.gmra.mxu0 %v587
        %v975 = vpop.f32.mrf.mxu0
        %v976 = vadd.f32 0.0, %v975
        %977 = vdwg.mxu0
        %978 = vmatpush.msra.mxu0 %v730
        %979 = vmatpush.msra.mxu0 %v722
        %980 = vmatpush.msra.mxu0 %v714
        %981 = vmatpush.msra.mxu0 %v706
        %982 = vmatpush.msra.mxu0 %v698
        %983 = vmatpush.msra.mxu0 %v690
        %984 = vmatpush.msra.mxu0 %v682
        %985 = vmatpush.msra.mxu0 %v674
        %986 = vmatpush.msra.mxu0 %v666
        %987 = vmatpush.msra.mxu0 %v658
        %988 = vmatpush.msra.mxu0 %v650
        %989 = vmatpush.msra.mxu0 %v642
        %990 = vmatpush.msra.mxu0 %v634
        %991 = vmatpush.msra.mxu0 %v626
        %992 = vmatpush.msra.mxu0 %v618
        %993 = vmatpush.msra.mxu0 %v610
        %994 = vmatmul.f32.gmra.mxu0 %v580
        %v995 = vpop.f32.mrf.mxu0
        %v996 = vadd.f32 0.0, %v995
        %997 = vmatmul.f32.gmra.mxu0 %v581
        %v998 = vpop.f32.mrf.mxu0
        %v999 = vadd.f32 0.0, %v998
        %1000 = vmatmul.f32.gmra.mxu0 %v582
        %v1001 = vpop.f32.mrf.mxu0
        %v1002 = vadd.f32 0.0, %v1001
        %1003 = vmatmul.f32.gmra.mxu0 %v583
        %v1004 = vpop.f32.mrf.mxu0
        %v1005 = vadd.f32 0.0, %v1004
        %1006 = vmatmul.f32.gmra.mxu0 %v584
        %v1007 = vpop.f32.mrf.mxu0
        %v1008 = vadd.f32 0.0, %v1007
        %1009 = vmatmul.f32.gmra.mxu0 %v585
        %v1010 = vpop.f32.mrf.mxu0
        %v1011 = vadd.f32 0.0, %v1010
        %1012 = vmatmul.f32.gmra.mxu0 %v586
        %v1013 = vpop.f32.mrf.mxu0
        %v1014 = vadd.f32 0.0, %v1013
        %1015 = vmatmul.f32.gmra.mxu0 %v587
        %v1016 = vpop.f32.mrf.mxu0
        %v1017 = vadd.f32 0.0, %v1016
        %1018 = vdwg.mxu0
        %1019 = vmatpush.msra.mxu0 %v731
        %1020 = vmatpush.msra.mxu0 %v723
        %1021 = vmatpush.msra.mxu0 %v715
        %1022 = vmatpush.msra.mxu0 %v707
        %1023 = vmatpush.msra.mxu0 %v699
        %1024 = vmatpush.msra.mxu0 %v691
        %1025 = vmatpush.msra.mxu0 %v683
        %1026 = vmatpush.msra.mxu0 %v675
        %1027 = vmatpush.msra.mxu0 %v667
        %1028 = vmatpush.msra.mxu0 %v659
        %1029 = vmatpush.msra.mxu0 %v651
        %1030 = vmatpush.msra.mxu0 %v643
        %1031 = vmatpush.msra.mxu0 %v635
        %1032 = vmatpush.msra.mxu0 %v627
        %1033 = vmatpush.msra.mxu0 %v619
        %1034 = vmatpush.msra.mxu0 %v611
        %1035 = vmatmul.f32.gmra.mxu0 %v580
        %v1036 = vpop.f32.mrf.mxu0
        %v1037 = vadd.f32 0.0, %v1036
        %1038 = vmatmul.f32.gmra.mxu0 %v581
        %v1039 = vpop.f32.mrf.mxu0
        %v1040 = vadd.f32 0.0, %v1039
        %1041 = vmatmul.f32.gmra.mxu0 %v582
        %v1042 = vpop.f32.mrf.mxu0
        %v1043 = vadd.f32 0.0, %v1042
        %1044 = vmatmul.f32.gmra.mxu0 %v583
        %v1045 = vpop.f32.mrf.mxu0
        %v1046 = vadd.f32 0.0, %v1045
        %1047 = vmatmul.f32.gmra.mxu0 %v584
        %v1048 = vpop.f32.mrf.mxu0
        %v1049 = vadd.f32 0.0, %v1048
        %1050 = vmatmul.f32.gmra.mxu0 %v585
        %v1051 = vpop.f32.mrf.mxu0
        %v1052 = vadd.f32 0.0, %v1051
        %1053 = vmatmul.f32.gmra.mxu0 %v586
        %v1054 = vpop.f32.mrf.mxu0
        %v1055 = vadd.f32 0.0, %v1054
        %1056 = vmatmul.f32.gmra.mxu0 %v587
        %v1057 = vpop.f32.mrf.mxu0
        %v1058 = vadd.f32 0.0, %v1057
        %1059 = vdwg.mxu0
        %1060 = vadd.xlane.f32.xlu0 %v750
        %v1061 = vpop.xlane.xlu0 %1060
        %1062 = vadd.xlane.f32.xlu0 %v753
        %v1063 = vpop.xlane.xlu0 %1062
        %1064 = vadd.xlane.f32.xlu0 %v756
        %v1065 = vpop.xlane.xlu0 %1064
        %1066 = vadd.xlane.f32.xlu0 %v759
        %v1067 = vpop.xlane.xlu0 %1066
        %1068 = vadd.xlane.f32.xlu0 %v762
        %v1069 = vpop.xlane.xlu0 %1068
        %1070 = vadd.xlane.f32.xlu0 %v765
        %v1071 = vpop.xlane.xlu0 %1070
        %1072 = vadd.xlane.f32.xlu0 %v768
        %v1073 = vpop.xlane.xlu0 %1072
        %1074 = vadd.xlane.f32.xlu0 %v771
        %v1075 = vpop.xlane.xlu0 %1074
        %v1076 = vmul.f32 %v1061, %v443
        %v1077 = vmul.f32 %v1063, %v443
        %v1078 = vmul.f32 %v1065, %v443
        %v1079 = vmul.f32 %v1067, %v443
        %v1080 = vmul.f32 %v1069, %v443
        %v1081 = vmul.f32 %v1071, %v443
        %v1082 = vmul.f32 %v1073, %v443
        %v1083 = vmul.f32 %v1075, %v443
        %v1084 = vsub.f32 %v750, %v1076
        %v1085 = vsub.f32 %v753, %v1077
        %v1086 = vsub.f32 %v756, %v1078
        %v1087 = vsub.f32 %v759, %v1079
        %v1088 = vsub.f32 %v762, %v1080
        %v1089 = vsub.f32 %v765, %v1081
        %v1090 = vsub.f32 %v768, %v1082
        %v1091 = vsub.f32 %v771, %v1083
        %v1092 = vmul.f32 %v1084, %v1084
        %v1093 = vmul.f32 %v1085, %v1085
        %v1094 = vmul.f32 %v1086, %v1086
        %v1095 = vmul.f32 %v1087, %v1087
        %v1096 = vmul.f32 %v1088, %v1088
        %v1097 = vmul.f32 %v1089, %v1089
        %v1098 = vmul.f32 %v1090, %v1090
        %v1099 = vmul.f32 %v1091, %v1091
        %1100 = vadd.xlane.f32.xlu0 %v1092
        %v1101 = vpop.xlane.xlu0 %1100
        %1102 = vadd.xlane.f32.xlu0 %v1093
        %v1103 = vpop.xlane.xlu0 %1102
        %1104 = vadd.xlane.f32.xlu0 %v1094
        %v1105 = vpop.xlane.xlu0 %1104
        %1106 = vadd.xlane.f32.xlu0 %v1095
        %v1107 = vpop.xlane.xlu0 %1106
        %1108 = vadd.xlane.f32.xlu0 %v1096
        %v1109 = vpop.xlane.xlu0 %1108
        %1110 = vadd.xlane.f32.xlu0 %v1097
        %v1111 = vpop.xlane.xlu0 %1110
        %1112 = vadd.xlane.f32.xlu0 %v1098
        %v1113 = vpop.xlane.xlu0 %1112
        %1114 = vadd.xlane.f32.xlu0 %v1099
        %v1115 = vpop.xlane.xlu0 %1114
        %v1116 = vmul.f32 %v1101, %v443
        %v1117 = vmul.f32 %v1103, %v443
        %v1118 = vmul.f32 %v1105, %v443
        %v1119 = vmul.f32 %v1107, %v443
        %v1120 = vmul.f32 %v1109, %v443
        %v1121 = vmul.f32 %v1111, %v443
        %v1122 = vmul.f32 %v1113, %v443
        %v1123 = vmul.f32 %v1115, %v443
        %v1124 = vadd.f32 %v1116, 1e-05
        %v1125 = vadd.f32 %v1117, 1e-05
        %v1126 = vadd.f32 %v1118, 1e-05
        %v1127 = vadd.f32 %v1119, 1e-05
        %v1128 = vadd.f32 %v1120, 1e-05
        %v1129 = vadd.f32 %v1121, 1e-05
        %v1130 = vadd.f32 %v1122, 1e-05
        %v1131 = vadd.f32 %v1123, 1e-05
        %v1132 = vrsqrt.pop %v1124
        %v1133 = vmul.f32 %v1132, %v1124
        %v1134 = vmul.f32 %v1133, %v1132
        %v1135 = vmul.f32 0.5, %v1134
        %v1136 = vsub.f32 1.5, %v1135
        %v1137 = vmul.f32 %v1132, %v1136
        %vm1138 = vweird.f32 %v1124
        %vm1139 = vweird.f32 %v1132
        %vm1140 = vmor %vm1138, %vm1139
        %v1141 = vsel %vm1140, %v1132, %v1137
        %v1142 = vrsqrt.pop %v1125
        %v1143 = vmul.f32 %v1142, %v1125
        %v1144 = vmul.f32 %v1143, %v1142
        %v1145 = vmul.f32 0.5, %v1144
        %v1146 = vsub.f32 1.5, %v1145
        %v1147 = vmul.f32 %v1142, %v1146
        %vm1148 = vweird.f32 %v1125
        %vm1149 = vweird.f32 %v1142
        %vm1150 = vmor %vm1148, %vm1149
        %v1151 = vsel %vm1150, %v1142, %v1147
        %v1152 = vrsqrt.pop %v1126
        %v1153 = vmul.f32 %v1152, %v1126
        %v1154 = vmul.f32 %v1153, %v1152
        %v1155 = vmul.f32 0.5, %v1154
        %v1156 = vsub.f32 1.5, %v1155
        %v1157 = vmul.f32 %v1152, %v1156
        %vm1158 = vweird.f32 %v1126
        %vm1159 = vweird.f32 %v1152
        %vm1160 = vmor %vm1158, %vm1159
        %v1161 = vsel %vm1160, %v1152, %v1157
        %v1162 = vrsqrt.pop %v1127
        %v1163 = vmul.f32 %v1162, %v1127
        %v1164 = vmul.f32 %v1163, %v1162
        %v1165 = vmul.f32 0.5, %v1164
        %v1166 = vsub.f32 1.5, %v1165
        %v1167 = vmul.f32 %v1162, %v1166
        %vm1168 = vweird.f32 %v1127
        %vm1169 = vweird.f32 %v1162
        %vm1170 = vmor %vm1168, %vm1169
        %v1171 = vsel %vm1170, %v1162, %v1167
        %v1172 = vrsqrt.pop %v1128
        %v1173 = vmul.f32 %v1172, %v1128
        %v1174 = vmul.f32 %v1173, %v1172
        %v1175 = vmul.f32 0.5, %v1174
        %v1176 = vsub.f32 1.5, %v1175
        %v1177 = vmul.f32 %v1172, %v1176
        %vm1178 = vweird.f32 %v1128
        %vm1179 = vweird.f32 %v1172
        %vm1180 = vmor %vm1178, %vm1179
        %v1181 = vsel %vm1180, %v1172, %v1177
        %v1182 = vrsqrt.pop %v1129
        %v1183 = vmul.f32 %v1182, %v1129
        %v1184 = vmul.f32 %v1183, %v1182
        %v1185 = vmul.f32 0.5, %v1184
        %v1186 = vsub.f32 1.5, %v1185
        %v1187 = vmul.f32 %v1182, %v1186
        %vm1188 = vweird.f32 %v1129
        %vm1189 = vweird.f32 %v1182
        %vm1190 = vmor %vm1188, %vm1189
        %v1191 = vsel %vm1190, %v1182, %v1187
        %v1192 = vrsqrt.pop %v1130
        %v1193 = vmul.f32 %v1192, %v1130
        %v1194 = vmul.f32 %v1193, %v1192
        %v1195 = vmul.f32 0.5, %v1194
        %v1196 = vsub.f32 1.5, %v1195
        %v1197 = vmul.f32 %v1192, %v1196
        %vm1198 = vweird.f32 %v1130
        %vm1199 = vweird.f32 %v1192
        %vm1200 = vmor %vm1198, %vm1199
        %v1201 = vsel %vm1200, %v1192, %v1197
        %v1202 = vrsqrt.pop %v1131
        %v1203 = vmul.f32 %v1202, %v1131
        %v1204 = vmul.f32 %v1203, %v1202
        %v1205 = vmul.f32 0.5, %v1204
        %v1206 = vsub.f32 1.5, %v1205
        %v1207 = vmul.f32 %v1202, %v1206
        %vm1208 = vweird.f32 %v1131
        %vm1209 = vweird.f32 %v1202
        %vm1210 = vmor %vm1208, %vm1209
        %v1211 = vsel %vm1210, %v1202, %v1207
        %v1212 = vmul.f32 %v1084, %v1141
        %v1213 = vmul.f32 %v1085, %v1151
        %v1214 = vmul.f32 %v1086, %v1161
        %v1215 = vmul.f32 %v1087, %v1171
        %v1216 = vmul.f32 %v1088, %v1181
        %v1217 = vmul.f32 %v1089, %v1191
        %v1218 = vmul.f32 %v1090, %v1201
        %v1219 = vmul.f32 %v1091, %v1211
        %v1220 = vmul.f32 %v1212, %v588
        %v1221 = vmul.f32 %v1213, %v589
        %v1222 = vmul.f32 %v1214, %v590
        %v1223 = vmul.f32 %v1215, %v591
        %v1224 = vmul.f32 %v1216, %v592
        %v1225 = vmul.f32 %v1217, %v593
        %v1226 = vmul.f32 %v1218, %v594
        %v1227 = vmul.f32 %v1219, %v595
        %1228 = vrot.lane.b32.xlu0 %v1212, 64
        %v1229 = vpop.permute.xlu0 %1228
        %1230 = vrot.lane.b32.xlu0 %v1213, 64
        %v1231 = vpop.permute.xlu0 %1230
        %1232 = vrot.lane.b32.xlu0 %v1214, 64
        %v1233 = vpop.permute.xlu0 %1232
        %1234 = vrot.lane.b32.xlu0 %v1215, 64
        %v1235 = vpop.permute.xlu0 %1234
        %1236 = vrot.lane.b32.xlu0 %v1216, 64
        %v1237 = vpop.permute.xlu0 %1236
        %1238 = vrot.lane.b32.xlu0 %v1217, 64
        %v1239 = vpop.permute.xlu0 %1238
        %1240 = vrot.lane.b32.xlu0 %v1218, 64
        %v1241 = vpop.permute.xlu0 %1240
        %1242 = vrot.lane.b32.xlu0 %v1219, 64
        %v1243 = vpop.permute.xlu0 %1242
        %v1244 = vmul.f32 %v1229, %v596
        %v1245 = vmul.f32 %v1231, %v597
        %v1246 = vmul.f32 %v1233, %v598
        %v1247 = vmul.f32 %v1235, %v599
        %v1248 = vmul.f32 %v1237, %v600
        %v1249 = vmul.f32 %v1239, %v601
        %v1250 = vmul.f32 %v1241, %v602
        %v1251 = vmul.f32 %v1243, %v603
        %v1252 = vadd.f32 %v1220, %v1244
        %v1253 = vadd.f32 %v1221, %v1245
        %v1254 = vadd.f32 %v1222, %v1246
        %v1255 = vadd.f32 %v1223, %v1247
        %v1256 = vadd.f32 %v1224, %v1248
        %v1257 = vadd.f32 %v1225, %v1249
        %v1258 = vadd.f32 %v1226, %v1250
        %v1259 = vadd.f32 %v1227, %v1251
        %v1260 = vmul.f32 %v1252, 0.088388346
        %v1261 = vmul.f32 %v1253, 0.088388346
        %v1262 = vmul.f32 %v1254, 0.088388346
        %v1263 = vmul.f32 %v1255, 0.088388346
        %v1264 = vmul.f32 %v1256, 0.088388346
        %v1265 = vmul.f32 %v1257, 0.088388346
        %v1266 = vmul.f32 %v1258, 0.088388346
        %v1267 = vmul.f32 %v1259, 0.088388346
        %1268 = vst [vmem:[%s392] sm:$0xff] %v1260
        %1269 = vst [vmem:[%s392 + $0x8] sm:$0xff] %v1261
        %1270 = vst [vmem:[%s392 + $0x10] sm:$0xff] %v1262
        %1271 = vst [vmem:[%s392 + $0x18] sm:$0xff] %v1263
        %1272 = vst [vmem:[%s392 + $0x20] sm:$0xff] %v1264
        %1273 = vst [vmem:[%s392 + $0x28] sm:$0xff] %v1265
        %1274 = vst [vmem:[%s392 + $0x30] sm:$0xff] %v1266
        %1275 = vst [vmem:[%s392 + $0x38] sm:$0xff] %v1267
        %1276 = vadd.xlane.f32.xlu0 %v791
        %v1277 = vpop.xlane.xlu0 %1276
        %1278 = vadd.xlane.f32.xlu0 %v794
        %v1279 = vpop.xlane.xlu0 %1278
        %1280 = vadd.xlane.f32.xlu0 %v797
        %v1281 = vpop.xlane.xlu0 %1280
        %1282 = vadd.xlane.f32.xlu0 %v800
        %v1283 = vpop.xlane.xlu0 %1282
        %1284 = vadd.xlane.f32.xlu0 %v803
        %v1285 = vpop.xlane.xlu0 %1284
        %1286 = vadd.xlane.f32.xlu0 %v806
        %v1287 = vpop.xlane.xlu0 %1286
        %1288 = vadd.xlane.f32.xlu0 %v809
        %v1289 = vpop.xlane.xlu0 %1288
        %1290 = vadd.xlane.f32.xlu0 %v812
        %v1291 = vpop.xlane.xlu0 %1290
        %v1292 = vmul.f32 %v1277, %v443
        %v1293 = vmul.f32 %v1279, %v443
        %v1294 = vmul.f32 %v1281, %v443
        %v1295 = vmul.f32 %v1283, %v443
        %v1296 = vmul.f32 %v1285, %v443
        %v1297 = vmul.f32 %v1287, %v443
        %v1298 = vmul.f32 %v1289, %v443
        %v1299 = vmul.f32 %v1291, %v443
        %v1300 = vsub.f32 %v791, %v1292
        %v1301 = vsub.f32 %v794, %v1293
        %v1302 = vsub.f32 %v797, %v1294
        %v1303 = vsub.f32 %v800, %v1295
        %v1304 = vsub.f32 %v803, %v1296
        %v1305 = vsub.f32 %v806, %v1297
        %v1306 = vsub.f32 %v809, %v1298
        %v1307 = vsub.f32 %v812, %v1299
        %v1308 = vmul.f32 %v1300, %v1300
        %v1309 = vmul.f32 %v1301, %v1301
        %v1310 = vmul.f32 %v1302, %v1302
        %v1311 = vmul.f32 %v1303, %v1303
        %v1312 = vmul.f32 %v1304, %v1304
        %v1313 = vmul.f32 %v1305, %v1305
        %v1314 = vmul.f32 %v1306, %v1306
        %v1315 = vmul.f32 %v1307, %v1307
        %1316 = vadd.xlane.f32.xlu0 %v1308
        %v1317 = vpop.xlane.xlu0 %1316
        %1318 = vadd.xlane.f32.xlu0 %v1309
        %v1319 = vpop.xlane.xlu0 %1318
        %1320 = vadd.xlane.f32.xlu0 %v1310
        %v1321 = vpop.xlane.xlu0 %1320
        %1322 = vadd.xlane.f32.xlu0 %v1311
        %v1323 = vpop.xlane.xlu0 %1322
        %1324 = vadd.xlane.f32.xlu0 %v1312
        %v1325 = vpop.xlane.xlu0 %1324
        %1326 = vadd.xlane.f32.xlu0 %v1313
        %v1327 = vpop.xlane.xlu0 %1326
        %1328 = vadd.xlane.f32.xlu0 %v1314
        %v1329 = vpop.xlane.xlu0 %1328
        %1330 = vadd.xlane.f32.xlu0 %v1315
        %v1331 = vpop.xlane.xlu0 %1330
        %v1332 = vmul.f32 %v1317, %v443
        %v1333 = vmul.f32 %v1319, %v443
        %v1334 = vmul.f32 %v1321, %v443
        %v1335 = vmul.f32 %v1323, %v443
        %v1336 = vmul.f32 %v1325, %v443
        %v1337 = vmul.f32 %v1327, %v443
        %v1338 = vmul.f32 %v1329, %v443
        %v1339 = vmul.f32 %v1331, %v443
        %v1340 = vadd.f32 %v1332, 1e-05
        %v1341 = vadd.f32 %v1333, 1e-05
        %v1342 = vadd.f32 %v1334, 1e-05
        %v1343 = vadd.f32 %v1335, 1e-05
        %v1344 = vadd.f32 %v1336, 1e-05
        %v1345 = vadd.f32 %v1337, 1e-05
        %v1346 = vadd.f32 %v1338, 1e-05
        %v1347 = vadd.f32 %v1339, 1e-05
        %v1348 = vrsqrt.pop %v1340
        %v1349 = vmul.f32 %v1348, %v1340
        %v1350 = vmul.f32 %v1349, %v1348
        %v1351 = vmul.f32 0.5, %v1350
        %v1352 = vsub.f32 1.5, %v1351
        %v1353 = vmul.f32 %v1348, %v1352
        %vm1354 = vweird.f32 %v1340
        %vm1355 = vweird.f32 %v1348
        %vm1356 = vmor %vm1354, %vm1355
        %v1357 = vsel %vm1356, %v1348, %v1353
        %v1358 = vrsqrt.pop %v1341
        %v1359 = vmul.f32 %v1358, %v1341
        %v1360 = vmul.f32 %v1359, %v1358
        %v1361 = vmul.f32 0.5, %v1360
        %v1362 = vsub.f32 1.5, %v1361
        %v1363 = vmul.f32 %v1358, %v1362
        %vm1364 = vweird.f32 %v1341
        %vm1365 = vweird.f32 %v1358
        %vm1366 = vmor %vm1364, %vm1365
        %v1367 = vsel %vm1366, %v1358, %v1363
        %v1368 = vrsqrt.pop %v1342
        %v1369 = vmul.f32 %v1368, %v1342
        %v1370 = vmul.f32 %v1369, %v1368
        %v1371 = vmul.f32 0.5, %v1370
        %v1372 = vsub.f32 1.5, %v1371
        %v1373 = vmul.f32 %v1368, %v1372
        %vm1374 = vweird.f32 %v1342
        %vm1375 = vweird.f32 %v1368
        %vm1376 = vmor %vm1374, %vm1375
        %v1377 = vsel %vm1376, %v1368, %v1373
        %v1378 = vrsqrt.pop %v1343
        %v1379 = vmul.f32 %v1378, %v1343
        %v1380 = vmul.f32 %v1379, %v1378
        %v1381 = vmul.f32 0.5, %v1380
        %v1382 = vsub.f32 1.5, %v1381
        %v1383 = vmul.f32 %v1378, %v1382
        %vm1384 = vweird.f32 %v1343
        %vm1385 = vweird.f32 %v1378
        %vm1386 = vmor %vm1384, %vm1385
        %v1387 = vsel %vm1386, %v1378, %v1383
        %v1388 = vrsqrt.pop %v1344
        %v1389 = vmul.f32 %v1388, %v1344
        %v1390 = vmul.f32 %v1389, %v1388
        %v1391 = vmul.f32 0.5, %v1390
        %v1392 = vsub.f32 1.5, %v1391
        %v1393 = vmul.f32 %v1388, %v1392
        %vm1394 = vweird.f32 %v1344
        %vm1395 = vweird.f32 %v1388
        %vm1396 = vmor %vm1394, %vm1395
        %v1397 = vsel %vm1396, %v1388, %v1393
        %v1398 = vrsqrt.pop %v1345
        %v1399 = vmul.f32 %v1398, %v1345
        %v1400 = vmul.f32 %v1399, %v1398
        %v1401 = vmul.f32 0.5, %v1400
        %v1402 = vsub.f32 1.5, %v1401
        %v1403 = vmul.f32 %v1398, %v1402
        %vm1404 = vweird.f32 %v1345
        %vm1405 = vweird.f32 %v1398
        %vm1406 = vmor %vm1404, %vm1405
        %v1407 = vsel %vm1406, %v1398, %v1403
        %v1408 = vrsqrt.pop %v1346
        %v1409 = vmul.f32 %v1408, %v1346
        %v1410 = vmul.f32 %v1409, %v1408
        %v1411 = vmul.f32 0.5, %v1410
        %v1412 = vsub.f32 1.5, %v1411
        %v1413 = vmul.f32 %v1408, %v1412
        %vm1414 = vweird.f32 %v1346
        %vm1415 = vweird.f32 %v1408
        %vm1416 = vmor %vm1414, %vm1415
        %v1417 = vsel %vm1416, %v1408, %v1413
        %v1418 = vrsqrt.pop %v1347
        %v1419 = vmul.f32 %v1418, %v1347
        %v1420 = vmul.f32 %v1419, %v1418
        %v1421 = vmul.f32 0.5, %v1420
        %v1422 = vsub.f32 1.5, %v1421
        %v1423 = vmul.f32 %v1418, %v1422
        %vm1424 = vweird.f32 %v1347
        %vm1425 = vweird.f32 %v1418
        %vm1426 = vmor %vm1424, %vm1425
        %v1427 = vsel %vm1426, %v1418, %v1423
        %v1428 = vmul.f32 %v1300, %v1357
        %v1429 = vmul.f32 %v1301, %v1367
        %v1430 = vmul.f32 %v1302, %v1377
        %v1431 = vmul.f32 %v1303, %v1387
        %v1432 = vmul.f32 %v1304, %v1397
        %v1433 = vmul.f32 %v1305, %v1407
        %v1434 = vmul.f32 %v1306, %v1417
        %v1435 = vmul.f32 %v1307, %v1427
        %v1436 = vmul.f32 %v1428, %v588
        %v1437 = vmul.f32 %v1429, %v589
        %v1438 = vmul.f32 %v1430, %v590
        %v1439 = vmul.f32 %v1431, %v591
        %v1440 = vmul.f32 %v1432, %v592
        %v1441 = vmul.f32 %v1433, %v593
        %v1442 = vmul.f32 %v1434, %v594
        %v1443 = vmul.f32 %v1435, %v595
        %1444 = vrot.lane.b32.xlu0 %v1428, 64
        %v1445 = vpop.permute.xlu0 %1444
        %1446 = vrot.lane.b32.xlu0 %v1429, 64
        %v1447 = vpop.permute.xlu0 %1446
        %1448 = vrot.lane.b32.xlu0 %v1430, 64
        %v1449 = vpop.permute.xlu0 %1448
        %1450 = vrot.lane.b32.xlu0 %v1431, 64
        %v1451 = vpop.permute.xlu0 %1450
        %1452 = vrot.lane.b32.xlu0 %v1432, 64
        %v1453 = vpop.permute.xlu0 %1452
        %1454 = vrot.lane.b32.xlu0 %v1433, 64
        %v1455 = vpop.permute.xlu0 %1454
        %1456 = vrot.lane.b32.xlu0 %v1434, 64
        %v1457 = vpop.permute.xlu0 %1456
        %1458 = vrot.lane.b32.xlu0 %v1435, 64
        %v1459 = vpop.permute.xlu0 %1458
        %v1460 = vmul.f32 %v1445, %v596
        %v1461 = vmul.f32 %v1447, %v597
        %v1462 = vmul.f32 %v1449, %v598
        %v1463 = vmul.f32 %v1451, %v599
        %v1464 = vmul.f32 %v1453, %v600
        %v1465 = vmul.f32 %v1455, %v601
        %v1466 = vmul.f32 %v1457, %v602
        %v1467 = vmul.f32 %v1459, %v603
        %v1468 = vadd.f32 %v1436, %v1460
        %v1469 = vadd.f32 %v1437, %v1461
        %v1470 = vadd.f32 %v1438, %v1462
        %v1471 = vadd.f32 %v1439, %v1463
        %v1472 = vadd.f32 %v1440, %v1464
        %v1473 = vadd.f32 %v1441, %v1465
        %v1474 = vadd.f32 %v1442, %v1466
        %v1475 = vadd.f32 %v1443, %v1467
        %v1476 = vmul.f32 %v1468, 0.088388346
        %v1477 = vmul.f32 %v1469, 0.088388346
        %v1478 = vmul.f32 %v1470, 0.088388346
        %v1479 = vmul.f32 %v1471, 0.088388346
        %v1480 = vmul.f32 %v1472, 0.088388346
        %v1481 = vmul.f32 %v1473, 0.088388346
        %v1482 = vmul.f32 %v1474, 0.088388346
        %v1483 = vmul.f32 %v1475, 0.088388346
        %s1484 = scalar_lea.vmem %s392, 64 [#allocation9]
        %1485 = vst [vmem:[%s1484] sm:$0xff] %v1476
        %1486 = vst [vmem:[%s1484 + $0x8] sm:$0xff] %v1477
        %1487 = vst [vmem:[%s1484 + $0x10] sm:$0xff] %v1478
        %1488 = vst [vmem:[%s1484 + $0x18] sm:$0xff] %v1479
        %1489 = vst [vmem:[%s1484 + $0x20] sm:$0xff] %v1480
        %1490 = vst [vmem:[%s1484 + $0x28] sm:$0xff] %v1481
        %1491 = vst [vmem:[%s1484 + $0x30] sm:$0xff] %v1482
        %1492 = vst [vmem:[%s1484 + $0x38] sm:$0xff] %v1483
        %1493 = vadd.xlane.f32.xlu0 %v832
        %v1494 = vpop.xlane.xlu0 %1493
        %1495 = vadd.xlane.f32.xlu0 %v835
        %v1496 = vpop.xlane.xlu0 %1495
        %1497 = vadd.xlane.f32.xlu0 %v838
        %v1498 = vpop.xlane.xlu0 %1497
        %1499 = vadd.xlane.f32.xlu0 %v841
        %v1500 = vpop.xlane.xlu0 %1499
        %1501 = vadd.xlane.f32.xlu0 %v844
        %v1502 = vpop.xlane.xlu0 %1501
        %1503 = vadd.xlane.f32.xlu0 %v847
        %v1504 = vpop.xlane.xlu0 %1503
        %1505 = vadd.xlane.f32.xlu0 %v850
        %v1506 = vpop.xlane.xlu0 %1505
        %1507 = vadd.xlane.f32.xlu0 %v853
        %v1508 = vpop.xlane.xlu0 %1507
        %v1509 = vmul.f32 %v1494, %v443
        %v1510 = vmul.f32 %v1496, %v443
        %v1511 = vmul.f32 %v1498, %v443
        %v1512 = vmul.f32 %v1500, %v443
        %v1513 = vmul.f32 %v1502, %v443
        %v1514 = vmul.f32 %v1504, %v443
        %v1515 = vmul.f32 %v1506, %v443
        %v1516 = vmul.f32 %v1508, %v443
        %v1517 = vsub.f32 %v832, %v1509
        %v1518 = vsub.f32 %v835, %v1510
        %v1519 = vsub.f32 %v838, %v1511
        %v1520 = vsub.f32 %v841, %v1512
        %v1521 = vsub.f32 %v844, %v1513
        %v1522 = vsub.f32 %v847, %v1514
        %v1523 = vsub.f32 %v850, %v1515
        %v1524 = vsub.f32 %v853, %v1516
        %v1525 = vmul.f32 %v1517, %v1517
        %v1526 = vmul.f32 %v1518, %v1518
        %v1527 = vmul.f32 %v1519, %v1519
        %v1528 = vmul.f32 %v1520, %v1520
        %v1529 = vmul.f32 %v1521, %v1521
        %v1530 = vmul.f32 %v1522, %v1522
        %v1531 = vmul.f32 %v1523, %v1523
        %v1532 = vmul.f32 %v1524, %v1524
        %1533 = vadd.xlane.f32.xlu0 %v1525
        %v1534 = vpop.xlane.xlu0 %1533
        %1535 = vadd.xlane.f32.xlu0 %v1526
        %v1536 = vpop.xlane.xlu0 %1535
        %1537 = vadd.xlane.f32.xlu0 %v1527
        %v1538 = vpop.xlane.xlu0 %1537
        %1539 = vadd.xlane.f32.xlu0 %v1528
        %v1540 = vpop.xlane.xlu0 %1539
        %1541 = vadd.xlane.f32.xlu0 %v1529
        %v1542 = vpop.xlane.xlu0 %1541
        %1543 = vadd.xlane.f32.xlu0 %v1530
        %v1544 = vpop.xlane.xlu0 %1543
        %1545 = vadd.xlane.f32.xlu0 %v1531
        %v1546 = vpop.xlane.xlu0 %1545
        %1547 = vadd.xlane.f32.xlu0 %v1532
        %v1548 = vpop.xlane.xlu0 %1547
        %v1549 = vmul.f32 %v1534, %v443
        %v1550 = vmul.f32 %v1536, %v443
        %v1551 = vmul.f32 %v1538, %v443
        %v1552 = vmul.f32 %v1540, %v443
        %v1553 = vmul.f32 %v1542, %v443
        %v1554 = vmul.f32 %v1544, %v443
        %v1555 = vmul.f32 %v1546, %v443
        %v1556 = vmul.f32 %v1548, %v443
        %v1557 = vadd.f32 %v1549, 1e-05
        %v1558 = vadd.f32 %v1550, 1e-05
        %v1559 = vadd.f32 %v1551, 1e-05
        %v1560 = vadd.f32 %v1552, 1e-05
        %v1561 = vadd.f32 %v1553, 1e-05
        %v1562 = vadd.f32 %v1554, 1e-05
        %v1563 = vadd.f32 %v1555, 1e-05
        %v1564 = vadd.f32 %v1556, 1e-05
        %v1565 = vrsqrt.pop %v1557
        %v1566 = vmul.f32 %v1565, %v1557
        %v1567 = vmul.f32 %v1566, %v1565
        %v1568 = vmul.f32 0.5, %v1567
        %v1569 = vsub.f32 1.5, %v1568
        %v1570 = vmul.f32 %v1565, %v1569
        %vm1571 = vweird.f32 %v1557
        %vm1572 = vweird.f32 %v1565
        %vm1573 = vmor %vm1571, %vm1572
        %v1574 = vsel %vm1573, %v1565, %v1570
        %v1575 = vrsqrt.pop %v1558
        %v1576 = vmul.f32 %v1575, %v1558
        %v1577 = vmul.f32 %v1576, %v1575
        %v1578 = vmul.f32 0.5, %v1577
        %v1579 = vsub.f32 1.5, %v1578
        %v1580 = vmul.f32 %v1575, %v1579
        %vm1581 = vweird.f32 %v1558
        %vm1582 = vweird.f32 %v1575
        %vm1583 = vmor %vm1581, %vm1582
        %v1584 = vsel %vm1583, %v1575, %v1580
        %v1585 = vrsqrt.pop %v1559
        %v1586 = vmul.f32 %v1585, %v1559
        %v1587 = vmul.f32 %v1586, %v1585
        %v1588 = vmul.f32 0.5, %v1587
        %v1589 = vsub.f32 1.5, %v1588
        %v1590 = vmul.f32 %v1585, %v1589
        %vm1591 = vweird.f32 %v1559
        %vm1592 = vweird.f32 %v1585
        %vm1593 = vmor %vm1591, %vm1592
        %v1594 = vsel %vm1593, %v1585, %v1590
        %v1595 = vrsqrt.pop %v1560
        %v1596 = vmul.f32 %v1595, %v1560
        %v1597 = vmul.f32 %v1596, %v1595
        %v1598 = vmul.f32 0.5, %v1597
        %v1599 = vsub.f32 1.5, %v1598
        %v1600 = vmul.f32 %v1595, %v1599
        %vm1601 = vweird.f32 %v1560
        %vm1602 = vweird.f32 %v1595
        %vm1603 = vmor %vm1601, %vm1602
        %v1604 = vsel %vm1603, %v1595, %v1600
        %v1605 = vrsqrt.pop %v1561
        %v1606 = vmul.f32 %v1605, %v1561
        %v1607 = vmul.f32 %v1606, %v1605
        %v1608 = vmul.f32 0.5, %v1607
        %v1609 = vsub.f32 1.5, %v1608
        %v1610 = vmul.f32 %v1605, %v1609
        %vm1611 = vweird.f32 %v1561
        %vm1612 = vweird.f32 %v1605
        %vm1613 = vmor %vm1611, %vm1612
        %v1614 = vsel %vm1613, %v1605, %v1610
        %v1615 = vrsqrt.pop %v1562
        %v1616 = vmul.f32 %v1615, %v1562
        %v1617 = vmul.f32 %v1616, %v1615
        %v1618 = vmul.f32 0.5, %v1617
        %v1619 = vsub.f32 1.5, %v1618
        %v1620 = vmul.f32 %v1615, %v1619
        %vm1621 = vweird.f32 %v1562
        %vm1622 = vweird.f32 %v1615
        %vm1623 = vmor %vm1621, %vm1622
        %v1624 = vsel %vm1623, %v1615, %v1620
        %v1625 = vrsqrt.pop %v1563
        %v1626 = vmul.f32 %v1625, %v1563
        %v1627 = vmul.f32 %v1626, %v1625
        %v1628 = vmul.f32 0.5, %v1627
        %v1629 = vsub.f32 1.5, %v1628
        %v1630 = vmul.f32 %v1625, %v1629
        %vm1631 = vweird.f32 %v1563
        %vm1632 = vweird.f32 %v1625
        %vm1633 = vmor %vm1631, %vm1632
        %v1634 = vsel %vm1633, %v1625, %v1630
        %v1635 = vrsqrt.pop %v1564
        %v1636 = vmul.f32 %v1635, %v1564
        %v1637 = vmul.f32 %v1636, %v1635
        %v1638 = vmul.f32 0.5, %v1637
        %v1639 = vsub.f32 1.5, %v1638
        %v1640 = vmul.f32 %v1635, %v1639
        %vm1641 = vweird.f32 %v1564
        %vm1642 = vweird.f32 %v1635
        %vm1643 = vmor %vm1641, %vm1642
        %v1644 = vsel %vm1643, %v1635, %v1640
        %v1645 = vmul.f32 %v1517, %v1574
        %v1646 = vmul.f32 %v1518, %v1584
        %v1647 = vmul.f32 %v1519, %v1594
        %v1648 = vmul.f32 %v1520, %v1604
        %v1649 = vmul.f32 %v1521, %v1614
        %v1650 = vmul.f32 %v1522, %v1624
        %v1651 = vmul.f32 %v1523, %v1634
        %v1652 = vmul.f32 %v1524, %v1644
        %v1653 = vmul.f32 %v1645, %v588
        %v1654 = vmul.f32 %v1646, %v589
        %v1655 = vmul.f32 %v1647, %v590
        %v1656 = vmul.f32 %v1648, %v591
        %v1657 = vmul.f32 %v1649, %v592
        %v1658 = vmul.f32 %v1650, %v593
        %v1659 = vmul.f32 %v1651, %v594
        %v1660 = vmul.f32 %v1652, %v595
        %1661 = vrot.lane.b32.xlu0 %v1645, 64
        %v1662 = vpop.permute.xlu0 %1661
        %1663 = vrot.lane.b32.xlu0 %v1646, 64
        %v1664 = vpop.permute.xlu0 %1663
        %1665 = vrot.lane.b32.xlu0 %v1647, 64
        %v1666 = vpop.permute.xlu0 %1665
        %1667 = vrot.lane.b32.xlu0 %v1648, 64
        %v1668 = vpop.permute.xlu0 %1667
        %1669 = vrot.lane.b32.xlu0 %v1649, 64
        %v1670 = vpop.permute.xlu0 %1669
        %1671 = vrot.lane.b32.xlu0 %v1650, 64
        %v1672 = vpop.permute.xlu0 %1671
        %1673 = vrot.lane.b32.xlu0 %v1651, 64
        %v1674 = vpop.permute.xlu0 %1673
        %1675 = vrot.lane.b32.xlu0 %v1652, 64
        %v1676 = vpop.permute.xlu0 %1675
        %v1677 = vmul.f32 %v1662, %v596
        %v1678 = vmul.f32 %v1664, %v597
        %v1679 = vmul.f32 %v1666, %v598
        %v1680 = vmul.f32 %v1668, %v599
        %v1681 = vmul.f32 %v1670, %v600
        %v1682 = vmul.f32 %v1672, %v601
        %v1683 = vmul.f32 %v1674, %v602
        %v1684 = vmul.f32 %v1676, %v603
        %v1685 = vadd.f32 %v1653, %v1677
        %v1686 = vadd.f32 %v1654, %v1678
        %v1687 = vadd.f32 %v1655, %v1679
        %v1688 = vadd.f32 %v1656, %v1680
        %v1689 = vadd.f32 %v1657, %v1681
        %v1690 = vadd.f32 %v1658, %v1682
        %v1691 = vadd.f32 %v1659, %v1683
        %v1692 = vadd.f32 %v1660, %v1684
        %v1693 = vmul.f32 %v1685, 0.088388346
        %v1694 = vmul.f32 %v1686, 0.088388346
        %v1695 = vmul.f32 %v1687, 0.088388346
        %v1696 = vmul.f32 %v1688, 0.088388346
        %v1697 = vmul.f32 %v1689, 0.088388346
        %v1698 = vmul.f32 %v1690, 0.088388346
        %v1699 = vmul.f32 %v1691, 0.088388346
        %v1700 = vmul.f32 %v1692, 0.088388346
        %s1701 = scalar_lea.vmem %s392, 128 [#allocation9]
        %1702 = vst [vmem:[%s1701] sm:$0xff] %v1693
        %1703 = vst [vmem:[%s1701 + $0x8] sm:$0xff] %v1694
        %1704 = vst [vmem:[%s1701 + $0x10] sm:$0xff] %v1695
        %1705 = vst [vmem:[%s1701 + $0x18] sm:$0xff] %v1696
        %1706 = vst [vmem:[%s1701 + $0x20] sm:$0xff] %v1697
        %1707 = vst [vmem:[%s1701 + $0x28] sm:$0xff] %v1698
        %1708 = vst [vmem:[%s1701 + $0x30] sm:$0xff] %v1699
        %1709 = vst [vmem:[%s1701 + $0x38] sm:$0xff] %v1700
        %1710 = vadd.xlane.f32.xlu0 %v873
        %v1711 = vpop.xlane.xlu0 %1710
        %1712 = vadd.xlane.f32.xlu0 %v876
        %v1713 = vpop.xlane.xlu0 %1712
        %1714 = vadd.xlane.f32.xlu0 %v879
        %v1715 = vpop.xlane.xlu0 %1714
        %1716 = vadd.xlane.f32.xlu0 %v882
        %v1717 = vpop.xlane.xlu0 %1716
        %1718 = vadd.xlane.f32.xlu0 %v885
        %v1719 = vpop.xlane.xlu0 %1718
        %1720 = vadd.xlane.f32.xlu0 %v888
        %v1721 = vpop.xlane.xlu0 %1720
        %1722 = vadd.xlane.f32.xlu0 %v891
        %v1723 = vpop.xlane.xlu0 %1722
        %1724 = vadd.xlane.f32.xlu0 %v894
        %v1725 = vpop.xlane.xlu0 %1724
        %v1726 = vmul.f32 %v1711, %v443
        %v1727 = vmul.f32 %v1713, %v443
        %v1728 = vmul.f32 %v1715, %v443
        %v1729 = vmul.f32 %v1717, %v443
        %v1730 = vmul.f32 %v1719, %v443
        %v1731 = vmul.f32 %v1721, %v443
        %v1732 = vmul.f32 %v1723, %v443
        %v1733 = vmul.f32 %v1725, %v443
        %v1734 = vsub.f32 %v873, %v1726
        %v1735 = vsub.f32 %v876, %v1727
        %v1736 = vsub.f32 %v879, %v1728
        %v1737 = vsub.f32 %v882, %v1729
        %v1738 = vsub.f32 %v885, %v1730
        %v1739 = vsub.f32 %v888, %v1731
        %v1740 = vsub.f32 %v891, %v1732
        %v1741 = vsub.f32 %v894, %v1733
        %v1742 = vmul.f32 %v1734, %v1734
        %v1743 = vmul.f32 %v1735, %v1735
        %v1744 = vmul.f32 %v1736, %v1736
        %v1745 = vmul.f32 %v1737, %v1737
        %v1746 = vmul.f32 %v1738, %v1738
        %v1747 = vmul.f32 %v1739, %v1739
        %v1748 = vmul.f32 %v1740, %v1740
        %v1749 = vmul.f32 %v1741, %v1741
        %1750 = vadd.xlane.f32.xlu0 %v1742
        %v1751 = vpop.xlane.xlu0 %1750
        %1752 = vadd.xlane.f32.xlu0 %v1743
        %v1753 = vpop.xlane.xlu0 %1752
        %1754 = vadd.xlane.f32.xlu0 %v1744
        %v1755 = vpop.xlane.xlu0 %1754
        %1756 = vadd.xlane.f32.xlu0 %v1745
        %v1757 = vpop.xlane.xlu0 %1756
        %1758 = vadd.xlane.f32.xlu0 %v1746
        %v1759 = vpop.xlane.xlu0 %1758
        %1760 = vadd.xlane.f32.xlu0 %v1747
        %v1761 = vpop.xlane.xlu0 %1760
        %1762 = vadd.xlane.f32.xlu0 %v1748
        %v1763 = vpop.xlane.xlu0 %1762
        %1764 = vadd.xlane.f32.xlu0 %v1749
        %v1765 = vpop.xlane.xlu0 %1764
        %v1766 = vmul.f32 %v1751, %v443
        %v1767 = vmul.f32 %v1753, %v443
        %v1768 = vmul.f32 %v1755, %v443
        %v1769 = vmul.f32 %v1757, %v443
        %v1770 = vmul.f32 %v1759, %v443
        %v1771 = vmul.f32 %v1761, %v443
        %v1772 = vmul.f32 %v1763, %v443
        %v1773 = vmul.f32 %v1765, %v443
        %v1774 = vadd.f32 %v1766, 1e-05
        %v1775 = vadd.f32 %v1767, 1e-05
        %v1776 = vadd.f32 %v1768, 1e-05
        %v1777 = vadd.f32 %v1769, 1e-05
        %v1778 = vadd.f32 %v1770, 1e-05
        %v1779 = vadd.f32 %v1771, 1e-05
        %v1780 = vadd.f32 %v1772, 1e-05
        %v1781 = vadd.f32 %v1773, 1e-05
        %v1782 = vrsqrt.pop %v1774
        %v1783 = vmul.f32 %v1782, %v1774
        %v1784 = vmul.f32 %v1783, %v1782
        %v1785 = vmul.f32 0.5, %v1784
        %v1786 = vsub.f32 1.5, %v1785
        %v1787 = vmul.f32 %v1782, %v1786
        %vm1788 = vweird.f32 %v1774
        %vm1789 = vweird.f32 %v1782
        %vm1790 = vmor %vm1788, %vm1789
        %v1791 = vsel %vm1790, %v1782, %v1787
        %v1792 = vrsqrt.pop %v1775
        %v1793 = vmul.f32 %v1792, %v1775
        %v1794 = vmul.f32 %v1793, %v1792
        %v1795 = vmul.f32 0.5, %v1794
        %v1796 = vsub.f32 1.5, %v1795
        %v1797 = vmul.f32 %v1792, %v1796
        %vm1798 = vweird.f32 %v1775
        %vm1799 = vweird.f32 %v1792
        %vm1800 = vmor %vm1798, %vm1799
        %v1801 = vsel %vm1800, %v1792, %v1797
        %v1802 = vrsqrt.pop %v1776
        %v1803 = vmul.f32 %v1802, %v1776
        %v1804 = vmul.f32 %v1803, %v1802
        %v1805 = vmul.f32 0.5, %v1804
        %v1806 = vsub.f32 1.5, %v1805
        %v1807 = vmul.f32 %v1802, %v1806
        %vm1808 = vweird.f32 %v1776
        %vm1809 = vweird.f32 %v1802
        %vm1810 = vmor %vm1808, %vm1809
        %v1811 = vsel %vm1810, %v1802, %v1807
        %v1812 = vrsqrt.pop %v1777
        %v1813 = vmul.f32 %v1812, %v1777
        %v1814 = vmul.f32 %v1813, %v1812
        %v1815 = vmul.f32 0.5, %v1814
        %v1816 = vsub.f32 1.5, %v1815
        %v1817 = vmul.f32 %v1812, %v1816
        %vm1818 = vweird.f32 %v1777
        %vm1819 = vweird.f32 %v1812
        %vm1820 = vmor %vm1818, %vm1819
        %v1821 = vsel %vm1820, %v1812, %v1817
        %v1822 = vrsqrt.pop %v1778
        %v1823 = vmul.f32 %v1822, %v1778
        %v1824 = vmul.f32 %v1823, %v1822
        %v1825 = vmul.f32 0.5, %v1824
        %v1826 = vsub.f32 1.5, %v1825
        %v1827 = vmul.f32 %v1822, %v1826
        %vm1828 = vweird.f32 %v1778
        %vm1829 = vweird.f32 %v1822
        %vm1830 = vmor %vm1828, %vm1829
        %v1831 = vsel %vm1830, %v1822, %v1827
        %v1832 = vrsqrt.pop %v1779
        %v1833 = vmul.f32 %v1832, %v1779
        %v1834 = vmul.f32 %v1833, %v1832
        %v1835 = vmul.f32 0.5, %v1834
        %v1836 = vsub.f32 1.5, %v1835
        %v1837 = vmul.f32 %v1832, %v1836
        %vm1838 = vweird.f32 %v1779
        %vm1839 = vweird.f32 %v1832
        %vm1840 = vmor %vm1838, %vm1839
        %v1841 = vsel %vm1840, %v1832, %v1837
        %v1842 = vrsqrt.pop %v1780
        %v1843 = vmul.f32 %v1842, %v1780
        %v1844 = vmul.f32 %v1843, %v1842
        %v1845 = vmul.f32 0.5, %v1844
        %v1846 = vsub.f32 1.5, %v1845
        %v1847 = vmul.f32 %v1842, %v1846
        %vm1848 = vweird.f32 %v1780
        %vm1849 = vweird.f32 %v1842
        %vm1850 = vmor %vm1848, %vm1849
        %v1851 = vsel %vm1850, %v1842, %v1847
        %v1852 = vrsqrt.pop %v1781
        %v1853 = vmul.f32 %v1852, %v1781
        %v1854 = vmul.f32 %v1853, %v1852
        %v1855 = vmul.f32 0.5, %v1854
        %v1856 = vsub.f32 1.5, %v1855
        %v1857 = vmul.f32 %v1852, %v1856
        %vm1858 = vweird.f32 %v1781
        %vm1859 = vweird.f32 %v1852
        %vm1860 = vmor %vm1858, %vm1859
        %v1861 = vsel %vm1860, %v1852, %v1857
        %v1862 = vmul.f32 %v1734, %v1791
        %v1863 = vmul.f32 %v1735, %v1801
        %v1864 = vmul.f32 %v1736, %v1811
        %v1865 = vmul.f32 %v1737, %v1821
        %v1866 = vmul.f32 %v1738, %v1831
        %v1867 = vmul.f32 %v1739, %v1841
        %v1868 = vmul.f32 %v1740, %v1851
        %v1869 = vmul.f32 %v1741, %v1861
        %v1870 = vmul.f32 %v1862, %v588
        %v1871 = vmul.f32 %v1863, %v589
        %v1872 = vmul.f32 %v1864, %v590
        %v1873 = vmul.f32 %v1865, %v591
        %v1874 = vmul.f32 %v1866, %v592
        %v1875 = vmul.f32 %v1867, %v593
        %v1876 = vmul.f32 %v1868, %v594
        %v1877 = vmul.f32 %v1869, %v595
        %1878 = vrot.lane.b32.xlu0 %v1862, 64
        %v1879 = vpop.permute.xlu0 %1878
        %1880 = vrot.lane.b32.xlu0 %v1863, 64
        %v1881 = vpop.permute.xlu0 %1880
        %1882 = vrot.lane.b32.xlu0 %v1864, 64
        %v1883 = vpop.permute.xlu0 %1882
        %1884 = vrot.lane.b32.xlu0 %v1865, 64
        %v1885 = vpop.permute.xlu0 %1884
        %1886 = vrot.lane.b32.xlu0 %v1866, 64
        %v1887 = vpop.permute.xlu0 %1886
        %1888 = vrot.lane.b32.xlu0 %v1867, 64
        %v1889 = vpop.permute.xlu0 %1888
        %1890 = vrot.lane.b32.xlu0 %v1868, 64
        %v1891 = vpop.permute.xlu0 %1890
        %1892 = vrot.lane.b32.xlu0 %v1869, 64
        %v1893 = vpop.permute.xlu0 %1892
        %v1894 = vmul.f32 %v1879, %v596
        %v1895 = vmul.f32 %v1881, %v597
        %v1896 = vmul.f32 %v1883, %v598
        %v1897 = vmul.f32 %v1885, %v599
        %v1898 = vmul.f32 %v1887, %v600
        %v1899 = vmul.f32 %v1889, %v601
        %v1900 = vmul.f32 %v1891, %v602
        %v1901 = vmul.f32 %v1893, %v603
        %v1902 = vadd.f32 %v1870, %v1894
        %v1903 = vadd.f32 %v1871, %v1895
        %v1904 = vadd.f32 %v1872, %v1896
        %v1905 = vadd.f32 %v1873, %v1897
        %v1906 = vadd.f32 %v1874, %v1898
        %v1907 = vadd.f32 %v1875, %v1899
        %v1908 = vadd.f32 %v1876, %v1900
        %v1909 = vadd.f32 %v1877, %v1901
        %v1910 = vmul.f32 %v1902, 0.088388346
        %v1911 = vmul.f32 %v1903, 0.088388346
        %v1912 = vmul.f32 %v1904, 0.088388346
        %v1913 = vmul.f32 %v1905, 0.088388346
        %v1914 = vmul.f32 %v1906, 0.088388346
        %v1915 = vmul.f32 %v1907, 0.088388346
        %v1916 = vmul.f32 %v1908, 0.088388346
        %v1917 = vmul.f32 %v1909, 0.088388346
        %s1918 = scalar_lea.vmem %s392, 192 [#allocation9]
        %1919 = vst [vmem:[%s1918] sm:$0xff] %v1910
        %1920 = vst [vmem:[%s1918 + $0x8] sm:$0xff] %v1911
        %1921 = vst [vmem:[%s1918 + $0x10] sm:$0xff] %v1912
        %1922 = vst [vmem:[%s1918 + $0x18] sm:$0xff] %v1913
        %1923 = vst [vmem:[%s1918 + $0x20] sm:$0xff] %v1914
        %1924 = vst [vmem:[%s1918 + $0x28] sm:$0xff] %v1915
        %1925 = vst [vmem:[%s1918 + $0x30] sm:$0xff] %v1916
        %1926 = vst [vmem:[%s1918 + $0x38] sm:$0xff] %v1917
        %1927 = vadd.xlane.f32.xlu0 %v914
        %v1928 = vpop.xlane.xlu0 %1927
        %1929 = vadd.xlane.f32.xlu0 %v917
        %v1930 = vpop.xlane.xlu0 %1929
        %1931 = vadd.xlane.f32.xlu0 %v920
        %v1932 = vpop.xlane.xlu0 %1931
        %1933 = vadd.xlane.f32.xlu0 %v923
        %v1934 = vpop.xlane.xlu0 %1933
        %1935 = vadd.xlane.f32.xlu0 %v926
        %v1936 = vpop.xlane.xlu0 %1935
        %1937 = vadd.xlane.f32.xlu0 %v929
        %v1938 = vpop.xlane.xlu0 %1937
        %1939 = vadd.xlane.f32.xlu0 %v932
        %v1940 = vpop.xlane.xlu0 %1939
        %1941 = vadd.xlane.f32.xlu0 %v935
        %v1942 = vpop.xlane.xlu0 %1941
        %v1943 = vmul.f32 %v1928, %v443
        %v1944 = vmul.f32 %v1930, %v443
        %v1945 = vmul.f32 %v1932, %v443
        %v1946 = vmul.f32 %v1934, %v443
        %v1947 = vmul.f32 %v1936, %v443
        %v1948 = vmul.f32 %v1938, %v443
        %v1949 = vmul.f32 %v1940, %v443
        %v1950 = vmul.f32 %v1942, %v443
        %v1951 = vsub.f32 %v914, %v1943
        %v1952 = vsub.f32 %v917, %v1944
        %v1953 = vsub.f32 %v920, %v1945
        %v1954 = vsub.f32 %v923, %v1946
        %v1955 = vsub.f32 %v926, %v1947
        %v1956 = vsub.f32 %v929, %v1948
        %v1957 = vsub.f32 %v932, %v1949
        %v1958 = vsub.f32 %v935, %v1950
        %v1959 = vmul.f32 %v1951, %v1951
        %v1960 = vmul.f32 %v1952, %v1952
        %v1961 = vmul.f32 %v1953, %v1953
        %v1962 = vmul.f32 %v1954, %v1954
        %v1963 = vmul.f32 %v1955, %v1955
        %v1964 = vmul.f32 %v1956, %v1956
        %v1965 = vmul.f32 %v1957, %v1957
        %v1966 = vmul.f32 %v1958, %v1958
        %1967 = vadd.xlane.f32.xlu0 %v1959
        %v1968 = vpop.xlane.xlu0 %1967
        %1969 = vadd.xlane.f32.xlu0 %v1960
        %v1970 = vpop.xlane.xlu0 %1969
        %1971 = vadd.xlane.f32.xlu0 %v1961
        %v1972 = vpop.xlane.xlu0 %1971
        %1973 = vadd.xlane.f32.xlu0 %v1962
        %v1974 = vpop.xlane.xlu0 %1973
        %1975 = vadd.xlane.f32.xlu0 %v1963
        %v1976 = vpop.xlane.xlu0 %1975
        %1977 = vadd.xlane.f32.xlu0 %v1964
        %v1978 = vpop.xlane.xlu0 %1977
        %1979 = vadd.xlane.f32.xlu0 %v1965
        %v1980 = vpop.xlane.xlu0 %1979
        %1981 = vadd.xlane.f32.xlu0 %v1966
        %v1982 = vpop.xlane.xlu0 %1981
        %v1983 = vmul.f32 %v1968, %v443
        %v1984 = vmul.f32 %v1970, %v443
        %v1985 = vmul.f32 %v1972, %v443
        %v1986 = vmul.f32 %v1974, %v443
        %v1987 = vmul.f32 %v1976, %v443
        %v1988 = vmul.f32 %v1978, %v443
        %v1989 = vmul.f32 %v1980, %v443
        %v1990 = vmul.f32 %v1982, %v443
        %v1991 = vadd.f32 %v1983, 1e-05
        %v1992 = vadd.f32 %v1984, 1e-05
        %v1993 = vadd.f32 %v1985, 1e-05
        %v1994 = vadd.f32 %v1986, 1e-05
        %v1995 = vadd.f32 %v1987, 1e-05
        %v1996 = vadd.f32 %v1988, 1e-05
        %v1997 = vadd.f32 %v1989, 1e-05
        %v1998 = vadd.f32 %v1990, 1e-05
        %v1999 = vrsqrt.pop %v1991
        %v2000 = vmul.f32 %v1999, %v1991
        %v2001 = vmul.f32 %v2000, %v1999
        %v2002 = vmul.f32 0.5, %v2001
        %v2003 = vsub.f32 1.5, %v2002
        %v2004 = vmul.f32 %v1999, %v2003
        %vm2005 = vweird.f32 %v1991
        %vm2006 = vweird.f32 %v1999
        %vm2007 = vmor %vm2005, %vm2006
        %v2008 = vsel %vm2007, %v1999, %v2004
        %v2009 = vrsqrt.pop %v1992
        %v2010 = vmul.f32 %v2009, %v1992
        %v2011 = vmul.f32 %v2010, %v2009
        %v2012 = vmul.f32 0.5, %v2011
        %v2013 = vsub.f32 1.5, %v2012
        %v2014 = vmul.f32 %v2009, %v2013
        %vm2015 = vweird.f32 %v1992
        %vm2016 = vweird.f32 %v2009
        %vm2017 = vmor %vm2015, %vm2016
        %v2018 = vsel %vm2017, %v2009, %v2014
        %v2019 = vrsqrt.pop %v1993
        %v2020 = vmul.f32 %v2019, %v1993
        %v2021 = vmul.f32 %v2020, %v2019
        %v2022 = vmul.f32 0.5, %v2021
        %v2023 = vsub.f32 1.5, %v2022
        %v2024 = vmul.f32 %v2019, %v2023
        %vm2025 = vweird.f32 %v1993
        %vm2026 = vweird.f32 %v2019
        %vm2027 = vmor %vm2025, %vm2026
        %v2028 = vsel %vm2027, %v2019, %v2024
        %v2029 = vrsqrt.pop %v1994
        %v2030 = vmul.f32 %v2029, %v1994
        %v2031 = vmul.f32 %v2030, %v2029
        %v2032 = vmul.f32 0.5, %v2031
        %v2033 = vsub.f32 1.5, %v2032
        %v2034 = vmul.f32 %v2029, %v2033
        %vm2035 = vweird.f32 %v1994
        %vm2036 = vweird.f32 %v2029
        %vm2037 = vmor %vm2035, %vm2036
        %v2038 = vsel %vm2037, %v2029, %v2034
        %v2039 = vrsqrt.pop %v1995
        %v2040 = vmul.f32 %v2039, %v1995
        %v2041 = vmul.f32 %v2040, %v2039
        %v2042 = vmul.f32 0.5, %v2041
        %v2043 = vsub.f32 1.5, %v2042
        %v2044 = vmul.f32 %v2039, %v2043
        %vm2045 = vweird.f32 %v1995
        %vm2046 = vweird.f32 %v2039
        %vm2047 = vmor %vm2045, %vm2046
        %v2048 = vsel %vm2047, %v2039, %v2044
        %v2049 = vrsqrt.pop %v1996
        %v2050 = vmul.f32 %v2049, %v1996
        %v2051 = vmul.f32 %v2050, %v2049
        %v2052 = vmul.f32 0.5, %v2051
        %v2053 = vsub.f32 1.5, %v2052
        %v2054 = vmul.f32 %v2049, %v2053
        %vm2055 = vweird.f32 %v1996
        %vm2056 = vweird.f32 %v2049
        %vm2057 = vmor %vm2055, %vm2056
        %v2058 = vsel %vm2057, %v2049, %v2054
        %v2059 = vrsqrt.pop %v1997
        %v2060 = vmul.f32 %v2059, %v1997
        %v2061 = vmul.f32 %v2060, %v2059
        %v2062 = vmul.f32 0.5, %v2061
        %v2063 = vsub.f32 1.5, %v2062
        %v2064 = vmul.f32 %v2059, %v2063
        %vm2065 = vweird.f32 %v1997
        %vm2066 = vweird.f32 %v2059
        %vm2067 = vmor %vm2065, %vm2066
        %v2068 = vsel %vm2067, %v2059, %v2064
        %v2069 = vrsqrt.pop %v1998
        %v2070 = vmul.f32 %v2069, %v1998
        %v2071 = vmul.f32 %v2070, %v2069
        %v2072 = vmul.f32 0.5, %v2071
        %v2073 = vsub.f32 1.5, %v2072
        %v2074 = vmul.f32 %v2069, %v2073
        %vm2075 = vweird.f32 %v1998
        %vm2076 = vweird.f32 %v2069
        %vm2077 = vmor %vm2075, %vm2076
        %v2078 = vsel %vm2077, %v2069, %v2074
        %v2079 = vmul.f32 %v1951, %v2008
        %v2080 = vmul.f32 %v1952, %v2018
        %v2081 = vmul.f32 %v1953, %v2028
        %v2082 = vmul.f32 %v1954, %v2038
        %v2083 = vmul.f32 %v1955, %v2048
        %v2084 = vmul.f32 %v1956, %v2058
        %v2085 = vmul.f32 %v1957, %v2068
        %v2086 = vmul.f32 %v1958, %v2078
        %v2087 = vmul.f32 %v2079, %v588
        %v2088 = vmul.f32 %v2080, %v589
        %v2089 = vmul.f32 %v2081, %v590
        %v2090 = vmul.f32 %v2082, %v591
        %v2091 = vmul.f32 %v2083, %v592
        %v2092 = vmul.f32 %v2084, %v593
        %v2093 = vmul.f32 %v2085, %v594
        %v2094 = vmul.f32 %v2086, %v595
        %2095 = vrot.lane.b32.xlu0 %v2079, 64
        %v2096 = vpop.permute.xlu0 %2095
        %2097 = vrot.lane.b32.xlu0 %v2080, 64
        %v2098 = vpop.permute.xlu0 %2097
        %2099 = vrot.lane.b32.xlu0 %v2081, 64
        %v2100 = vpop.permute.xlu0 %2099
        %2101 = vrot.lane.b32.xlu0 %v2082, 64
        %v2102 = vpop.permute.xlu0 %2101
        %2103 = vrot.lane.b32.xlu0 %v2083, 64
        %v2104 = vpop.permute.xlu0 %2103
        %2105 = vrot.lane.b32.xlu0 %v2084, 64
        %v2106 = vpop.permute.xlu0 %2105
        %2107 = vrot.lane.b32.xlu0 %v2085, 64
        %v2108 = vpop.permute.xlu0 %2107
        %2109 = vrot.lane.b32.xlu0 %v2086, 64
        %v2110 = vpop.permute.xlu0 %2109
        %v2111 = vmul.f32 %v2096, %v596
        %v2112 = vmul.f32 %v2098, %v597
        %v2113 = vmul.f32 %v2100, %v598
        %v2114 = vmul.f32 %v2102, %v599
        %v2115 = vmul.f32 %v2104, %v600
        %v2116 = vmul.f32 %v2106, %v601
        %v2117 = vmul.f32 %v2108, %v602
        %v2118 = vmul.f32 %v2110, %v603
        %v2119 = vadd.f32 %v2087, %v2111
        %v2120 = vadd.f32 %v2088, %v2112
        %v2121 = vadd.f32 %v2089, %v2113
        %v2122 = vadd.f32 %v2090, %v2114
        %v2123 = vadd.f32 %v2091, %v2115
        %v2124 = vadd.f32 %v2092, %v2116
        %v2125 = vadd.f32 %v2093, %v2117
        %v2126 = vadd.f32 %v2094, %v2118
        %2127 = vst [vmem:[%s399] sm:$0xff] %v2119
        %2128 = vst [vmem:[%s399 + $0x8] sm:$0xff] %v2120
        %2129 = vst [vmem:[%s399 + $0x10] sm:$0xff] %v2121
        %2130 = vst [vmem:[%s399 + $0x18] sm:$0xff] %v2122
        %2131 = vst [vmem:[%s399 + $0x20] sm:$0xff] %v2123
        %2132 = vst [vmem:[%s399 + $0x28] sm:$0xff] %v2124
        %2133 = vst [vmem:[%s399 + $0x30] sm:$0xff] %v2125
        %2134 = vst [vmem:[%s399 + $0x38] sm:$0xff] %v2126
        %2135 = vst [vmem:[%s406] sm:$0xff] %v996
        %2136 = vst [vmem:[%s406 + $0x8] sm:$0xff] %v999
        %2137 = vst [vmem:[%s406 + $0x10] sm:$0xff] %v1002
        %2138 = vst [vmem:[%s406 + $0x18] sm:$0xff] %v1005
        %2139 = vst [vmem:[%s406 + $0x20] sm:$0xff] %v1008
        %2140 = vst [vmem:[%s406 + $0x28] sm:$0xff] %v1011
        %2141 = vst [vmem:[%s406 + $0x30] sm:$0xff] %v1014
        %2142 = vst [vmem:[%s406 + $0x38] sm:$0xff] %v1017
        %2143 = vadd.xlane.f32.xlu0 %v955
        %v2144 = vpop.xlane.xlu0 %2143
        %2145 = vadd.xlane.f32.xlu0 %v958
        %v2146 = vpop.xlane.xlu0 %2145
        %2147 = vadd.xlane.f32.xlu0 %v961
        %v2148 = vpop.xlane.xlu0 %2147
        %2149 = vadd.xlane.f32.xlu0 %v964
        %v2150 = vpop.xlane.xlu0 %2149
        %2151 = vadd.xlane.f32.xlu0 %v967
        %v2152 = vpop.xlane.xlu0 %2151
        %2153 = vadd.xlane.f32.xlu0 %v970
        %v2154 = vpop.xlane.xlu0 %2153
        %2155 = vadd.xlane.f32.xlu0 %v973
        %v2156 = vpop.xlane.xlu0 %2155
        %2157 = vadd.xlane.f32.xlu0 %v976
        %v2158 = vpop.xlane.xlu0 %2157
        %v2159 = vmul.f32 %v2144, %v443
        %v2160 = vmul.f32 %v2146, %v443
        %v2161 = vmul.f32 %v2148, %v443
        %v2162 = vmul.f32 %v2150, %v443
        %v2163 = vmul.f32 %v2152, %v443
        %v2164 = vmul.f32 %v2154, %v443
        %v2165 = vmul.f32 %v2156, %v443
        %v2166 = vmul.f32 %v2158, %v443
        %v2167 = vsub.f32 %v955, %v2159
        %v2168 = vsub.f32 %v958, %v2160
        %v2169 = vsub.f32 %v961, %v2161
        %v2170 = vsub.f32 %v964, %v2162
        %v2171 = vsub.f32 %v967, %v2163
        %v2172 = vsub.f32 %v970, %v2164
        %v2173 = vsub.f32 %v973, %v2165
        %v2174 = vsub.f32 %v976, %v2166
        %v2175 = vmul.f32 %v2167, %v2167
        %v2176 = vmul.f32 %v2168, %v2168
        %v2177 = vmul.f32 %v2169, %v2169
        %v2178 = vmul.f32 %v2170, %v2170
        %v2179 = vmul.f32 %v2171, %v2171
        %v2180 = vmul.f32 %v2172, %v2172
        %v2181 = vmul.f32 %v2173, %v2173
        %v2182 = vmul.f32 %v2174, %v2174
        %2183 = vadd.xlane.f32.xlu0 %v2175
        %v2184 = vpop.xlane.xlu0 %2183
        %2185 = vadd.xlane.f32.xlu0 %v2176
        %v2186 = vpop.xlane.xlu0 %2185
        %2187 = vadd.xlane.f32.xlu0 %v2177
        %v2188 = vpop.xlane.xlu0 %2187
        %2189 = vadd.xlane.f32.xlu0 %v2178
        %v2190 = vpop.xlane.xlu0 %2189
        %2191 = vadd.xlane.f32.xlu0 %v2179
        %v2192 = vpop.xlane.xlu0 %2191
        %2193 = vadd.xlane.f32.xlu0 %v2180
        %v2194 = vpop.xlane.xlu0 %2193
        %2195 = vadd.xlane.f32.xlu0 %v2181
        %v2196 = vpop.xlane.xlu0 %2195
        %2197 = vadd.xlane.f32.xlu0 %v2182
        %v2198 = vpop.xlane.xlu0 %2197
        %v2199 = vmul.f32 %v2184, %v443
        %v2200 = vmul.f32 %v2186, %v443
        %v2201 = vmul.f32 %v2188, %v443
        %v2202 = vmul.f32 %v2190, %v443
        %v2203 = vmul.f32 %v2192, %v443
        %v2204 = vmul.f32 %v2194, %v443
        %v2205 = vmul.f32 %v2196, %v443
        %v2206 = vmul.f32 %v2198, %v443
        %v2207 = vadd.f32 %v2199, 1e-05
        %v2208 = vadd.f32 %v2200, 1e-05
        %v2209 = vadd.f32 %v2201, 1e-05
        %v2210 = vadd.f32 %v2202, 1e-05
        %v2211 = vadd.f32 %v2203, 1e-05
        %v2212 = vadd.f32 %v2204, 1e-05
        %v2213 = vadd.f32 %v2205, 1e-05
        %v2214 = vadd.f32 %v2206, 1e-05
        %v2215 = vrsqrt.pop %v2207
        %v2216 = vmul.f32 %v2215, %v2207
        %v2217 = vmul.f32 %v2216, %v2215
        %v2218 = vmul.f32 0.5, %v2217
        %v2219 = vsub.f32 1.5, %v2218
        %v2220 = vmul.f32 %v2215, %v2219
        %vm2221 = vweird.f32 %v2207
        %vm2222 = vweird.f32 %v2215
        %vm2223 = vmor %vm2221, %vm2222
        %v2224 = vsel %vm2223, %v2215, %v2220
        %v2225 = vrsqrt.pop %v2208
        %v2226 = vmul.f32 %v2225, %v2208
        %v2227 = vmul.f32 %v2226, %v2225
        %v2228 = vmul.f32 0.5, %v2227
        %v2229 = vsub.f32 1.5, %v2228
        %v2230 = vmul.f32 %v2225, %v2229
        %vm2231 = vweird.f32 %v2208
        %vm2232 = vweird.f32 %v2225
        %vm2233 = vmor %vm2231, %vm2232
        %v2234 = vsel %vm2233, %v2225, %v2230
        %v2235 = vrsqrt.pop %v2209
        %v2236 = vmul.f32 %v2235, %v2209
        %v2237 = vmul.f32 %v2236, %v2235
        %v2238 = vmul.f32 0.5, %v2237
        %v2239 = vsub.f32 1.5, %v2238
        %v2240 = vmul.f32 %v2235, %v2239
        %vm2241 = vweird.f32 %v2209
        %vm2242 = vweird.f32 %v2235
        %vm2243 = vmor %vm2241, %vm2242
        %v2244 = vsel %vm2243, %v2235, %v2240
        %v2245 = vrsqrt.pop %v2210
        %v2246 = vmul.f32 %v2245, %v2210
        %v2247 = vmul.f32 %v2246, %v2245
        %v2248 = vmul.f32 0.5, %v2247
        %v2249 = vsub.f32 1.5, %v2248
        %v2250 = vmul.f32 %v2245, %v2249
        %vm2251 = vweird.f32 %v2210
        %vm2252 = vweird.f32 %v2245
        %vm2253 = vmor %vm2251, %vm2252
        %v2254 = vsel %vm2253, %v2245, %v2250
        %v2255 = vrsqrt.pop %v2211
        %v2256 = vmul.f32 %v2255, %v2211
        %v2257 = vmul.f32 %v2256, %v2255
        %v2258 = vmul.f32 0.5, %v2257
        %v2259 = vsub.f32 1.5, %v2258
        %v2260 = vmul.f32 %v2255, %v2259
        %vm2261 = vweird.f32 %v2211
        %vm2262 = vweird.f32 %v2255
        %vm2263 = vmor %vm2261, %vm2262
        %v2264 = vsel %vm2263, %v2255, %v2260
        %v2265 = vrsqrt.pop %v2212
        %v2266 = vmul.f32 %v2265, %v2212
        %v2267 = vmul.f32 %v2266, %v2265
        %v2268 = vmul.f32 0.5, %v2267
        %v2269 = vsub.f32 1.5, %v2268
        %v2270 = vmul.f32 %v2265, %v2269
        %vm2271 = vweird.f32 %v2212
        %vm2272 = vweird.f32 %v2265
        %vm2273 = vmor %vm2271, %vm2272
        %v2274 = vsel %vm2273, %v2265, %v2270
        %v2275 = vrsqrt.pop %v2213
        %v2276 = vmul.f32 %v2275, %v2213
        %v2277 = vmul.f32 %v2276, %v2275
        %v2278 = vmul.f32 0.5, %v2277
        %v2279 = vsub.f32 1.5, %v2278
        %v2280 = vmul.f32 %v2275, %v2279
        %vm2281 = vweird.f32 %v2213
        %vm2282 = vweird.f32 %v2275
        %vm2283 = vmor %vm2281, %vm2282
        %v2284 = vsel %vm2283, %v2275, %v2280
        %v2285 = vrsqrt.pop %v2214
        %v2286 = vmul.f32 %v2285, %v2214
        %v2287 = vmul.f32 %v2286, %v2285
        %v2288 = vmul.f32 0.5, %v2287
        %v2289 = vsub.f32 1.5, %v2288
        %v2290 = vmul.f32 %v2285, %v2289
        %vm2291 = vweird.f32 %v2214
        %vm2292 = vweird.f32 %v2285
        %vm2293 = vmor %vm2291, %vm2292
        %v2294 = vsel %vm2293, %v2285, %v2290
        %v2295 = vmul.f32 %v2167, %v2224
        %v2296 = vmul.f32 %v2168, %v2234
        %v2297 = vmul.f32 %v2169, %v2244
        %v2298 = vmul.f32 %v2170, %v2254
        %v2299 = vmul.f32 %v2171, %v2264
        %v2300 = vmul.f32 %v2172, %v2274
        %v2301 = vmul.f32 %v2173, %v2284
        %v2302 = vmul.f32 %v2174, %v2294
        %v2303 = vmul.f32 %v2295, %v588
        %v2304 = vmul.f32 %v2296, %v589
        %v2305 = vmul.f32 %v2297, %v590
        %v2306 = vmul.f32 %v2298, %v591
        %v2307 = vmul.f32 %v2299, %v592
        %v2308 = vmul.f32 %v2300, %v593
        %v2309 = vmul.f32 %v2301, %v594
        %v2310 = vmul.f32 %v2302, %v595
        %2311 = vrot.lane.b32.xlu0 %v2295, 64
        %v2312 = vpop.permute.xlu0 %2311
        %2313 = vrot.lane.b32.xlu0 %v2296, 64
        %v2314 = vpop.permute.xlu0 %2313
        %2315 = vrot.lane.b32.xlu0 %v2297, 64
        %v2316 = vpop.permute.xlu0 %2315
        %2317 = vrot.lane.b32.xlu0 %v2298, 64
        %v2318 = vpop.permute.xlu0 %2317
        %2319 = vrot.lane.b32.xlu0 %v2299, 64
        %v2320 = vpop.permute.xlu0 %2319
        %2321 = vrot.lane.b32.xlu0 %v2300, 64
        %v2322 = vpop.permute.xlu0 %2321
        %2323 = vrot.lane.b32.xlu0 %v2301, 64
        %v2324 = vpop.permute.xlu0 %2323
        %2325 = vrot.lane.b32.xlu0 %v2302, 64
        %v2326 = vpop.permute.xlu0 %2325
        %v2327 = vmul.f32 %v2312, %v596
        %v2328 = vmul.f32 %v2314, %v597
        %v2329 = vmul.f32 %v2316, %v598
        %v2330 = vmul.f32 %v2318, %v599
        %v2331 = vmul.f32 %v2320, %v600
        %v2332 = vmul.f32 %v2322, %v601
        %v2333 = vmul.f32 %v2324, %v602
        %v2334 = vmul.f32 %v2326, %v603
        %v2335 = vadd.f32 %v2303, %v2327
        %v2336 = vadd.f32 %v2304, %v2328
        %v2337 = vadd.f32 %v2305, %v2329
        %v2338 = vadd.f32 %v2306, %v2330
        %v2339 = vadd.f32 %v2307, %v2331
        %v2340 = vadd.f32 %v2308, %v2332
        %v2341 = vadd.f32 %v2309, %v2333
        %v2342 = vadd.f32 %v2310, %v2334
        %s2343 = scalar_lea.vmem %s399, 64 [#allocation10]
        %2344 = vst [vmem:[%s2343] sm:$0xff] %v2335
        %2345 = vst [vmem:[%s2343 + $0x8] sm:$0xff] %v2336
        %2346 = vst [vmem:[%s2343 + $0x10] sm:$0xff] %v2337
        %2347 = vst [vmem:[%s2343 + $0x18] sm:$0xff] %v2338
        %2348 = vst [vmem:[%s2343 + $0x20] sm:$0xff] %v2339
        %2349 = vst [vmem:[%s2343 + $0x28] sm:$0xff] %v2340
        %2350 = vst [vmem:[%s2343 + $0x30] sm:$0xff] %v2341
        %2351 = vst [vmem:[%s2343 + $0x38] sm:$0xff] %v2342
        %s2352 = scalar_lea.vmem %s406, 64 [#allocation12]
        %2353 = vst [vmem:[%s2352] sm:$0xff] %v1037
        %2354 = vst [vmem:[%s2352 + $0x8] sm:$0xff] %v1040
        %2355 = vst [vmem:[%s2352 + $0x10] sm:$0xff] %v1043
        %2356 = vst [vmem:[%s2352 + $0x18] sm:$0xff] %v1046
        %2357 = vst [vmem:[%s2352 + $0x20] sm:$0xff] %v1049
        %2358 = vst [vmem:[%s2352 + $0x28] sm:$0xff] %v1052
        %2359 = vst [vmem:[%s2352 + $0x30] sm:$0xff] %v1055
        %2360 = vst [vmem:[%s2352 + $0x38] sm:$0xff] %v1058
        %s2361 = sand.u32 %s151, 1
        %s2362 = scalar_lea.sflag [#allocation4], %s2361
        %s2363 = sand.u32 %s151, 1
        %s2364 = smul.addr %s2363, 256
        %s2365 = scalar_lea.vmem [#allocation9], %s2364
        %s2366 = sand.u32 %s28, 1
        %s2367 = scalar_lea.sflag [#allocation11], %s2366
        %s2368 = sand.u32 %s179, 1
        %s2369 = smul.addr %s2368, 128
        %s2370 = scalar_lea.vmem [#allocation10], %s2369
        %s2371 = sand.u32 %s28, 1
        %s2372 = scalar_lea.sflag [#allocation11], %s2371
        %s2373 = sand.u32 %s207, 1
        %s2374 = smul.addr %s2373, 128
        %s2375 = scalar_lea.vmem [#allocation12], %s2374
        // Predicated region
        $region53: #{tpu_custom_call.1} parent=35 // pred_check
          %p2376 = pneg %p161
        $region54: #{tpu_custom_call.1} parent=35 // pred_check_branch
          %2378 = sbr.rel (%p2376) target = $region56
        $region55: #{tpu_custom_call.1} parent=35 // pred_region
          #allocation14 [shape = 'u32[6]{0}', space=smem, size = 0x18, scoped, tag = 'DMA stride descriptor']
          %s2379 = smul.u32 8, %s33
          %2381 = vsyncadd %s2362, 0
          %s2382 = smul.addr %s32, 64
          %s2383 = sadd.s32 %s2379, %s2382
          %s2384 = smul.addr %s2383, 8
          %s2385 = scalar_lea.hbm %s4, %s2384
          %s2387 = sshll.u32 1, 14
          %s2388 = sxor.u32 4294967295, %s2387
          %s2391 = sshll.u32 7, 18
          %s2392 = sxor.u32 4294967295, %s2391
          %s2393 = sand.u32 0, %s2392
          %s2395 = sor.u32 %s2393, 0
          %s2396 = sshll.u32 %s2365, 4
          %s2397 = int_to_ptr.vmem [resolvable:$true] %s2396
          %s2398 = sshll.u32 %s2385, 4
          %s2399 = int_to_ptr.hbm [resolvable:$true] %s2398
          %2405 = sst [smem:[#allocation14]] 1024
          %s2406 = scalar_lea.smem [#allocation14], 1
          %2407 = sst [smem:[%s2406]] 2048
          %s2408 = scalar_lea.smem [#allocation14], 2
          %2409 = sst [smem:[%s2408]] 8
          %s2410 = scalar_lea.smem [#allocation14], 3
          %2411 = sst [smem:[%s2410]] 128
          %s2412 = scalar_lea.smem [#allocation14], 4
          %2413 = sst [smem:[%s2412]] 128
          %s2414 = scalar_lea.smem [#allocation14], 5
          %2415 = sst [smem:[%s2414]] 8
          %2417 = dma.general %s2397, 4096, %s2399, %s2362, [#allocation13], [#allocation14], %s2395, 0
        $region56: #{tpu_custom_call.1} parent=35 // pred_fallthru
          _
        // Predicated region
        $region57: #{tpu_custom_call.1} parent=35 // pred_check
          %p2418 = pneg %p189
        $region58: #{tpu_custom_call.1} parent=35 // pred_check_branch
          %2420 = sbr.rel (%p2418) target = $region60
        $region59: #{tpu_custom_call.1} parent=35 // pred_region
          #allocation16 [shape = 'u32[6]{0}', space=smem, size = 0x18, scoped, tag = 'DMA stride descriptor']
          %s2421 = smul.u32 8, %s33
          %2423 = vsyncadd %s2367, 0
          %s2424 = smul.addr %s32, 32
          %s2425 = sadd.s32 %s2421, %s2424
          %s2426 = smul.addr %s2425, 8
          %s2427 = scalar_lea.hbm %s5, %s2426
          %s2429 = sshll.u32 1, 14
          %s2430 = sxor.u32 4294967295, %s2429
          %s2433 = sshll.u32 7, 18
          %s2434 = sxor.u32 4294967295, %s2433
          %s2435 = sand.u32 0, %s2434
          %s2437 = sor.u32 %s2435, 0
          %s2438 = sshll.u32 %s2370, 4
          %s2439 = int_to_ptr.vmem [resolvable:$true] %s2438
          %s2440 = sshll.u32 %s2427, 4
          %s2441 = int_to_ptr.hbm [resolvable:$true] %s2440
          %2447 = sst [smem:[#allocation16]] 1024
          %s2448 = scalar_lea.smem [#allocation16], 1
          %2449 = sst [smem:[%s2448]] 2048
          %s2450 = scalar_lea.smem [#allocation16], 2
          %2451 = sst [smem:[%s2450]] 8
          %s2452 = scalar_lea.smem [#allocation16], 3
          %2453 = sst [smem:[%s2452]] 128
          %s2454 = scalar_lea.smem [#allocation16], 4
          %2455 = sst [smem:[%s2454]] 128
          %s2456 = scalar_lea.smem [#allocation16], 5
          %2457 = sst [smem:[%s2456]] 8
          %2459 = dma.general %s2439, 2048, %s2441, %s2367, [#allocation15], [#allocation16], %s2437, 0
        $region60: #{tpu_custom_call.1} parent=35 // pred_fallthru
          _
        // Predicated region
        $region61: #{tpu_custom_call.1} parent=35 // pred_check
          %p2460 = pneg %p217
        $region62: #{tpu_custom_call.1} parent=35 // pred_check_branch
          %2462 = sbr.rel (%p2460) target = $region64
        $region63: #{tpu_custom_call.1} parent=35 // pred_region
          #allocation18 [shape = 'u32[6]{0}', space=smem, size = 0x18, scoped, tag = 'DMA stride descriptor']
          %s2463 = smul.u32 8, %s33
          %2465 = vsyncadd %s2372, 0
          %s2466 = smul.addr %s32, 32
          %s2467 = sadd.s32 %s2463, %s2466
          %s2468 = smul.addr %s2467, 8
          %s2469 = scalar_lea.hbm %s6, %s2468
          %s2471 = sshll.u32 1, 14
          %s2472 = sxor.u32 4294967295, %s2471
          %s2475 = sshll.u32 7, 18
          %s2476 = sxor.u32 4294967295, %s2475
          %s2477 = sand.u32 0, %s2476
          %s2479 = sor.u32 %s2477, 0
          %s2480 = sshll.u32 %s2375, 4
          %s2481 = int_to_ptr.vmem [resolvable:$true] %s2480
          %s2482 = sshll.u32 %s2469, 4
          %s2483 = int_to_ptr.hbm [resolvable:$true] %s2482
          %2489 = sst [smem:[#allocation18]] 1024
          %s2490 = scalar_lea.smem [#allocation18], 1
          %2491 = sst [smem:[%s2490]] 2048
          %s2492 = scalar_lea.smem [#allocation18], 2
          %2493 = sst [smem:[%s2492]] 8
          %s2494 = scalar_lea.smem [#allocation18], 3
          %2495 = sst [smem:[%s2494]] 128
          %s2496 = scalar_lea.smem [#allocation18], 4
          %2497 = sst [smem:[%s2496]] 128
          %s2498 = scalar_lea.smem [#allocation18], 5
          %2499 = sst [smem:[%s2498]] 8
          %2501 = dma.general %s2481, 2048, %s2483, %s2372, [#allocation17], [#allocation18], %s2479, 0
        $region64: #{tpu_custom_call.1} parent=35 // pred_fallthru
          _
      $region36: #{tpu_custom_call.1} parent=5 // pred_fallthru
        _
      %p2502 = scmp.le.s32.totalorder 2, %s23
      // Predicated region
      $region65: #{tpu_custom_call.1} parent=5 // pred_check
        %p2503 = pneg %p2502
      $region66: #{tpu_custom_call.1} parent=5 // pred_check_branch
        %2505 = sbr.rel (%p2503) target = $region68
      $region67: #{tpu_custom_call.1} parent=5 // pred_region
        %s2506 = ssub.s32 %s23, 2
        // Predicated region
        $region69: #{tpu_custom_call.1} parent=67 // pred_check
          %p2507 = pneg %p167
        $region70: #{tpu_custom_call.1} parent=67 // pred_check_branch
          %2509 = sbr.rel (%p2507) target = $region72
        $region71: #{tpu_custom_call.1} parent=67 // pred_region
          %s2510 = sand.u32 %s152, 1
          %s2511 = scalar_lea.sflag [#allocation4], %s2510
          %s2512 = sand.u32 %s152, 1
          %s2513 = smul.addr %s2512, 256
          %s2514 = scalar_lea.vmem [#allocation9], %s2513
          %2516 = dma.done %s2511, 4096
        $region72: #{tpu_custom_call.1} parent=67 // pred_fallthru
          _
        // Predicated region
        $region73: #{tpu_custom_call.1} parent=67 // pred_check
          %p2517 = pneg %p195
        $region74: #{tpu_custom_call.1} parent=67 // pred_check_branch
          %2519 = sbr.rel (%p2517) target = $region76
        $region75: #{tpu_custom_call.1} parent=67 // pred_region
          %s2520 = sand.u32 %s29, 1
          %s2521 = scalar_lea.sflag [#allocation11], %s2520
          %s2522 = sand.u32 %s180, 1
          %s2523 = smul.addr %s2522, 128
          %s2524 = scalar_lea.vmem [#allocation10], %s2523
          %2526 = dma.done %s2521, 2048
        $region76: #{tpu_custom_call.1} parent=67 // pred_fallthru
          _
        // Predicated region
        $region77: #{tpu_custom_call.1} parent=67 // pred_check
          %p2527 = pneg %p223
        $region78: #{tpu_custom_call.1} parent=67 // pred_check_branch
          %2529 = sbr.rel (%p2527) target = $region80
        $region79: #{tpu_custom_call.1} parent=67 // pred_region
          %s2530 = sand.u32 %s29, 1
          %s2531 = scalar_lea.sflag [#allocation11], %s2530
          %s2532 = sand.u32 %s208, 1
          %s2533 = smul.addr %s2532, 128
          %s2534 = scalar_lea.vmem [#allocation12], %s2533
          %2536 = dma.done %s2531, 2048
        $region80: #{tpu_custom_call.1} parent=67 // pred_fallthru
          _
      $region68: #{tpu_custom_call.1} parent=5 // pred_fallthru
        _
    $region6: #{tpu_custom_call.1} parent=1 // loop_footer
      %s27 = sadd.s32 1, %s23
    $region7: #{tpu_custom_call.1} parent=1 // loop_footer_branch
      %22 = sbr.rel target = $region3
    $region8: #{tpu_custom_call.1} parent=1 // loop_exit
      _
    %2537 = vsyncpa [#allocation3], 1
    %s2538 = scalar_lea.sflag [#allocation3], 1
    %2539 = vsyncpa %s2538, 1
    %2540 = vsyncpa [#allocation6], 1
    %2541 = vsyncpa [#allocation4], 1
    %s2542 = scalar_lea.sflag [#allocation4], 1
    %2543 = vsyncpa %s2542, 1
    %2544 = vsyncpa [#allocation11], 1
    %s2545 = scalar_lea.sflag [#allocation11], 1
    %2546 = vsyncpa %s2545, 1

</llo_original>
